<compile_context>
chip_gen: v7x
topology: tpu7x:2x2x1
jax: 0.10.0
libtpu: 0.0.40
codegen_flags: <defaults>
</compile_context>

<pallas_src>
import functools

import jax
import jax.numpy as jnp
from jax.experimental import pallas as pl
from jax.experimental.pallas import tpu as pltpu

# ------------------------- configuration (small, deterministic) -------------------------
B = 2          # batch
LQ = 8         # target (decoder) sequence length
LK = 8         # source (memory) sequence length
D_MODEL = 32
D_FF = 64
N_HEAD = 4
HEAD_DIM = D_MODEL // N_HEAD
LN_EPS = 1e-5

# MXU-native operand dtype (accumulation is always f32 via preferred_element_type).
# Flip back to jnp.float32 for bit-tight comparisons against an f32 reference.
MATMUL_DTYPE = jnp.bfloat16

# TODO(synk): nn.Dropout is modeled as identity (inference semantics); p_drop is unused.


# ----------------------------------- Pallas kernel --------------------------------------
def _decoder_layer_kernel(
    xT_ref, memT_ref, sbias_ref, cbias_ref,
    w_ref, w2_ref, b_ref, ln_g_ref, ln_b_ref,
    out_ref,
    *, d_model, d_ff, n_head, head_dim,
):
    D, H, hd = d_model, n_head, head_dim

    def mm(a, b):
        # MXU matmul: bf16 operands, f32 accumulation.
        return jnp.dot(a.astype(MATMUL_DTYPE), b.astype(MATMUL_DTYPE),
                       preferred_element_type=jnp.float32)

    def layernorm_t(hT, g, beta):
        # feature dim is axis 0 in the transposed layout; all math stays f32
        mu = jnp.mean(hT, axis=0, keepdims=True)
        var = jnp.mean((hT - mu) ** 2, axis=0, keepdims=True)
        return (hT - mu) * jax.lax.rsqrt(var + LN_EPS) * g + beta

    def attn_core(Qt, Kt, Vt, bias):
        # Qt: (D, nq), Kt/Vt: (D, nk); Q already carries the 1/sqrt(hd) scale.
        nq, nk = Qt.shape[1], Kt.shape[1]
        # Only Q needs a (small) relayout; K/V stay in the natural (H, hd, n) layout.
        Qh = jnp.transpose(Qt.reshape(H, hd, nq), (0, 2, 1))   # (H, nq, hd)
        Kh = Kt.reshape(H, hd, nk)                              # (H, hd, nk)
        Vh = Vt.reshape(H, hd, nk)                              # (H, hd, nk)
        # scores: 'hqd,hdk->hqk' (standard batched contraction)
        s = jax.lax.dot_general(
            Qh.astype(MATMUL_DTYPE), Kh.astype(MATMUL_DTYPE),
            dimension_numbers=(((2,), (1,)), ((0,), (0,))),
            preferred_element_type=jnp.float32)                 # (H, nq, nk)
        s = s + bias[None, :, :]
        m = jnp.max(s, axis=-1, keepdims=True)
        e = jnp.exp(s - m)
        p = e * pl.reciprocal(jnp.sum(e, axis=-1, keepdims=True), approx=True)
        # PV: 'hdk,hqk->hdq' (transposed-RHS contraction) -> result is already (H, hd, nq)
        o = jax.lax.dot_general(
            Vh.astype(MATMUL_DTYPE), p.astype(MATMUL_DTYPE),
            dimension_numbers=(((2,), (2,)), ((0,), (0,))),
            preferred_element_type=jnp.float32)                 # (H, hd, nq)
        return o.reshape(D, nq)                                 # (D, nq), no transpose

    # packed-slab row offsets (multiples of 16 -> clean bf16 sublane slices)
    o_wo1, o_wq2, o_wkv2, o_wo2, o_w1 = 3 * D, 4 * D, 5 * D, 7 * D, 8 * D

    xT = xT_ref[0]          # (D, Lq)  residual stream (transposed), f32
    memT = memT_ref[0]      # (D, Lk)

    # ---- masked self-attention (pre-norm, fused QKV) ----
    x1 = layernorm_t(xT, ln_g_ref[0], ln_b_ref[0])
    qkv = mm(w_ref[0:o_wo1, :], x1) + b_ref[0:3 * D, :]          # (3D, Lq)
    o1 = attn_core(qkv[0:D], qkv[D:2 * D], qkv[2 * D:3 * D], sbias_ref[0])
    xT = xT + mm(w_ref[o_wo1:o_wq2, :], o1) + b_ref[3 * D:4 * D, :]

    # ---- cross attention (Q from x_ln, fused KV from raw memory) ----
    x2 = layernorm_t(xT, ln_g_ref[1], ln_b_ref[1])
    q2 = mm(w_ref[o_wq2:o_wkv2, :], x2) + b_ref[4 * D:5 * D, :]  # (D, Lq)
    kv = mm(w_ref[o_wkv2:o_wo2, :], memT) + b_ref[5 * D:7 * D, :]  # (2D, Lk)
    o2 = attn_core(q2, kv[0:D], kv[D:2 * D], cbias_ref[0])
    xT = xT + mm(w_ref[o_wo2:o_w1, :], o2) + b_ref[7 * D:8 * D, :]

    # ---- position-wise FFN ----
    x3 = layernorm_t(xT, ln_g_ref[2], ln_b_ref[2])
    h1 = jnp.maximum(mm(w_ref[o_w1:o_w1 + d_ff, :], x3)
                     + b_ref[8 * D:8 * D + d_ff, :], 0.0)
    xT = xT + mm(w2_ref[...], h1) + b_ref[8 * D + d_ff:9 * D + d_ff, :]

    out_ref[0] = xT                                              # (D, Lq), no transpose


# ------------------------------- parameter packing (once) --------------------------------
def pack_decoder_params(params, n_head):
    """Pack weights/biases into slabs once at init (hoisted out of the per-call path).
    Weights go in torch (out, in) layout (pre-transposed) and bf16; 1/sqrt(hd) is folded
    into the Q projections; biases stay f32 column vectors."""
    D = params["wq1"].shape[0]
    hd = D // n_head
    inv_scale = 1.0 / float(hd) ** 0.5
    p = params
    w_slab = jnp.concatenate([
        p["wq1"].T * inv_scale, p["wk1"].T, p["wv1"].T,   # fused QKV (self-attn)
        p["wo1"].T,
        p["wq2"].T * inv_scale,                           # cross-attn Q
        p["wk2"].T, p["wv2"].T,                           # fused KV (cross-attn)
        p["wo2"].T,
        p["w1"].T,
    ], axis=0).astype(MATMUL_DTYPE)                        # (8*D + d_ff, D) bf16
    w2_t = p["w2"].T.astype(MATMUL_DTYPE)                  # (D, d_ff) bf16
    b_slab = jnp.concatenate([
        p["bq1"] * inv_scale, p["bk1"], p["bv1"],
        p["bo1"],
        p["bq2"] * inv_scale, p["bk2"], p["bv2"],
        p["bo2"],
        p["b1"], p["b2"],
    ], axis=0)[:, None].astype(jnp.float32)                # (9*D + d_ff, 1) f32
    ln_g = jnp.stack([p["ln1_g"], p["ln2_g"], p["ln3_g"]])[:, :, None]   # (3, D, 1)
    ln_b = jnp.stack([p["ln1_b"], p["ln2_b"], p["ln3_b"]])[:, :, None]   # (3, D, 1)
    return {"w": w_slab, "w2": w2_t, "b": b_slab,
            "ln_g": ln_g.astype(jnp.float32), "ln_b": ln_b.astype(jnp.float32)}


# ------------------------------------ JAX wrapper ----------------------------------------
@jax.jit
def decoder_layer_pallas(x, memory, tgt_mask, src_mask, packed):
    """x: (B, Lq, D) f32; memory: (B, Lk, D) f32; masks: (B, L) bool (True = pad);
    packed: output of pack_decoder_params."""
    Bsz, Lq, D = x.shape
    Lk = memory.shape[1]
    H = N_HEAD
    hd = D // H
    d_ff = packed["w2"].shape[1]
    inv_scale = 1.0 / float(hd) ** 0.5
    neg = jnp.float32(-1e9 * inv_scale)    # masked_fill(-1e9) before /scale, folded

    # per-batch additive attention biases (small: B*Lq*Lq / B*Lq*Lk)
    subsequent = jnp.triu(jnp.ones((Lq, Lq), dtype=bool), k=1)
    self_m = tgt_mask[:, None, :] | subsequent[None]                    # (B, Lq, Lq)
    self_bias = jnp.where(self_m, neg, jnp.float32(0.0))
    cross_m = jnp.broadcast_to(src_mask[:, None, :], (Bsz, Lq, Lk))     # (B, Lq, Lk)
    cross_bias = jnp.where(cross_m, neg, jnp.float32(0.0))

    # residual stream enters/leaves the kernel transposed: (B, D, L)
    xT = jnp.transpose(x, (0, 2, 1)).astype(jnp.float32)
    memT = jnp.transpose(memory, (0, 2, 1)).astype(jnp.float32)

    n_w = packed["w"].shape[0]
    n_b = packed["b"].shape[0]

    kernel = functools.partial(_decoder_layer_kernel, d_model=D, d_ff=d_ff,
                               n_head=H, head_dim=hd)

    nbytes = lambda a: a.size * a.dtype.itemsize
    flops_per_b = (2 * (3 * D) * D * Lq              # fused QKV
                   + 4 * D * Lq * Lq                 # self scores + PV
                   + 2 * D * D * Lq                  # self out-proj
                   + 2 * D * D * Lq                  # cross Q
                   + 2 * (2 * D) * D * Lk            # cross KV
                   + 4 * D * Lq * Lk                 # cross scores + PV
                   + 2 * D * D * Lq                  # cross out-proj
                   + 4 * D * d_ff * Lq)              # FFN up + down
    cost = pl.CostEstimate(
        flops=int(Bsz * flops_per_b),
        transcendentals=int(Bsz * H * Lq * (Lq + Lk)),
        bytes_accessed=int(nbytes(xT) + nbytes(memT) + nbytes(self_bias)
                           + nbytes(cross_bias) + nbytes(packed["w"])
                           + nbytes(packed["w2"]) + nbytes(packed["b"])
                           + nbytes(packed["ln_g"]) + nbytes(packed["ln_b"])
                           + Bsz * D * Lq * 4))

    out_t = pl.pallas_call(
        kernel,
        out_shape=jax.ShapeDtypeStruct((Bsz, D, Lq), jnp.float32),
        grid=(Bsz,),
        in_specs=[
            pl.BlockSpec((1, D, Lq), lambda b: (b, 0, 0)),       # xT
            pl.BlockSpec((1, D, Lk), lambda b: (b, 0, 0)),       # memT
            pl.BlockSpec((1, Lq, Lq), lambda b: (b, 0, 0)),      # self bias
            pl.BlockSpec((1, Lq, Lk), lambda b: (b, 0, 0)),      # cross bias
            # weights/biases: constant index_map -> fetched once, VMEM-resident
            pl.BlockSpec((n_w, D), lambda b: (0, 0)),            # packed weight slab (bf16)
            pl.BlockSpec((D, d_ff), lambda b: (0, 0)),           # W2 (bf16)
            pl.BlockSpec((n_b, 1), lambda b: (0, 0)),            # packed bias slab (f32)
            pl.BlockSpec((3, D, 1), lambda b: (0, 0, 0)),        # LN gammas
            pl.BlockSpec((3, D, 1), lambda b: (0, 0, 0)),        # LN betas
        ],
        out_specs=pl.BlockSpec((1, D, Lq), lambda b: (b, 0, 0)),
        compiler_params=pltpu.CompilerParams(
            dimension_semantics=("parallel",),        # batch axis -> both TCs on v7x
            vmem_limit_bytes=32 * 1024 * 1024),       # explicit (v5e scoped default is 16 MiB)
        cost_estimate=cost,
    )(xT, memT, self_bias, cross_bias,
      packed["w"], packed["w2"], packed["b"], packed["ln_g"], packed["ln_b"])

    # untranspose in XLA (at realistic Lq the kernel store is already lane-dense)
    return jnp.transpose(out_t, (0, 2, 1))


# ----------------------------- pure-JAX reference (for checking) -------------------------
def decoder_layer_ref(x, memory, tgt_mask, src_mask, params):
    Bsz, Lq, D = x.shape

    def layernorm(h, g, b):
        mu = h.mean(-1, keepdims=True)
        var = ((h - mu) ** 2).mean(-1, keepdims=True)
        return (h - mu) / jnp.sqrt(var + LN_EPS) * g + b

    def mha(q_in, kv_in, mask, wq, bq, wk, bk, wv, bv, wo, bo):
        Q = (q_in @ wq + bq).reshape(Bsz, -1, N_HEAD, HEAD_DIM).transpose(0, 2, 1, 3)
        K = (kv_in @ wk + bk).reshape(Bsz, -1, N_HEAD, HEAD_DIM).transpose(0, 2, 1, 3)
        V = (kv_in @ wv + bv).reshape(Bsz, -1, N_HEAD, HEAD_DIM).transpose(0, 2, 1, 3)
        s = Q @ K.transpose(0, 1, 3, 2)
        s = jnp.where(mask, -1e9, s)
        a = jax.nn.softmax(s / HEAD_DIM ** 0.5, axis=-1)
        O = (a @ V).transpose(0, 2, 1, 3).reshape(Bsz, -1, D)
        return O @ wo + bo

    subsequent = jnp.triu(jnp.ones((Lq, Lq), dtype=bool), k=1)
    tgt_full = tgt_mask[:, None, None, :] | subsequent[None, None]   # (B,1,Lq,Lq)
    src_full = src_mask[:, None, None, :]                            # (B,1,1,Lk)

    p = params
    x_ln = layernorm(x, p["ln1_g"], p["ln1_b"])
    x = x + mha(x_ln, x_ln, tgt_full, p["wq1"], p["bq1"], p["wk1"], p["bk1"],
                p["wv1"], p["bv1"], p["wo1"], p["bo1"])
    x_ln = layernorm(x, p["ln2_g"], p["ln2_b"])
    x = x + mha(x_ln, memory, src_full, p["wq2"], p["bq2"], p["wk2"], p["bk2"],
                p["wv2"], p["bv2"], p["wo2"], p["bo2"])
    x_ln = layernorm(x, p["ln3_g"], p["ln3_b"])
    x = x + (jnp.maximum(x_ln @ p["w1"] + p["b1"], 0.0) @ p["w2"] + p["b2"])
    return x


# ---------------------------------------- main -------------------------------------------
if __name__ == "__main__":
    key = jax.random.PRNGKey(0)
    keys = iter(jax.random.split(key, 40))

    def lin(k, fan_in, fan_out):
        # weight stored as (in, out); equivalent to torch (out, in).T
        return jax.random.normal(k, (fan_in, fan_out), jnp.float32) * 0.05

    params = {
        "ln1_g": jnp.ones((D_MODEL,), jnp.float32),
        "ln1_b": jnp.zeros((D_MODEL,), jnp.float32),
        "ln2_g": jnp.ones((D_MODEL,), jnp.float32),
        "ln2_b": jnp.zeros((D_MODEL,), jnp.float32),
        "ln3_g": jnp.ones((D_MODEL,), jnp.float32),
        "ln3_b": jnp.zeros((D_MODEL,), jnp.float32),
    }
    for name in ["wq1", "wk1", "wv1", "wo1", "wq2", "wk2", "wv2", "wo2"]:
        params[name] = lin(next(keys), D_MODEL, D_MODEL)
    for name in ["bq1", "bk1", "bv1", "bo1", "bq2", "bk2", "bv2", "bo2"]:
        params[name] = jax.random.normal(next(keys), (D_MODEL,), jnp.float32) * 0.01
    params["w1"] = lin(next(keys), D_MODEL, D_FF)
    params["b1"] = jax.random.normal(next(keys), (D_FF,), jnp.float32) * 0.01
    params["w2"] = lin(next(keys), D_FF, D_MODEL)
    params["b2"] = jax.random.normal(next(keys), (D_MODEL,), jnp.float32) * 0.01

    x = jax.random.normal(next(keys), (B, LQ, D_MODEL), jnp.float32)
    memory = jax.random.normal(next(keys), (B, LK, D_MODEL), jnp.float32)

    # padding masks: True = padded position
    tgt_lens = jnp.array([LQ, LQ - 2])
    src_lens = jnp.array([LK - 1, LK])
    tgt_mask = jnp.arange(LQ)[None, :] >= tgt_lens[:, None]   # (B, Lq) bool
    src_mask = jnp.arange(LK)[None, :] >= src_lens[:, None]   # (B, Lk) bool

    packed = pack_decoder_params(params, N_HEAD)              # packed ONCE (init-time)

    out = decoder_layer_pallas(x, memory, tgt_mask, src_mask, packed)
    out = jax.block_until_ready(out)

    ref = decoder_layer_ref(x, memory, tgt_mask, src_mask, params)
    assert out.shape == (B, LQ, D_MODEL)
    # tolerance covers bf16 MXU operands (f32 accumulation) + approx softmax reciprocal
    assert jnp.allclose(out, ref, atol=3e-2, rtol=3e-2), (
        f"max abs diff {jnp.max(jnp.abs(out - ref))}")

    print("KERNEL_OK")
</pallas_src>

<mosaic_0001>
module attributes {stable_mosaic.version = 11 : i64} {
  func.func @_decoder_layer_kernel(%arg0: i32, %arg1: memref<1x32x8xf32, #tpu.memory_space<vmem>>, %arg2: memref<1x32x8xf32, #tpu.memory_space<vmem>>, %arg3: memref<1x8x8xf32, #tpu.memory_space<vmem>>, %arg4: memref<1x8x8xf32, #tpu.memory_space<vmem>>, %arg5: memref<320x32xbf16, #tpu.memory_space<vmem>>, %arg6: memref<32x64xbf16, #tpu.memory_space<vmem>>, %arg7: memref<352x1xf32, #tpu.memory_space<vmem>>, %arg8: memref<3x32x1xf32, #tpu.memory_space<vmem>>, %arg9: memref<3x32x1xf32, #tpu.memory_space<vmem>>, %arg10: memref<1x32x8xf32, #tpu.memory_space<vmem>>) attributes {dimension_semantics = [#tpu.dimension_semantics<parallel>], iteration_bounds = array<i64: 2>, scalar_prefetch = 0 : i64, scratch_operands = 0 : i64, tpu.core_type = #tpu.core_type<tc>, window_params = [{transform_indices = @transform_0, window_bounds = array<i64: 1, 32, 8>}, {transform_indices = @transform_1, window_bounds = array<i64: 1, 32, 8>}, {transform_indices = @transform_2, window_bounds = array<i64: 1, 8, 8>}, {transform_indices = @transform_3, window_bounds = array<i64: 1, 8, 8>}, {pipeline_mode = #tpu.pipeline_mode<synchronous>, transform_indices = @transform_4, window_bounds = array<i64: 320, 32>}, {pipeline_mode = #tpu.pipeline_mode<synchronous>, transform_indices = @transform_5, window_bounds = array<i64: 32, 64>}, {pipeline_mode = #tpu.pipeline_mode<synchronous>, transform_indices = @transform_6, window_bounds = array<i64: 352, 1>}, {pipeline_mode = #tpu.pipeline_mode<synchronous>, transform_indices = @transform_7, window_bounds = array<i64: 3, 32, 1>}, {pipeline_mode = #tpu.pipeline_mode<synchronous>, transform_indices = @transform_8, window_bounds = array<i64: 3, 32, 1>}, {transform_indices = @transform_9, window_bounds = array<i64: 1, 32, 8>}]} {
    %c0 = arith.constant 0 : index
    %c0_0 = arith.constant 0 : index
    %c0_1 = arith.constant 0 : index
    %0 = vector.load %arg1[%c0, %c0_0, %c0_1] : memref<1x32x8xf32, #tpu.memory_space<vmem>>, vector<1x32x8xf32>
    %1 = vector.shape_cast %0 : vector<1x32x8xf32> to vector<32x8xf32>
    %c0_2 = arith.constant 0 : index
    %c0_3 = arith.constant 0 : index
    %c0_4 = arith.constant 0 : index
    %2 = vector.load %arg2[%c0_2, %c0_3, %c0_4] : memref<1x32x8xf32, #tpu.memory_space<vmem>>, vector<1x32x8xf32>
    %3 = vector.shape_cast %2 : vector<1x32x8xf32> to vector<32x8xf32>
    %c0_5 = arith.constant 0 : index
    %c0_6 = arith.constant 0 : index
    %c0_7 = arith.constant 0 : index
    %4 = vector.load %arg8[%c0_5, %c0_6, %c0_7] : memref<3x32x1xf32, #tpu.memory_space<vmem>>, vector<1x32x1xf32>
    %5 = vector.shape_cast %4 : vector<1x32x1xf32> to vector<32x1xf32>
    %c0_8 = arith.constant 0 : index
    %c0_9 = arith.constant 0 : index
    %c0_10 = arith.constant 0 : index
    %6 = vector.load %arg9[%c0_8, %c0_9, %c0_10] : memref<3x32x1xf32, #tpu.memory_space<vmem>>, vector<1x32x1xf32>
    %7 = vector.shape_cast %6 : vector<1x32x1xf32> to vector<32x1xf32>
    %cst = arith.constant dense<0.000000e+00> : vector<8xf32>
    %8 = vector.multi_reduction <add>, %1, %cst [0] : vector<32x8xf32> to vector<8xf32>
    %9 = vector.shape_cast %8 : vector<8xf32> to vector<1x8xf32>
    %cst_11 = arith.constant 3.200000e+01 : f32
    %10 = vector.broadcast %cst_11 : f32 to vector<1x8xf32>
    %11 = arith.divf %9, %10 : vector<1x8xf32>
    %12 = vector.broadcast %11 : vector<1x8xf32> to vector<32x8xf32>
    %13 = arith.subf %1, %12 : vector<32x8xf32>
    %14 = arith.mulf %13, %13 : vector<32x8xf32>
    %cst_12 = arith.constant dense<0.000000e+00> : vector<8xf32>
    %15 = vector.multi_reduction <add>, %14, %cst_12 [0] : vector<32x8xf32> to vector<8xf32>
    %16 = vector.shape_cast %15 : vector<8xf32> to vector<1x8xf32>
    %cst_13 = arith.constant 3.200000e+01 : f32
    %17 = vector.broadcast %cst_13 : f32 to vector<1x8xf32>
    %18 = arith.divf %16, %17 : vector<1x8xf32>
    %19 = vector.broadcast %11 : vector<1x8xf32> to vector<32x8xf32>
    %20 = arith.subf %1, %19 : vector<32x8xf32>
    %cst_14 = arith.constant 9.99999974E-6 : f32
    %21 = vector.broadcast %cst_14 : f32 to vector<1x8xf32>
    %22 = arith.addf %18, %21 : vector<1x8xf32>
    %23 = math.rsqrt %22 : vector<1x8xf32>
    %24 = vector.broadcast %23 : vector<1x8xf32> to vector<32x8xf32>
    %25 = arith.mulf %20, %24 : vector<32x8xf32>
    %26 = vector.broadcast %5 : vector<32x1xf32> to vector<32x8xf32>
    %27 = arith.mulf %25, %26 : vector<32x8xf32>
    %28 = vector.broadcast %7 : vector<32x1xf32> to vector<32x8xf32>
    %29 = arith.addf %27, %28 : vector<32x8xf32>
    %c0_15 = arith.constant 0 : index
    %c0_16 = arith.constant 0 : index
    %30 = vector.load %arg5[%c0_15, %c0_16] : memref<320x32xbf16, #tpu.memory_space<vmem>>, vector<96x32xbf16>
    %31 = arith.truncf %29 : vector<32x8xf32> to vector<32x8xbf16>
    %cst_17 = arith.constant dense<0.000000e+00> : vector<96x8xf32>
    %32 = tpu.matmul %30, %31, %cst_17 {dimension_numbers = #tpu.dot_dimension_numbers<[1], [0], [0], [1], [0, 0, 1, 1], [], []>} : vector<96x32xbf16>, vector<32x8xbf16>, vector<96x8xf32> -> vector<96x8xf32>
    %c0_18 = arith.constant 0 : index
    %c0_19 = arith.constant 0 : index
    %33 = vector.load %arg7[%c0_18, %c0_19] : memref<352x1xf32, #tpu.memory_space<vmem>>, vector<96x1xf32>
    %34 = vector.broadcast %33 : vector<96x1xf32> to vector<96x8xf32>
    %35 = arith.addf %32, %34 : vector<96x8xf32>
    %36 = vector.extract_strided_slice %35 {offsets = [0, 0], sizes = [32, 8], strides = [1, 1]} : vector<96x8xf32> to vector<32x8xf32>
    %37 = vector.extract_strided_slice %35 {offsets = [32, 0], sizes = [32, 8], strides = [1, 1]} : vector<96x8xf32> to vector<32x8xf32>
    %38 = vector.extract_strided_slice %35 {offsets = [64, 0], sizes = [32, 8], strides = [1, 1]} : vector<96x8xf32> to vector<32x8xf32>
    %c0_20 = arith.constant 0 : index
    %c0_21 = arith.constant 0 : index
    %c0_22 = arith.constant 0 : index
    %39 = vector.load %arg3[%c0_20, %c0_21, %c0_22] : memref<1x8x8xf32, #tpu.memory_space<vmem>>, vector<1x8x8xf32>
    %40 = vector.shape_cast %39 : vector<1x8x8xf32> to vector<8x8xf32>
    %41 = vector.shape_cast %36 : vector<32x8xf32> to vector<4x8x8xf32>
    %42 = tpu.transpose %41, [0, 2, 1] : vector<4x8x8xf32> -> vector<4x8x8xf32>
    %43 = vector.shape_cast %37 : vector<32x8xf32> to vector<4x8x8xf32>
    %44 = vector.shape_cast %38 : vector<32x8xf32> to vector<4x8x8xf32>
    %45 = arith.truncf %42 : vector<4x8x8xf32> to vector<4x8x8xbf16>
    %46 = arith.truncf %43 : vector<4x8x8xf32> to vector<4x8x8xbf16>
    %cst_23 = arith.constant dense<0.000000e+00> : vector<4x8x8xf32>
    %47 = tpu.matmul %45, %46, %cst_23 {dimension_numbers = #tpu.dot_dimension_numbers<[2], [1], [1], [2], [0, 0, 0, 1, 1, 2], [0], [0]>} : vector<4x8x8xbf16>, vector<4x8x8xbf16>, vector<4x8x8xf32> -> vector<4x8x8xf32>
    %48 = vector.shape_cast %40 : vector<8x8xf32> to vector<1x8x8xf32>
    %49 = vector.broadcast %48 : vector<1x8x8xf32> to vector<4x8x8xf32>
    %50 = arith.addf %47, %49 : vector<4x8x8xf32>
    %cst_24 = arith.constant dense<0xFF800000> : vector<4x8xf32>
    %51 = vector.multi_reduction <maximumf>, %50, %cst_24 [2] : vector<4x8x8xf32> to vector<4x8xf32>
    %52 = vector.shape_cast %51 : vector<4x8xf32> to vector<4x8x1xf32>
    %53 = vector.broadcast %52 : vector<4x8x1xf32> to vector<4x8x8xf32>
    %54 = arith.subf %50, %53 : vector<4x8x8xf32>
    %55 = math.exp %54 : vector<4x8x8xf32>
    %cst_25 = arith.constant dense<0.000000e+00> : vector<4x8xf32>
    %56 = vector.multi_reduction <add>, %55, %cst_25 [2] : vector<4x8x8xf32> to vector<4x8xf32>
    %57 = vector.shape_cast %56 : vector<4x8xf32> to vector<4x8x1xf32>
    %58 = tpu.reciprocal %57 {approx = true} : vector<4x8x1xf32> -> vector<4x8x1xf32>
    %59 = vector.broadcast %58 : vector<4x8x1xf32> to vector<4x8x8xf32>
    %60 = arith.mulf %55, %59 : vector<4x8x8xf32>
    %61 = arith.truncf %44 : vector<4x8x8xf32> to vector<4x8x8xbf16>
    %62 = arith.truncf %60 : vector<4x8x8xf32> to vector<4x8x8xbf16>
    %cst_26 = arith.constant dense<0.000000e+00> : vector<4x8x8xf32>
    %63 = tpu.matmul %61, %62, %cst_26 {dimension_numbers = #tpu.dot_dimension_numbers<[2], [2], [1], [1], [0, 0, 0, 1, 1, 1], [0], [0]>} : vector<4x8x8xbf16>, vector<4x8x8xbf16>, vector<4x8x8xf32> -> vector<4x8x8xf32>
    %64 = vector.shape_cast %63 : vector<4x8x8xf32> to vector<32x8xf32>
    %c96 = arith.constant 96 : index
    %c0_27 = arith.constant 0 : index
    %65 = vector.load %arg5[%c96, %c0_27] : memref<320x32xbf16, #tpu.memory_space<vmem>>, vector<32x32xbf16>
    %66 = arith.truncf %64 : vector<32x8xf32> to vector<32x8xbf16>
    %cst_28 = arith.constant dense<0.000000e+00> : vector<32x8xf32>
    %67 = tpu.matmul %65, %66, %cst_28 {dimension_numbers = #tpu.dot_dimension_numbers<[1], [0], [0], [1], [0, 0, 1, 1], [], []>} : vector<32x32xbf16>, vector<32x8xbf16>, vector<32x8xf32> -> vector<32x8xf32>
    %68 = arith.addf %1, %67 : vector<32x8xf32>
    %c96_29 = arith.constant 96 : index
    %c0_30 = arith.constant 0 : index
    %69 = vector.load %arg7[%c96_29, %c0_30] : memref<352x1xf32, #tpu.memory_space<vmem>>, vector<32x1xf32>
    %70 = vector.broadcast %69 : vector<32x1xf32> to vector<32x8xf32>
    %71 = arith.addf %68, %70 : vector<32x8xf32>
    %c1 = arith.constant 1 : index
    %c0_31 = arith.constant 0 : index
    %c0_32 = arith.constant 0 : index
    %72 = vector.load %arg8[%c1, %c0_31, %c0_32] : memref<3x32x1xf32, #tpu.memory_space<vmem>>, vector<1x32x1xf32>
    %73 = vector.shape_cast %72 : vector<1x32x1xf32> to vector<32x1xf32>
    %c1_33 = arith.constant 1 : index
    %c0_34 = arith.constant 0 : index
    %c0_35 = arith.constant 0 : index
    %74 = vector.load %arg9[%c1_33, %c0_34, %c0_35] : memref<3x32x1xf32, #tpu.memory_space<vmem>>, vector<1x32x1xf32>
    %75 = vector.shape_cast %74 : vector<1x32x1xf32> to vector<32x1xf32>
    %cst_36 = arith.constant dense<0.000000e+00> : vector<8xf32>
    %76 = vector.multi_reduction <add>, %71, %cst_36 [0] : vector<32x8xf32> to vector<8xf32>
    %77 = vector.shape_cast %76 : vector<8xf32> to vector<1x8xf32>
    %cst_37 = arith.constant 3.200000e+01 : f32
    %78 = vector.broadcast %cst_37 : f32 to vector<1x8xf32>
    %79 = arith.divf %77, %78 : vector<1x8xf32>
    %80 = vector.broadcast %79 : vector<1x8xf32> to vector<32x8xf32>
    %81 = arith.subf %71, %80 : vector<32x8xf32>
    %82 = arith.mulf %81, %81 : vector<32x8xf32>
    %cst_38 = arith.constant dense<0.000000e+00> : vector<8xf32>
    %83 = vector.multi_reduction <add>, %82, %cst_38 [0] : vector<32x8xf32> to vector<8xf32>
    %84 = vector.shape_cast %83 : vector<8xf32> to vector<1x8xf32>
    %cst_39 = arith.constant 3.200000e+01 : f32
    %85 = vector.broadcast %cst_39 : f32 to vector<1x8xf32>
    %86 = arith.divf %84, %85 : vector<1x8xf32>
    %87 = vector.broadcast %79 : vector<1x8xf32> to vector<32x8xf32>
    %88 = arith.subf %71, %87 : vector<32x8xf32>
    %cst_40 = arith.constant 9.99999974E-6 : f32
    %89 = vector.broadcast %cst_40 : f32 to vector<1x8xf32>
    %90 = arith.addf %86, %89 : vector<1x8xf32>
    %91 = math.rsqrt %90 : vector<1x8xf32>
    %92 = vector.broadcast %91 : vector<1x8xf32> to vector<32x8xf32>
    %93 = arith.mulf %88, %92 : vector<32x8xf32>
    %94 = vector.broadcast %73 : vector<32x1xf32> to vector<32x8xf32>
    %95 = arith.mulf %93, %94 : vector<32x8xf32>
    %96 = vector.broadcast %75 : vector<32x1xf32> to vector<32x8xf32>
    %97 = arith.addf %95, %96 : vector<32x8xf32>
    %c128 = arith.constant 128 : index
    %c0_41 = arith.constant 0 : index
    %98 = vector.load %arg5[%c128, %c0_41] : memref<320x32xbf16, #tpu.memory_space<vmem>>, vector<32x32xbf16>
    %99 = arith.truncf %97 : vector<32x8xf32> to vector<32x8xbf16>
    %cst_42 = arith.constant dense<0.000000e+00> : vector<32x8xf32>
    %100 = tpu.matmul %98, %99, %cst_42 {dimension_numbers = #tpu.dot_dimension_numbers<[1], [0], [0], [1], [0, 0, 1, 1], [], []>} : vector<32x32xbf16>, vector<32x8xbf16>, vector<32x8xf32> -> vector<32x8xf32>
    %c128_43 = arith.constant 128 : index
    %c0_44 = arith.constant 0 : index
    %101 = vector.load %arg7[%c128_43, %c0_44] : memref<352x1xf32, #tpu.memory_space<vmem>>, vector<32x1xf32>
    %102 = vector.broadcast %101 : vector<32x1xf32> to vector<32x8xf32>
    %103 = arith.addf %100, %102 : vector<32x8xf32>
    %c160 = arith.constant 160 : index
    %c0_45 = arith.constant 0 : index
    %104 = vector.load %arg5[%c160, %c0_45] : memref<320x32xbf16, #tpu.memory_space<vmem>>, vector<64x32xbf16>
    %105 = arith.truncf %3 : vector<32x8xf32> to vector<32x8xbf16>
    %cst_46 = arith.constant dense<0.000000e+00> : vector<64x8xf32>
    %106 = tpu.matmul %104, %105, %cst_46 {dimension_numbers = #tpu.dot_dimension_numbers<[1], [0], [0], [1], [0, 0, 1, 1], [], []>} : vector<64x32xbf16>, vector<32x8xbf16>, vector<64x8xf32> -> vector<64x8xf32>
    %c160_47 = arith.constant 160 : index
    %c0_48 = arith.constant 0 : index
    %107 = vector.load %arg7[%c160_47, %c0_48] : memref<352x1xf32, #tpu.memory_space<vmem>>, vector<64x1xf32>
    %108 = vector.broadcast %107 : vector<64x1xf32> to vector<64x8xf32>
    %109 = arith.addf %106, %108 : vector<64x8xf32>
    %110 = vector.extract_strided_slice %109 {offsets = [0, 0], sizes = [32, 8], strides = [1, 1]} : vector<64x8xf32> to vector<32x8xf32>
    %111 = vector.extract_strided_slice %109 {offsets = [32, 0], sizes = [32, 8], strides = [1, 1]} : vector<64x8xf32> to vector<32x8xf32>
    %c0_49 = arith.constant 0 : index
    %c0_50 = arith.constant 0 : index
    %c0_51 = arith.constant 0 : index
    %112 = vector.load %arg4[%c0_49, %c0_50, %c0_51] : memref<1x8x8xf32, #tpu.memory_space<vmem>>, vector<1x8x8xf32>
    %113 = vector.shape_cast %112 : vector<1x8x8xf32> to vector<8x8xf32>
    %114 = vector.shape_cast %103 : vector<32x8xf32> to vector<4x8x8xf32>
    %115 = tpu.transpose %114, [0, 2, 1] : vector<4x8x8xf32> -> vector<4x8x8xf32>
    %116 = vector.shape_cast %110 : vector<32x8xf32> to vector<4x8x8xf32>
    %117 = vector.shape_cast %111 : vector<32x8xf32> to vector<4x8x8xf32>
    %118 = arith.truncf %115 : vector<4x8x8xf32> to vector<4x8x8xbf16>
    %119 = arith.truncf %116 : vector<4x8x8xf32> to vector<4x8x8xbf16>
    %cst_52 = arith.constant dense<0.000000e+00> : vector<4x8x8xf32>
    %120 = tpu.matmul %118, %119, %cst_52 {dimension_numbers = #tpu.dot_dimension_numbers<[2], [1], [1], [2], [0, 0, 0, 1, 1, 2], [0], [0]>} : vector<4x8x8xbf16>, vector<4x8x8xbf16>, vector<4x8x8xf32> -> vector<4x8x8xf32>
    %121 = vector.shape_cast %113 : vector<8x8xf32> to vector<1x8x8xf32>
    %122 = vector.broadcast %121 : vector<1x8x8xf32> to vector<4x8x8xf32>
    %123 = arith.addf %120, %122 : vector<4x8x8xf32>
    %cst_53 = arith.constant dense<0xFF800000> : vector<4x8xf32>
    %124 = vector.multi_reduction <maximumf>, %123, %cst_53 [2] : vector<4x8x8xf32> to vector<4x8xf32>
    %125 = vector.shape_cast %124 : vector<4x8xf32> to vector<4x8x1xf32>
    %126 = vector.broadcast %125 : vector<4x8x1xf32> to vector<4x8x8xf32>
    %127 = arith.subf %123, %126 : vector<4x8x8xf32>
    %128 = math.exp %127 : vector<4x8x8xf32>
    %cst_54 = arith.constant dense<0.000000e+00> : vector<4x8xf32>
    %129 = vector.multi_reduction <add>, %128, %cst_54 [2] : vector<4x8x8xf32> to vector<4x8xf32>
    %130 = vector.shape_cast %129 : vector<4x8xf32> to vector<4x8x1xf32>
    %131 = tpu.reciprocal %130 {approx = true} : vector<4x8x1xf32> -> vector<4x8x1xf32>
    %132 = vector.broadcast %131 : vector<4x8x1xf32> to vector<4x8x8xf32>
    %133 = arith.mulf %128, %132 : vector<4x8x8xf32>
    %134 = arith.truncf %117 : vector<4x8x8xf32> to vector<4x8x8xbf16>
    %135 = arith.truncf %133 : vector<4x8x8xf32> to vector<4x8x8xbf16>
    %cst_55 = arith.constant dense<0.000000e+00> : vector<4x8x8xf32>
    %136 = tpu.matmul %134, %135, %cst_55 {dimension_numbers = #tpu.dot_dimension_numbers<[2], [2], [1], [1], [0, 0, 0, 1, 1, 1], [0], [0]>} : vector<4x8x8xbf16>, vector<4x8x8xbf16>, vector<4x8x8xf32> -> vector<4x8x8xf32>
    %137 = vector.shape_cast %136 : vector<4x8x8xf32> to vector<32x8xf32>
    %c224 = arith.constant 224 : index
    %c0_56 = arith.constant 0 : index
    %138 = vector.load %arg5[%c224, %c0_56] : memref<320x32xbf16, #tpu.memory_space<vmem>>, vector<32x32xbf16>
    %139 = arith.truncf %137 : vector<32x8xf32> to vector<32x8xbf16>
    %cst_57 = arith.constant dense<0.000000e+00> : vector<32x8xf32>
    %140 = tpu.matmul %138, %139, %cst_57 {dimension_numbers = #tpu.dot_dimension_numbers<[1], [0], [0], [1], [0, 0, 1, 1], [], []>} : vector<32x32xbf16>, vector<32x8xbf16>, vector<32x8xf32> -> vector<32x8xf32>
    %141 = arith.addf %71, %140 : vector<32x8xf32>
    %c224_58 = arith.constant 224 : index
    %c0_59 = arith.constant 0 : index
    %142 = vector.load %arg7[%c224_58, %c0_59] : memref<352x1xf32, #tpu.memory_space<vmem>>, vector<32x1xf32>
    %143 = vector.broadcast %142 : vector<32x1xf32> to vector<32x8xf32>
    %144 = arith.addf %141, %143 : vector<32x8xf32>
    %c2 = arith.constant 2 : index
    %c0_60 = arith.constant 0 : index
    %c0_61 = arith.constant 0 : index
    %145 = vector.load %arg8[%c2, %c0_60, %c0_61] : memref<3x32x1xf32, #tpu.memory_space<vmem>>, vector<1x32x1xf32>
    %146 = vector.shape_cast %145 : vector<1x32x1xf32> to vector<32x1xf32>
    %c2_62 = arith.constant 2 : index
    %c0_63 = arith.constant 0 : index
    %c0_64 = arith.constant 0 : index
    %147 = vector.load %arg9[%c2_62, %c0_63, %c0_64] : memref<3x32x1xf32, #tpu.memory_space<vmem>>, vector<1x32x1xf32>
    %148 = vector.shape_cast %147 : vector<1x32x1xf32> to vector<32x1xf32>
    %cst_65 = arith.constant dense<0.000000e+00> : vector<8xf32>
    %149 = vector.multi_reduction <add>, %144, %cst_65 [0] : vector<32x8xf32> to vector<8xf32>
    %150 = vector.shape_cast %149 : vector<8xf32> to vector<1x8xf32>
    %cst_66 = arith.constant 3.200000e+01 : f32
    %151 = vector.broadcast %cst_66 : f32 to vector<1x8xf32>
    %152 = arith.divf %150, %151 : vector<1x8xf32>
    %153 = vector.broadcast %152 : vector<1x8xf32> to vector<32x8xf32>
    %154 = arith.subf %144, %153 : vector<32x8xf32>
    %155 = arith.mulf %154, %154 : vector<32x8xf32>
    %cst_67 = arith.constant dense<0.000000e+00> : vector<8xf32>
    %156 = vector.multi_reduction <add>, %155, %cst_67 [0] : vector<32x8xf32> to vector<8xf32>
    %157 = vector.shape_cast %156 : vector<8xf32> to vector<1x8xf32>
    %cst_68 = arith.constant 3.200000e+01 : f32
    %158 = vector.broadcast %cst_68 : f32 to vector<1x8xf32>
    %159 = arith.divf %157, %158 : vector<1x8xf32>
    %160 = vector.broadcast %152 : vector<1x8xf32> to vector<32x8xf32>
    %161 = arith.subf %144, %160 : vector<32x8xf32>
    %cst_69 = arith.constant 9.99999974E-6 : f32
    %162 = vector.broadcast %cst_69 : f32 to vector<1x8xf32>
    %163 = arith.addf %159, %162 : vector<1x8xf32>
    %164 = math.rsqrt %163 : vector<1x8xf32>
    %165 = vector.broadcast %164 : vector<1x8xf32> to vector<32x8xf32>
    %166 = arith.mulf %161, %165 : vector<32x8xf32>
    %167 = vector.broadcast %146 : vector<32x1xf32> to vector<32x8xf32>
    %168 = arith.mulf %166, %167 : vector<32x8xf32>
    %169 = vector.broadcast %148 : vector<32x1xf32> to vector<32x8xf32>
    %170 = arith.addf %168, %169 : vector<32x8xf32>
    %c256 = arith.constant 256 : index
    %c0_70 = arith.constant 0 : index
    %171 = vector.load %arg5[%c256, %c0_70] : memref<320x32xbf16, #tpu.memory_space<vmem>>, vector<64x32xbf16>
    %172 = arith.truncf %170 : vector<32x8xf32> to vector<32x8xbf16>
    %cst_71 = arith.constant dense<0.000000e+00> : vector<64x8xf32>
    %173 = tpu.matmul %171, %172, %cst_71 {dimension_numbers = #tpu.dot_dimension_numbers<[1], [0], [0], [1], [0, 0, 1, 1], [], []>} : vector<64x32xbf16>, vector<32x8xbf16>, vector<64x8xf32> -> vector<64x8xf32>
    %c256_72 = arith.constant 256 : index
    %c0_73 = arith.constant 0 : index
    %174 = vector.load %arg7[%c256_72, %c0_73] : memref<352x1xf32, #tpu.memory_space<vmem>>, vector<64x1xf32>
    %175 = vector.broadcast %174 : vector<64x1xf32> to vector<64x8xf32>
    %176 = arith.addf %173, %175 : vector<64x8xf32>
    %cst_74 = arith.constant 0.000000e+00 : f32
    %177 = vector.broadcast %cst_74 : f32 to vector<64x8xf32>
    %178 = arith.maximumf %176, %177 : vector<64x8xf32>
    %c0_75 = arith.constant 0 : index
    %c0_76 = arith.constant 0 : index
    %179 = vector.load %arg6[%c0_75, %c0_76] : memref<32x64xbf16, #tpu.memory_space<vmem>>, vector<32x64xbf16>
    %180 = arith.truncf %178 : vector<64x8xf32> to vector<64x8xbf16>
    %cst_77 = arith.constant dense<0.000000e+00> : vector<32x8xf32>
    %181 = tpu.matmul %179, %180, %cst_77 {dimension_numbers = #tpu.dot_dimension_numbers<[1], [0], [0], [1], [0, 0, 1, 1], [], []>} : vector<32x64xbf16>, vector<64x8xbf16>, vector<32x8xf32> -> vector<32x8xf32>
    %182 = arith.addf %144, %181 : vector<32x8xf32>
    %c320 = arith.constant 320 : index
    %c0_78 = arith.constant 0 : index
    %183 = vector.load %arg7[%c320, %c0_78] : memref<352x1xf32, #tpu.memory_space<vmem>>, vector<32x1xf32>
    %184 = vector.broadcast %183 : vector<32x1xf32> to vector<32x8xf32>
    %185 = arith.addf %182, %184 : vector<32x8xf32>
    %c0_79 = arith.constant 0 : index
    %c0_80 = arith.constant 0 : index
    %c0_81 = arith.constant 0 : index
    %186 = vector.load %arg10[%c0_79, %c0_80, %c0_81] : memref<1x32x8xf32, #tpu.memory_space<vmem>>, vector<1x32x8xf32>
    %187 = vector.shape_cast %186 : vector<1x32x8xf32> to vector<32x8xf32>
    %188 = vector.shape_cast %185 : vector<32x8xf32> to vector<1x32x8xf32>
    tpu.vector_store %arg10[%c0_79, %c0_80, %c0_81], %188 {strides = array<i32>} : memref<1x32x8xf32, #tpu.memory_space<vmem>>, vector<1x32x8xf32>,
    return
  }
  func.func @transform_0(%arg0: i32) -> (i32, i32, i32) {
    %c0_i32 = arith.constant 0 : i32
    %c0_i32_0 = arith.constant 0 : i32
    %c0_i32_1 = arith.constant 0 : i32
    return %arg0, %c0_i32, %c0_i32_0 : i32, i32, i32
  }
  func.func @transform_1(%arg0: i32) -> (i32, i32, i32) {
    %c0_i32 = arith.constant 0 : i32
    %c0_i32_0 = arith.constant 0 : i32
    %c0_i32_1 = arith.constant 0 : i32
    return %arg0, %c0_i32, %c0_i32_0 : i32, i32, i32
  }
  func.func @transform_2(%arg0: i32) -> (i32, i32, i32) {
    %c0_i32 = arith.constant 0 : i32
    %c0_i32_0 = arith.constant 0 : i32
    %c0_i32_1 = arith.constant 0 : i32
    return %arg0, %c0_i32, %c0_i32_0 : i32, i32, i32
  }
  func.func @transform_3(%arg0: i32) -> (i32, i32, i32) {
    %c0_i32 = arith.constant 0 : i32
    %c0_i32_0 = arith.constant 0 : i32
    %c0_i32_1 = arith.constant 0 : i32
    return %arg0, %c0_i32, %c0_i32_0 : i32, i32, i32
  }
  func.func @transform_4(%arg0: i32) -> (i32, i32) {
    %c0_i32 = arith.constant 0 : i32
    %c0_i32_0 = arith.constant 0 : i32
    %c0_i32_1 = arith.constant 0 : i32
    return %c0_i32, %c0_i32_0 : i32, i32
  }
  func.func @transform_5(%arg0: i32) -> (i32, i32) {
    %c0_i32 = arith.constant 0 : i32
    %c0_i32_0 = arith.constant 0 : i32
    %c0_i32_1 = arith.constant 0 : i32
    return %c0_i32, %c0_i32_0 : i32, i32
  }
  func.func @transform_6(%arg0: i32) -> (i32, i32) {
    %c0_i32 = arith.constant 0 : i32
    %c0_i32_0 = arith.constant 0 : i32
    %c0_i32_1 = arith.constant 0 : i32
    return %c0_i32, %c0_i32_0 : i32, i32
  }
  func.func @transform_7(%arg0: i32) -> (i32, i32, i32) {
    %c0_i32 = arith.constant 0 : i32
    %c0_i32_0 = arith.constant 0 : i32
    %c0_i32_1 = arith.constant 0 : i32
    %c0_i32_2 = arith.constant 0 : i32
    return %c0_i32, %c0_i32_0, %c0_i32_1 : i32, i32, i32
  }
  func.func @transform_8(%arg0: i32) -> (i32, i32, i32) {
    %c0_i32 = arith.constant 0 : i32
    %c0_i32_0 = arith.constant 0 : i32
    %c0_i32_1 = arith.constant 0 : i32
    %c0_i32_2 = arith.constant 0 : i32
    return %c0_i32, %c0_i32_0, %c0_i32_1 : i32, i32, i32
  }
  func.func @transform_9(%arg0: i32) -> (i32, i32, i32) {
    %c0_i32 = arith.constant 0 : i32
    %c0_i32_0 = arith.constant 0 : i32
    %c0_i32_1 = arith.constant 0 : i32
    return %arg0, %c0_i32, %c0_i32_0 : i32, i32, i32
  }
}

</mosaic_0001>

<llo_original>
// kernel: decoder_layer_pallas.1
$region0: #{decoder_layer_pallas.1}
  #allocation0 [shape = 'u32[]', space=smem, size = 0x4, offset = 0x4, fixed_abs, tag = 'smem constant byte address 0x4 - core index']
  #allocation1 [shape = 'u32[144,128]{1,0:T(1,128)}', space=vmem, size = 0x12000, scoped, tag = 'internal scratch']
  %s0 = inlined_call_operand.vmem [shape: f32[2,32,8], index: 0, kind: input, shape index: {}]
  %s1 = inlined_call_operand.vmem [shape: f32[2,32,8], index: 1, kind: input, shape index: {}]
  %s2 = inlined_call_operand.vmem [shape: f32[2,8,8], index: 2, kind: input, shape index: {}]
  %s3 = inlined_call_operand.vmem [shape: f32[2,8,8], index: 3, kind: input, shape index: {}]
  %s4 = inlined_call_operand.vmem [shape: bf16[320,32], index: 4, kind: input, shape index: {}]
  %s5 = inlined_call_operand.vmem [shape: bf16[32,64], index: 5, kind: input, shape index: {}]
  %s6 = inlined_call_operand.vmem [shape: f32[352,1], index: 6, kind: input, shape index: {}]
  %s7 = inlined_call_operand.vmem [shape: f32[3,32,1], index: 7, kind: input, shape index: {}]
  %s8 = inlined_call_operand.vmem [shape: f32[3,32,1], index: 8, kind: input, shape index: {}]
  %s9 = inlined_call_operand.vmem [shape: f32[2,32,8], index: 9, kind: output, shape index: {}]
  %s10 = sld [smem:[#allocation0]]
  $region69: #{decoder_layer_pallas.1} parent=0
    _
  %s12 = ssub.s32 1, %s10
  %s13 = scalar_select 0, %s12, %s10
  loop: start=0, step=1, limit=4
  $region2: #{decoder_layer_pallas.1} parent=0 // loop_pre_header
    _
  $region3: #{decoder_layer_pallas.1} parent=0 // loop_header
    %s15 = sphi 0, %s19
    %p16 = scmp.ge.s32.totalorder %s15, 4
    %s25 = sphi 0, %s27
    %s28 = sphi 0, %s25
    %s29 = sphi 0, %s28
    %s45 = sphi 0, %s29
    %s51 = sphi 0, %s53
    %s54 = sphi 0, %s51
    %s55 = sphi 0, %s54
    %s71 = sphi 0, %s55
    %s77 = sphi 0, %s79
    %s80 = sphi 0, %s77
    %s81 = sphi 0, %s80
    %s97 = sphi 0, %s81
    %s103 = sphi 0, %s105
    %s106 = sphi 0, %s103
    %s107 = sphi 0, %s106
    %s123 = sphi 0, %s107
    %s127 = sphi 0, %s127
    %s129 = sphi 0, %s127
    %s130 = sphi 0, %s129
    %s144 = sphi 0, %s130
    %s148 = sphi 0, %s148
    %s150 = sphi 0, %s148
    %s151 = sphi 0, %s150
    %s165 = sphi 0, %s151
    %s169 = sphi 0, %s169
    %s171 = sphi 0, %s169
    %s172 = sphi 0, %s171
    %s186 = sphi 0, %s172
    %s190 = sphi 0, %s190
    %s192 = sphi 0, %s190
    %s193 = sphi 0, %s192
    %s207 = sphi 0, %s193
    %s211 = sphi 0, %s211
    %s213 = sphi 0, %s211
    %s214 = sphi 0, %s213
    %s228 = sphi 0, %s214
    %s234 = sphi 0, %s236
    %s237 = sphi 0, %s234
    %s238 = sphi 0, %s237
    %s254 = sphi 0, %s238
  $region4: #{decoder_layer_pallas.1} parent=0 // loop_header_branch
    %18 = sbr.rel (%p16) target = $region8
  $region5: #{decoder_layer_pallas.1} parent=0 // loop_body
    %s20 = ssub.s32 %s15, 1
    %s21 = ssub.s32 %s15, 2
    %s22 = sadd.s32 %s15, 1
    %s23 = ssub.s32 %s15, %s22
    %p24 = scmp.eq.s32.totalorder %s23, 0
    %s26 = sadd.s32 %s25, 1
    %s27 = scalar_select %p24, %s25, %s26
    %p30 = pneg %p24
    %p31 = scmp.eq.s32.totalorder %s15, 1
    %p32 = por %p30, %p31
    %p33 = scmp.ne.s32.totalorder %s25, %s28
    %p34 = scmp.eq.s32.totalorder %s15, 0
    %p35 = por %p33, %p34
    %p36 = scmp.ne.s32.totalorder %s25, %s28
    %p37 = scmp.eq.s32.totalorder %s20, 1
    %p38 = por %p36, %p37
    %p39 = scmp.ne.s32.totalorder %s28, %s29
    %p40 = scmp.eq.s32.totalorder %s20, 0
    %p41 = por %p39, %p40
    %p42 = scmp.ne.s32.totalorder %s28, %s29
    %p43 = scmp.eq.s32.totalorder %s21, 1
    %p44 = por %p42, %p43
    %p46 = scmp.ne.s32.totalorder %s29, %s45
    %p47 = scmp.eq.s32.totalorder %s21, 0
    %p48 = por %p46, %p47
    %s49 = ssub.s32 %s15, %s22
    %p50 = scmp.eq.s32.totalorder %s49, 0
    %s52 = sadd.s32 %s51, 1
    %s53 = scalar_select %p50, %s51, %s52
    %p56 = pneg %p50
    %p57 = scmp.eq.s32.totalorder %s15, 1
    %p58 = por %p56, %p57
    %p59 = scmp.ne.s32.totalorder %s51, %s54
    %p60 = scmp.eq.s32.totalorder %s15, 0
    %p61 = por %p59, %p60
    %p62 = scmp.ne.s32.totalorder %s51, %s54
    %p63 = scmp.eq.s32.totalorder %s20, 1
    %p64 = por %p62, %p63
    %p65 = scmp.ne.s32.totalorder %s54, %s55
    %p66 = scmp.eq.s32.totalorder %s20, 0
    %p67 = por %p65, %p66
    %p68 = scmp.ne.s32.totalorder %s54, %s55
    %p69 = scmp.eq.s32.totalorder %s21, 1
    %p70 = por %p68, %p69
    %p72 = scmp.ne.s32.totalorder %s55, %s71
    %p73 = scmp.eq.s32.totalorder %s21, 0
    %p74 = por %p72, %p73
    %s75 = ssub.s32 %s15, %s22
    %p76 = scmp.eq.s32.totalorder %s75, 0
    %s78 = sadd.s32 %s77, 1
    %s79 = scalar_select %p76, %s77, %s78
    %p82 = pneg %p76
    %p83 = scmp.eq.s32.totalorder %s15, 1
    %p84 = por %p82, %p83
    %p85 = scmp.ne.s32.totalorder %s77, %s80
    %p86 = scmp.eq.s32.totalorder %s15, 0
    %p87 = por %p85, %p86
    %p88 = scmp.ne.s32.totalorder %s77, %s80
    %p89 = scmp.eq.s32.totalorder %s20, 1
    %p90 = por %p88, %p89
    %p91 = scmp.ne.s32.totalorder %s80, %s81
    %p92 = scmp.eq.s32.totalorder %s20, 0
    %p93 = por %p91, %p92
    %p94 = scmp.ne.s32.totalorder %s80, %s81
    %p95 = scmp.eq.s32.totalorder %s21, 1
    %p96 = por %p94, %p95
    %p98 = scmp.ne.s32.totalorder %s81, %s97
    %p99 = scmp.eq.s32.totalorder %s21, 0
    %p100 = por %p98, %p99
    %s101 = ssub.s32 %s15, %s22
    %p102 = scmp.eq.s32.totalorder %s101, 0
    %s104 = sadd.s32 %s103, 1
    %s105 = scalar_select %p102, %s103, %s104
    %p108 = pneg %p102
    %p109 = scmp.eq.s32.totalorder %s15, 1
    %p110 = por %p108, %p109
    %p111 = scmp.ne.s32.totalorder %s103, %s106
    %p112 = scmp.eq.s32.totalorder %s15, 0
    %p113 = por %p111, %p112
    %p114 = scmp.ne.s32.totalorder %s103, %s106
    %p115 = scmp.eq.s32.totalorder %s20, 1
    %p116 = por %p114, %p115
    %p117 = scmp.ne.s32.totalorder %s106, %s107
    %p118 = scmp.eq.s32.totalorder %s20, 0
    %p119 = por %p117, %p118
    %p120 = scmp.ne.s32.totalorder %s106, %s107
    %p121 = scmp.eq.s32.totalorder %s21, 1
    %p122 = por %p120, %p121
    %p124 = scmp.ne.s32.totalorder %s107, %s123
    %p125 = scmp.eq.s32.totalorder %s21, 0
    %p126 = por %p124, %p125
    %s128 = sadd.s32 %s127, 1
    %p131 = scmp.eq.s32.totalorder %s15, 1
    %p132 = scmp.ne.s32.totalorder %s127, %s129
    %p133 = scmp.eq.s32.totalorder %s15, 0
    %p134 = por %p132, %p133
    %p135 = scmp.ne.s32.totalorder %s127, %s129
    %p136 = scmp.eq.s32.totalorder %s20, 1
    %p137 = por %p135, %p136
    %p138 = scmp.ne.s32.totalorder %s129, %s130
    %p139 = scmp.eq.s32.totalorder %s20, 0
    %p140 = por %p138, %p139
    %p141 = scmp.ne.s32.totalorder %s129, %s130
    %p142 = scmp.eq.s32.totalorder %s21, 1
    %p143 = por %p141, %p142
    %p145 = scmp.ne.s32.totalorder %s130, %s144
    %p146 = scmp.eq.s32.totalorder %s21, 0
    %p147 = por %p145, %p146
    %s149 = sadd.s32 %s148, 1
    %p152 = scmp.eq.s32.totalorder %s15, 1
    %p153 = scmp.ne.s32.totalorder %s148, %s150
    %p154 = scmp.eq.s32.totalorder %s15, 0
    %p155 = por %p153, %p154
    %p156 = scmp.ne.s32.totalorder %s148, %s150
    %p157 = scmp.eq.s32.totalorder %s20, 1
    %p158 = por %p156, %p157
    %p159 = scmp.ne.s32.totalorder %s150, %s151
    %p160 = scmp.eq.s32.totalorder %s20, 0
    %p161 = por %p159, %p160
    %p162 = scmp.ne.s32.totalorder %s150, %s151
    %p163 = scmp.eq.s32.totalorder %s21, 1
    %p164 = por %p162, %p163
    %p166 = scmp.ne.s32.totalorder %s151, %s165
    %p167 = scmp.eq.s32.totalorder %s21, 0
    %p168 = por %p166, %p167
    %s170 = sadd.s32 %s169, 1
    %p173 = scmp.eq.s32.totalorder %s15, 1
    %p174 = scmp.ne.s32.totalorder %s169, %s171
    %p175 = scmp.eq.s32.totalorder %s15, 0
    %p176 = por %p174, %p175
    %p177 = scmp.ne.s32.totalorder %s169, %s171
    %p178 = scmp.eq.s32.totalorder %s20, 1
    %p179 = por %p177, %p178
    %p180 = scmp.ne.s32.totalorder %s171, %s172
    %p181 = scmp.eq.s32.totalorder %s20, 0
    %p182 = por %p180, %p181
    %p183 = scmp.ne.s32.totalorder %s171, %s172
    %p184 = scmp.eq.s32.totalorder %s21, 1
    %p185 = por %p183, %p184
    %p187 = scmp.ne.s32.totalorder %s172, %s186
    %p188 = scmp.eq.s32.totalorder %s21, 0
    %p189 = por %p187, %p188
    %s191 = sadd.s32 %s190, 1
    %p194 = scmp.eq.s32.totalorder %s15, 1
    %p195 = scmp.ne.s32.totalorder %s190, %s192
    %p196 = scmp.eq.s32.totalorder %s15, 0
    %p197 = por %p195, %p196
    %p198 = scmp.ne.s32.totalorder %s190, %s192
    %p199 = scmp.eq.s32.totalorder %s20, 1
    %p200 = por %p198, %p199
    %p201 = scmp.ne.s32.totalorder %s192, %s193
    %p202 = scmp.eq.s32.totalorder %s20, 0
    %p203 = por %p201, %p202
    %p204 = scmp.ne.s32.totalorder %s192, %s193
    %p205 = scmp.eq.s32.totalorder %s21, 1
    %p206 = por %p204, %p205
    %p208 = scmp.ne.s32.totalorder %s193, %s207
    %p209 = scmp.eq.s32.totalorder %s21, 0
    %p210 = por %p208, %p209
    %s212 = sadd.s32 %s211, 1
    %p215 = scmp.eq.s32.totalorder %s15, 1
    %p216 = scmp.ne.s32.totalorder %s211, %s213
    %p217 = scmp.eq.s32.totalorder %s15, 0
    %p218 = por %p216, %p217
    %p219 = scmp.ne.s32.totalorder %s211, %s213
    %p220 = scmp.eq.s32.totalorder %s20, 1
    %p221 = por %p219, %p220
    %p222 = scmp.ne.s32.totalorder %s213, %s214
    %p223 = scmp.eq.s32.totalorder %s20, 0
    %p224 = por %p222, %p223
    %p225 = scmp.ne.s32.totalorder %s213, %s214
    %p226 = scmp.eq.s32.totalorder %s21, 1
    %p227 = por %p225, %p226
    %p229 = scmp.ne.s32.totalorder %s214, %s228
    %p230 = scmp.eq.s32.totalorder %s21, 0
    %p231 = por %p229, %p230
    %s232 = ssub.s32 %s15, %s22
    %p233 = scmp.eq.s32.totalorder %s232, 0
    %s235 = sadd.s32 %s234, 1
    %s236 = scalar_select %p233, %s234, %s235
    %p239 = pneg %p233
    %p240 = scmp.eq.s32.totalorder %s15, 1
    %p241 = por %p239, %p240
    %p242 = scmp.ne.s32.totalorder %s234, %s237
    %p243 = scmp.eq.s32.totalorder %s15, 0
    %p244 = por %p242, %p243
    %p245 = scmp.ne.s32.totalorder %s234, %s237
    %p246 = scmp.eq.s32.totalorder %s20, 1
    %p247 = por %p245, %p246
    %p248 = scmp.ne.s32.totalorder %s237, %s238
    %p249 = scmp.eq.s32.totalorder %s20, 0
    %p250 = por %p248, %p249
    %p251 = scmp.ne.s32.totalorder %s237, %s238
    %p252 = scmp.eq.s32.totalorder %s21, 1
    %p253 = por %p251, %p252
    %p255 = scmp.ne.s32.totalorder %s238, %s254
    %p256 = scmp.eq.s32.totalorder %s21, 0
    %p257 = por %p255, %p256
    %p258 = scmp.le.s32.totalorder 1, %s15
    %p259 = scmp.lt.s32.totalorder %s15, 3
    %p260 = pnand %p258, %p259
    %p261 = pneg %p260
    // Predicated region
    $region9: #{decoder_layer_pallas.1} parent=5 // pred_check
      _
    $region10: #{decoder_layer_pallas.1} parent=5 // pred_check_branch
      %263 = sbr.rel (%p260) target = $region12
    $region11: #{decoder_layer_pallas.1} parent=5 // pred_region
      %s264 = ssub.s32 %s15, 1
      // Predicated region
      $region13: #{decoder_layer_pallas.1} parent=11 // pred_check
        %p265 = pneg %p140
      $region14: #{decoder_layer_pallas.1} parent=11 // pred_check_branch
        %267 = sbr.rel (%p265) target = $region16
      $region15: #{decoder_layer_pallas.1} parent=11 // pred_region
        _
      $region16: #{decoder_layer_pallas.1} parent=11 // pred_fallthru
        _
      // Predicated region
      $region17: #{decoder_layer_pallas.1} parent=11 // pred_check
        %p268 = pneg %p161
      $region18: #{decoder_layer_pallas.1} parent=11 // pred_check_branch
        %270 = sbr.rel (%p268) target = $region20
      $region19: #{decoder_layer_pallas.1} parent=11 // pred_region
        _
      $region20: #{decoder_layer_pallas.1} parent=11 // pred_fallthru
        _
      // Predicated region
      $region21: #{decoder_layer_pallas.1} parent=11 // pred_check
        %p271 = pneg %p182
      $region22: #{decoder_layer_pallas.1} parent=11 // pred_check_branch
        %273 = sbr.rel (%p271) target = $region24
      $region23: #{decoder_layer_pallas.1} parent=11 // pred_region
        _
      $region24: #{decoder_layer_pallas.1} parent=11 // pred_fallthru
        _
      // Predicated region
      $region25: #{decoder_layer_pallas.1} parent=11 // pred_check
        %p274 = pneg %p203
      $region26: #{decoder_layer_pallas.1} parent=11 // pred_check_branch
        %276 = sbr.rel (%p274) target = $region28
      $region27: #{decoder_layer_pallas.1} parent=11 // pred_region
        _
      $region28: #{decoder_layer_pallas.1} parent=11 // pred_fallthru
        _
      // Predicated region
      $region29: #{decoder_layer_pallas.1} parent=11 // pred_check
        %p277 = pneg %p224
      $region30: #{decoder_layer_pallas.1} parent=11 // pred_check_branch
        %279 = sbr.rel (%p277) target = $region32
      $region31: #{decoder_layer_pallas.1} parent=11 // pred_region
        _
      $region32: #{decoder_layer_pallas.1} parent=11 // pred_fallthru
        _
    $region12: #{decoder_layer_pallas.1} parent=5 // pred_fallthru
      _
    %p280 = scmp.lt.s32.totalorder %s15, 2
    // Predicated region
    $region33: #{decoder_layer_pallas.1} parent=5 // pred_check
      %p281 = pneg %p280
    $region34: #{decoder_layer_pallas.1} parent=5 // pred_check_branch
      %283 = sbr.rel (%p281) target = $region36
    $region35: #{decoder_layer_pallas.1} parent=5 // pred_region
      // Predicated region
      $region37: #{decoder_layer_pallas.1} parent=35 // pred_check
        %p284 = pneg %p35
      $region38: #{decoder_layer_pallas.1} parent=35 // pred_check_branch
        %286 = sbr.rel (%p284) target = $region40
      $region39: #{decoder_layer_pallas.1} parent=35 // pred_region
        %p287 = scmp.lt.s32.totalorder %s15, 1
        %s288 = scalar_select %p287, %s15, 1
        %s289 = smul.addr %s288, 4
        %s290 = smul.addr %s289, 8
        %s291 = scalar_lea.vmem %s0, %s290
      $region40: #{decoder_layer_pallas.1} parent=35 // pred_fallthru
        _
      // Predicated region
      $region41: #{decoder_layer_pallas.1} parent=35 // pred_check
        %p292 = pneg %p61
      $region42: #{decoder_layer_pallas.1} parent=35 // pred_check_branch
        %294 = sbr.rel (%p292) target = $region44
      $region43: #{decoder_layer_pallas.1} parent=35 // pred_region
        %p295 = scmp.lt.s32.totalorder %s15, 1
        %s296 = scalar_select %p295, %s15, 1
        %s297 = smul.addr %s296, 4
        %s298 = smul.addr %s297, 8
        %s299 = scalar_lea.vmem %s1, %s298
      $region44: #{decoder_layer_pallas.1} parent=35 // pred_fallthru
        _
      // Predicated region
      $region45: #{decoder_layer_pallas.1} parent=35 // pred_check
        %p300 = pneg %p87
      $region46: #{decoder_layer_pallas.1} parent=35 // pred_check_branch
        %302 = sbr.rel (%p300) target = $region48
      $region47: #{decoder_layer_pallas.1} parent=35 // pred_region
        %p303 = scmp.lt.s32.totalorder %s15, 1
        %s304 = scalar_select %p303, %s15, 1
        %s305 = smul.addr %s304, 8
        %s306 = scalar_lea.vmem %s2, %s305
      $region48: #{decoder_layer_pallas.1} parent=35 // pred_fallthru
        _
      // Predicated region
      $region49: #{decoder_layer_pallas.1} parent=35 // pred_check
        %p307 = pneg %p113
      $region50: #{decoder_layer_pallas.1} parent=35 // pred_check_branch
        %309 = sbr.rel (%p307) target = $region52
      $region51: #{decoder_layer_pallas.1} parent=35 // pred_region
        %p310 = scmp.lt.s32.totalorder %s15, 1
        %s311 = scalar_select %p310, %s15, 1
        %s312 = smul.addr %s311, 8
        %s313 = scalar_lea.vmem %s3, %s312
      $region52: #{decoder_layer_pallas.1} parent=35 // pred_fallthru
        _
    $region36: #{decoder_layer_pallas.1} parent=5 // pred_fallthru
      _
    %p314 = scmp.le.s32.totalorder 1, %s15
    %p315 = scmp.lt.s32.totalorder %s15, 3
    %p316 = pnand %p314, %p315
    %p317 = pneg %p316
    // Predicated region
    $region53: #{decoder_layer_pallas.1} parent=5 // pred_check
      _
    $region54: #{decoder_layer_pallas.1} parent=5 // pred_check_branch
      %319 = sbr.rel (%p316) target = $region56
    $region55: #{decoder_layer_pallas.1} parent=5 // pred_region
      %s320 = ssub.s32 %s15, 1
      %p321 = scmp.lt.s32.totalorder %s20, 1
      %s322 = scalar_select %p321, %s20, 1
      %s323 = smul.addr %s322, 4
      %s324 = smul.addr %s323, 8
      %s325 = scalar_lea.vmem %s0, %s324
      %p326 = pneg %p41
      %p327 = pneg %p38
      %p328 = scmp.lt.s32.totalorder %s20, 1
      %s329 = scalar_select %p328, %s20, 1
      %s330 = smul.addr %s329, 4
      %s331 = smul.addr %s330, 8
      %s332 = scalar_lea.vmem %s1, %s331
      %p333 = pneg %p67
      %p334 = pneg %p64
      %p335 = scmp.lt.s32.totalorder %s20, 1
      %s336 = scalar_select %p335, %s20, 1
      %s337 = smul.addr %s336, 8
      %s338 = scalar_lea.vmem %s2, %s337
      %p339 = pneg %p93
      %p340 = pneg %p90
      %p341 = scmp.lt.s32.totalorder %s20, 1
      %s342 = scalar_select %p341, %s20, 1
      %s343 = smul.addr %s342, 8
      %s344 = scalar_lea.vmem %s3, %s343
      %p345 = pneg %p119
      %p346 = pneg %p116
      %p347 = pneg %p140
      %p348 = pneg %p137
      %p349 = pneg %p161
      %p350 = pneg %p158
      %p351 = pneg %p182
      %p352 = pneg %p179
      %p353 = pneg %p203
      %p354 = pneg %p200
      %p355 = pneg %p224
      %p356 = pneg %p221
      %p357 = pneg %p250
      %p358 = pneg %p247
      %p359 = scmp.lt.s32.totalorder %s20, 1
      %s360 = scalar_select %p359, %s20, 1
      %s361 = smul.addr %s360, 4
      %s362 = smul.addr %s361, 8
      %s363 = scalar_lea.vmem %s9, %s362
      %p364 = scmp.lt.s32.totalorder %s20, 1
      %s365 = scalar_select %p364, %s20, 1
      %s366 = smul.addr %s365, 4
      %s367 = smul.addr %s366, 8
      %s368 = scalar_lea.vmem %s0, %s367
      %p369 = scmp.lt.s32.totalorder %s20, 1
      %s370 = scalar_select %p369, %s20, 1
      %s371 = smul.addr %s370, 4
      %s372 = smul.addr %s371, 8
      %s373 = scalar_lea.vmem %s1, %s372
      %p374 = scmp.lt.s32.totalorder %s20, 1
      %s375 = scalar_select %p374, %s20, 1
      %s376 = smul.addr %s375, 8
      %s377 = scalar_lea.vmem %s2, %s376
      %p378 = scmp.lt.s32.totalorder %s20, 1
      %s379 = scalar_select %p378, %s20, 1
      %s380 = smul.addr %s379, 8
      %s381 = scalar_lea.vmem %s3, %s380
      %p382 = scmp.lt.s32.totalorder %s20, 1
      %s383 = scalar_select %p382, %s20, 1
      %s384 = smul.addr %s383, 4
      %s385 = smul.addr %s384, 8
      %s386 = scalar_lea.vmem %s9, %s385
      %v388 = vld [vmem:[%s368] sm:$0xff]
      %v389 = vld [vmem:[%s368 + $0x8] sm:$0xff]
      %v390 = vld [vmem:[%s368 + $0x10] sm:$0xff]
      %v391 = vld [vmem:[%s368 + $0x18] sm:$0xff]
      %v392 = vld [vmem:[%s373] sm:$0xff]
      %v393 = vld [vmem:[%s373 + $0x8] sm:$0xff]
      %v394 = vld [vmem:[%s373 + $0x10] sm:$0xff]
      %v395 = vld [vmem:[%s373 + $0x18] sm:$0xff]
      %v396 = vld [vmem:[%s7] sm:$0xff]
      %v397 = vld [vmem:[%s7 + $0x8] sm:$0xff]
      %v398 = vld [vmem:[%s7 + $0x10] sm:$0xff]
      %v399 = vld [vmem:[%s7 + $0x18] sm:$0xff]
      %v400 = vld [vmem:[%s8] sm:$0xff]
      %v401 = vld [vmem:[%s8 + $0x8] sm:$0xff]
      %v402 = vld [vmem:[%s8 + $0x10] sm:$0xff]
      %v403 = vld [vmem:[%s8 + $0x18] sm:$0xff]
      %vm404 = vcmask 64512
      %v405 = vsel %vm404, %v388, 0.0
      %v406 = vsel %vm404, %v389, 0.0
      %v407 = vadd.f32 %v405, %v406
      %v408 = vsel %vm404, %v390, 0.0
      %v409 = vadd.f32 %v407, %v408
      %v410 = vsel %vm404, %v391, 0.0
      %v411 = vadd.f32 %v409, %v410
      %v412 = vrot.slane %v411, 4
      %v413 = vadd.f32 %v411, %v412
      %v414 = vrot.slane %v413, 2
      %v415 = vadd.f32 %v413, %v414
      %v416 = vrot.slane %v415, 1
      %v417 = vadd.f32 %v415, %v416
      %v418 = vrcp.pop 32.0
      %v419 = vmul.f32 %v417, %v418
      %v420 = vsub.f32 %v388, %v419
      %v421 = vsub.f32 %v389, %v419
      %v422 = vsub.f32 %v390, %v419
      %v423 = vsub.f32 %v391, %v419
      %v424 = vmul.f32 %v420, %v420
      %v425 = vmul.f32 %v421, %v421
      %v426 = vmul.f32 %v422, %v422
      %v427 = vmul.f32 %v423, %v423
      %v428 = vsel %vm404, %v424, 0.0
      %v429 = vsel %vm404, %v425, 0.0
      %v430 = vadd.f32 %v428, %v429
      %v431 = vsel %vm404, %v426, 0.0
      %v432 = vadd.f32 %v430, %v431
      %v433 = vsel %vm404, %v427, 0.0
      %v434 = vadd.f32 %v432, %v433
      %v435 = vrot.slane %v434, 4
      %v436 = vadd.f32 %v434, %v435
      %v437 = vrot.slane %v436, 2
      %v438 = vadd.f32 %v436, %v437
      %v439 = vrot.slane %v438, 1
      %v440 = vadd.f32 %v438, %v439
      %v441 = vmul.f32 %v440, %v418
      %v442 = vadd.f32 %v441, 1e-05
      %v443 = vrsqrt.pop %v442
      %v444 = vmul.f32 %v420, %v443
      %v445 = vmul.f32 %v421, %v443
      %v446 = vmul.f32 %v422, %v443
      %v447 = vmul.f32 %v423, %v443
      %449 = vset.pattern.permute.xlu0 0
      %450 = vperm.xlu0 %449, %v396
      %v451 = vpop.permute.xlu0 %450
      %454 = vset.pattern.permute.xlu0 0
      %455 = vperm.xlu0 %454, %v397
      %v456 = vpop.permute.xlu0 %455
      %459 = vset.pattern.permute.xlu0 0
      %460 = vperm.xlu0 %459, %v398
      %v461 = vpop.permute.xlu0 %460
      %464 = vset.pattern.permute.xlu0 0
      %465 = vperm.xlu0 %464, %v399
      %v466 = vpop.permute.xlu0 %465
      %v468 = vmul.f32 %v444, %v451
      %v469 = vmul.f32 %v445, %v456
      %v470 = vmul.f32 %v446, %v461
      %v471 = vmul.f32 %v447, %v466
      %473 = vset.pattern.permute.xlu0 0
      %474 = vperm.xlu0 %473, %v400
      %v475 = vpop.permute.xlu0 %474
      %478 = vset.pattern.permute.xlu0 0
      %479 = vperm.xlu0 %478, %v401
      %v480 = vpop.permute.xlu0 %479
      %483 = vset.pattern.permute.xlu0 0
      %484 = vperm.xlu0 %483, %v402
      %v485 = vpop.permute.xlu0 %484
      %488 = vset.pattern.permute.xlu0 0
      %489 = vperm.xlu0 %488, %v403
      %v490 = vpop.permute.xlu0 %489
      %v492 = vadd.f32 %v468, %v475
      %v493 = vadd.f32 %v469, %v480
      %v494 = vadd.f32 %v470, %v485
      %v495 = vadd.f32 %v471, %v490
      %v496 = vld [vmem:[%s4] sm:$0xf]
      %v497 = vld [vmem:[%s4 + $0x4] sm:$0xf]
      %v498 = vld [vmem:[%s4 + $0x8] sm:$0xf]
      %v499 = vld [vmem:[%s4 + $0xc] sm:$0xf]
      %v500 = vld [vmem:[%s4 + $0x10] sm:$0xf]
      %v501 = vld [vmem:[%s4 + $0x14] sm:$0xf]
      %v502 = vld [vmem:[%s4 + $0x18] sm:$0xf]
      %v503 = vld [vmem:[%s4 + $0x1c] sm:$0xf]
      %v504 = vld [vmem:[%s4 + $0x20] sm:$0xf]
      %v505 = vld [vmem:[%s4 + $0x24] sm:$0xf]
      %v506 = vld [vmem:[%s4 + $0x28] sm:$0xf]
      %v507 = vld [vmem:[%s4 + $0x2c] sm:$0xf]
      %v508 = vpack.c.bf16 %v493, %v492
      %v509 = vpack.c.bf16 %v495, %v494
      %v510 = vld [vmem:[%s6] sm:$0xff]
      %v511 = vld [vmem:[%s6 + $0x8] sm:$0xff]
      %v512 = vld [vmem:[%s6 + $0x10] sm:$0xff]
      %v513 = vld [vmem:[%s6 + $0x18] sm:$0xff]
      %v514 = vld [vmem:[%s6 + $0x20] sm:$0xff]
      %v515 = vld [vmem:[%s6 + $0x28] sm:$0xff]
      %v516 = vld [vmem:[%s6 + $0x30] sm:$0xff]
      %v517 = vld [vmem:[%s6 + $0x38] sm:$0xff]
      %v518 = vld [vmem:[%s6 + $0x40] sm:$0xff]
      %v519 = vld [vmem:[%s6 + $0x48] sm:$0xff]
      %v520 = vld [vmem:[%s6 + $0x50] sm:$0xff]
      %v521 = vld [vmem:[%s6 + $0x58] sm:$0xff]
      %523 = vset.pattern.permute.xlu0 0
      %524 = vperm.xlu0 %523, %v510
      %v525 = vpop.permute.xlu0 %524
      %528 = vset.pattern.permute.xlu0 0
      %529 = vperm.xlu0 %528, %v511
      %v530 = vpop.permute.xlu0 %529
      %533 = vset.pattern.permute.xlu0 0
      %534 = vperm.xlu0 %533, %v512
      %v535 = vpop.permute.xlu0 %534
      %538 = vset.pattern.permute.xlu0 0
      %539 = vperm.xlu0 %538, %v513
      %v540 = vpop.permute.xlu0 %539
      %543 = vset.pattern.permute.xlu0 0
      %544 = vperm.xlu0 %543, %v514
      %v545 = vpop.permute.xlu0 %544
      %548 = vset.pattern.permute.xlu0 0
      %549 = vperm.xlu0 %548, %v515
      %v550 = vpop.permute.xlu0 %549
      %553 = vset.pattern.permute.xlu0 0
      %554 = vperm.xlu0 %553, %v516
      %v555 = vpop.permute.xlu0 %554
      %558 = vset.pattern.permute.xlu0 0
      %559 = vperm.xlu0 %558, %v517
      %v560 = vpop.permute.xlu0 %559
      %563 = vset.pattern.permute.xlu0 0
      %564 = vperm.xlu0 %563, %v518
      %v565 = vpop.permute.xlu0 %564
      %568 = vset.pattern.permute.xlu0 0
      %569 = vperm.xlu0 %568, %v519
      %v570 = vpop.permute.xlu0 %569
      %573 = vset.pattern.permute.xlu0 0
      %574 = vperm.xlu0 %573, %v520
      %v575 = vpop.permute.xlu0 %574
      %578 = vset.pattern.permute.xlu0 0
      %579 = vperm.xlu0 %578, %v521
      %v580 = vpop.permute.xlu0 %579
      %v594 = vunpack.c.l.b16 %v496
      %v595 = vunpack.c.l.b16 %v497
      %v596 = vunpack.c.l.b16 %v498
      %v597 = vunpack.c.l.b16 %v499
      %v598 = vunpack.c.l.b16 %v500
      %v599 = vunpack.c.l.b16 %v501
      %v600 = vunpack.c.l.b16 %v502
      %v601 = vunpack.c.l.b16 %v503
      %v602 = vunpack.c.l.b16 %v504
      %v603 = vunpack.c.l.b16 %v505
      %v604 = vunpack.c.l.b16 %v506
      %v605 = vunpack.c.l.b16 %v507
      %v606 = vpack.c.b16 %v595, %v594
      %v607 = vpack.c.b16 %v597, %v596
      %v608 = vpack.c.b16 %v599, %v598
      %v609 = vpack.c.b16 %v601, %v600
      %v610 = vpack.c.b16 %v603, %v602
      %v611 = vpack.c.b16 %v605, %v604
      %vm612 = vcmask 261120
      %v614 = vsel %vm612, %v606, 0
      %v617 = vsel %vm612, %v607, 0
      %v620 = vsel %vm612, %v608, 0
      %v623 = vsel %vm612, %v609, 0
      %v626 = vsel %vm612, %v610, 0
      %v629 = vsel %vm612, %v611, 0
      %631 = vmatprep.subr.bf16.mxu0 0
      %632 = vmatpush1.bf16.msra.mxu0 %v508
      %633 = vmatprep.subr.bf16.mxu0 0
      %634 = vmatpush1.bf16.msra.mxu0 %v509
      %635 = vmatprep.subr.bf16.mxu0 0
      %636 = vmatpush1.bf16.msra.mxu0 0
      %637 = vmatprep.subr.bf16.mxu0 0
      %638 = vmatpush1.bf16.msra.mxu0 0
      %639 = vmatprep.subr.bf16.mxu0 0
      %640 = vmatpush1.bf16.msra.mxu0 0
      %641 = vmatprep.subr.bf16.mxu0 0
      %642 = vmatpush1.bf16.msra.mxu0 0
      %643 = vmatprep.subr.bf16.mxu0 0
      %644 = vmatpush1.bf16.msra.mxu0 0
      %645 = vmatprep.subr.bf16.mxu0 0
      %646 = vmatpush1.bf16.msra.mxu0 0
      %647 = vmatprep.subr.bf16.mxu0 0
      %648 = vmatpush1.bf16.msra.mxu0 0
      %649 = vmatprep.subr.bf16.mxu0 0
      %650 = vmatpush1.bf16.msra.mxu0 0
      %651 = vmatprep.subr.bf16.mxu0 0
      %652 = vmatpush1.bf16.msra.mxu0 0
      %653 = vmatprep.subr.bf16.mxu0 0
      %654 = vmatpush1.bf16.msra.mxu0 0
      %655 = vmatprep.subr.bf16.mxu0 0
      %656 = vmatpush1.bf16.msra.mxu0 0
      %657 = vmatprep.subr.bf16.mxu0 0
      %658 = vmatpush1.bf16.msra.mxu0 0
      %659 = vmatprep.subr.bf16.mxu0 0
      %660 = vmatpush1.bf16.msra.mxu0 0
      %661 = vmatprep.subr.bf16.mxu0 0
      %662 = vmatpush1.bf16.msra.mxu0 0
      %663 = vmatprep.mubr.bf16.mxu0 0
      %664 = vmatmul.mubr.bf16.gmra.mrb[0].mxu0 %v614
      %v665 = vpop.f32.mrb[0].mxu0
      %v666 = vadd.f32 %v525, %v665
      %v667 = vpop.f32.mrb[0].mxu0
      %v668 = vpop.f32.mrb[0].mxu0
      %v669 = vadd.f32 %v530, %v668
      %v670 = vpop.f32.mrb[0].mxu0
      %671 = vmatprep.mubr.bf16.mxu0 0
      %672 = vmatmul.mubr.bf16.gmra.mrb[0].mxu0 %v617
      %v673 = vpop.f32.mrb[0].mxu0
      %v674 = vadd.f32 %v535, %v673
      %v675 = vpop.f32.mrb[0].mxu0
      %v676 = vpop.f32.mrb[0].mxu0
      %v677 = vadd.f32 %v540, %v676
      %v678 = vpop.f32.mrb[0].mxu0
      %679 = vmatprep.mubr.bf16.mxu0 0
      %680 = vmatmul.mubr.bf16.gmra.mrb[0].mxu0 %v620
      %v681 = vpop.f32.mrb[0].mxu0
      %v682 = vadd.f32 %v545, %v681
      %v683 = vpop.f32.mrb[0].mxu0
      %v684 = vpop.f32.mrb[0].mxu0
      %v685 = vadd.f32 %v550, %v684
      %v686 = vpop.f32.mrb[0].mxu0
      %687 = vmatprep.mubr.bf16.mxu0 0
      %688 = vmatmul.mubr.bf16.gmra.mrb[0].mxu0 %v623
      %v689 = vpop.f32.mrb[0].mxu0
      %v690 = vadd.f32 %v555, %v689
      %v691 = vpop.f32.mrb[0].mxu0
      %v692 = vpop.f32.mrb[0].mxu0
      %v693 = vadd.f32 %v560, %v692
      %v694 = vpop.f32.mrb[0].mxu0
      %695 = vmatprep.mubr.bf16.mxu0 0
      %696 = vmatmul.mubr.bf16.gmra.mrb[0].mxu0 %v626
      %v697 = vpop.f32.mrb[0].mxu0
      %v698 = vadd.f32 %v565, %v697
      %v699 = vpop.f32.mrb[0].mxu0
      %v700 = vpop.f32.mrb[0].mxu0
      %v701 = vadd.f32 %v570, %v700
      %v702 = vpop.f32.mrb[0].mxu0
      %703 = vmatprep.mubr.bf16.mxu0 0
      %704 = vmatmul.mubr.bf16.gmra.mrb[0].mxu0 %v629
      %v705 = vpop.f32.mrb[0].mxu0
      %v706 = vadd.f32 %v575, %v705
      %v707 = vpop.f32.mrb[0].mxu0
      %v708 = vpop.f32.mrb[0].mxu0
      %v709 = vadd.f32 %v580, %v708
      %v710 = vpop.f32.mrb[0].mxu0
      %711 = vdwg.mxu0
      %v712 = vld [vmem:[%s377] sm:$0xff]
      %713 = vxpose.xlu0.b32.start [1/16] %v666, 128
      %714 = vxpose.xlu0.b32.cont [2/16] 0.0, 128
      %715 = vxpose.xlu0.b32.cont [3/16] 0.0, 128
      %716 = vxpose.xlu0.b32.cont [4/16] 0.0, 128
      %717 = vxpose.xlu0.b32.cont [5/16] 0.0, 128
      %718 = vxpose.xlu0.b32.cont [6/16] 0.0, 128
      %719 = vxpose.xlu0.b32.cont [7/16] 0.0, 128
      %720 = vxpose.xlu0.b32.cont [8/16] 0.0, 128
      %721 = vxpose.xlu0.b32.cont [9/16] 0.0, 128
      %722 = vxpose.xlu0.b32.cont [10/16] 0.0, 128
      %723 = vxpose.xlu0.b32.cont [11/16] 0.0, 128
      %724 = vxpose.xlu0.b32.cont [12/16] 0.0, 128
      %725 = vxpose.xlu0.b32.cont [13/16] 0.0, 128
      %726 = vxpose.xlu0.b32.cont [14/16] 0.0, 128
      %727 = vxpose.xlu0.b32.cont [15/16] 0.0, 128
      %728 = vxpose.xlu0.b32.end [16/16] 0.0, 128
      %v729 = vpop.trf.xlu0
      %v730 = vpop.trf.xlu0
      %v731 = vpop.trf.xlu0
      %v732 = vpop.trf.xlu0
      %v733 = vpop.trf.xlu0
      %v734 = vpop.trf.xlu0
      %v735 = vpop.trf.xlu0
      %v736 = vpop.trf.xlu0
      %v737 = vpop.trf.xlu0
      %v738 = vpop.trf.xlu0
      %v739 = vpop.trf.xlu0
      %v740 = vpop.trf.xlu0
      %v741 = vpop.trf.xlu0
      %v742 = vpop.trf.xlu0
      %v743 = vpop.trf.xlu0
      %v744 = vpop.trf.xlu0
      %745 = vxpose.xlu0.b32.start [1/16] %v669, 128
      %746 = vxpose.xlu0.b32.cont [2/16] 0.0, 128
      %747 = vxpose.xlu0.b32.cont [3/16] 0.0, 128
      %748 = vxpose.xlu0.b32.cont [4/16] 0.0, 128
      %749 = vxpose.xlu0.b32.cont [5/16] 0.0, 128
      %750 = vxpose.xlu0.b32.cont [6/16] 0.0, 128
      %751 = vxpose.xlu0.b32.cont [7/16] 0.0, 128
      %752 = vxpose.xlu0.b32.cont [8/16] 0.0, 128
      %753 = vxpose.xlu0.b32.cont [9/16] 0.0, 128
      %754 = vxpose.xlu0.b32.cont [10/16] 0.0, 128
      %755 = vxpose.xlu0.b32.cont [11/16] 0.0, 128
      %756 = vxpose.xlu0.b32.cont [12/16] 0.0, 128
      %757 = vxpose.xlu0.b32.cont [13/16] 0.0, 128
      %758 = vxpose.xlu0.b32.cont [14/16] 0.0, 128
      %759 = vxpose.xlu0.b32.cont [15/16] 0.0, 128
      %760 = vxpose.xlu0.b32.end [16/16] 0.0, 128
      %v761 = vpop.trf.xlu0
      %v762 = vpop.trf.xlu0
      %v763 = vpop.trf.xlu0
      %v764 = vpop.trf.xlu0
      %v765 = vpop.trf.xlu0
      %v766 = vpop.trf.xlu0
      %v767 = vpop.trf.xlu0
      %v768 = vpop.trf.xlu0
      %v769 = vpop.trf.xlu0
      %v770 = vpop.trf.xlu0
      %v771 = vpop.trf.xlu0
      %v772 = vpop.trf.xlu0
      %v773 = vpop.trf.xlu0
      %v774 = vpop.trf.xlu0
      %v775 = vpop.trf.xlu0
      %v776 = vpop.trf.xlu0
      %777 = vxpose.xlu0.b32.start [1/16] %v674, 128
      %778 = vxpose.xlu0.b32.cont [2/16] 0.0, 128
      %779 = vxpose.xlu0.b32.cont [3/16] 0.0, 128
      %780 = vxpose.xlu0.b32.cont [4/16] 0.0, 128
      %781 = vxpose.xlu0.b32.cont [5/16] 0.0, 128
      %782 = vxpose.xlu0.b32.cont [6/16] 0.0, 128
      %783 = vxpose.xlu0.b32.cont [7/16] 0.0, 128
      %784 = vxpose.xlu0.b32.cont [8/16] 0.0, 128
      %785 = vxpose.xlu0.b32.cont [9/16] 0.0, 128
      %786 = vxpose.xlu0.b32.cont [10/16] 0.0, 128
      %787 = vxpose.xlu0.b32.cont [11/16] 0.0, 128
      %788 = vxpose.xlu0.b32.cont [12/16] 0.0, 128
      %789 = vxpose.xlu0.b32.cont [13/16] 0.0, 128
      %790 = vxpose.xlu0.b32.cont [14/16] 0.0, 128
      %791 = vxpose.xlu0.b32.cont [15/16] 0.0, 128
      %792 = vxpose.xlu0.b32.end [16/16] 0.0, 128
      %v793 = vpop.trf.xlu0
      %v794 = vpop.trf.xlu0
      %v795 = vpop.trf.xlu0
      %v796 = vpop.trf.xlu0
      %v797 = vpop.trf.xlu0
      %v798 = vpop.trf.xlu0
      %v799 = vpop.trf.xlu0
      %v800 = vpop.trf.xlu0
      %v801 = vpop.trf.xlu0
      %v802 = vpop.trf.xlu0
      %v803 = vpop.trf.xlu0
      %v804 = vpop.trf.xlu0
      %v805 = vpop.trf.xlu0
      %v806 = vpop.trf.xlu0
      %v807 = vpop.trf.xlu0
      %v808 = vpop.trf.xlu0
      %809 = vxpose.xlu0.b32.start [1/16] %v677, 128
      %810 = vxpose.xlu0.b32.cont [2/16] 0.0, 128
      %811 = vxpose.xlu0.b32.cont [3/16] 0.0, 128
      %812 = vxpose.xlu0.b32.cont [4/16] 0.0, 128
      %813 = vxpose.xlu0.b32.cont [5/16] 0.0, 128
      %814 = vxpose.xlu0.b32.cont [6/16] 0.0, 128
      %815 = vxpose.xlu0.b32.cont [7/16] 0.0, 128
      %816 = vxpose.xlu0.b32.cont [8/16] 0.0, 128
      %817 = vxpose.xlu0.b32.cont [9/16] 0.0, 128
      %818 = vxpose.xlu0.b32.cont [10/16] 0.0, 128
      %819 = vxpose.xlu0.b32.cont [11/16] 0.0, 128
      %820 = vxpose.xlu0.b32.cont [12/16] 0.0, 128
      %821 = vxpose.xlu0.b32.cont [13/16] 0.0, 128
      %822 = vxpose.xlu0.b32.cont [14/16] 0.0, 128
      %823 = vxpose.xlu0.b32.cont [15/16] 0.0, 128
      %824 = vxpose.xlu0.b32.end [16/16] 0.0, 128
      %v825 = vpop.trf.xlu0
      %v826 = vpop.trf.xlu0
      %v827 = vpop.trf.xlu0
      %v828 = vpop.trf.xlu0
      %v829 = vpop.trf.xlu0
      %v830 = vpop.trf.xlu0
      %v831 = vpop.trf.xlu0
      %v832 = vpop.trf.xlu0
      %v833 = vpop.trf.xlu0
      %v834 = vpop.trf.xlu0
      %v835 = vpop.trf.xlu0
      %v836 = vpop.trf.xlu0
      %v837 = vpop.trf.xlu0
      %v838 = vpop.trf.xlu0
      %v839 = vpop.trf.xlu0
      %v840 = vpop.trf.xlu0
      %v841 = vpack.c.bf16 %v729, %v729
      %v842 = vpack.c.bf16 %v761, %v761
      %v843 = vpack.c.bf16 %v793, %v793
      %v844 = vpack.c.bf16 %v825, %v825
      %v845 = vpack.c.bf16 %v682, %v682
      %v846 = vpack.c.bf16 %v685, %v685
      %v847 = vpack.c.bf16 %v690, %v690
      %v848 = vpack.c.bf16 %v693, %v693
      %v850 = vsel %vm404, %v841, 0
      %vm852 = vcmask 1043456
      %v854 = vsel %vm852, %v845, 0
      %856 = vmatprep.subr.bf16.mxu0 0
      %857 = vmatpush1.bf16.msra.mxu0 %v854
      %858 = vmatprep.subr.bf16.mxu0 0
      %859 = vmatpush1.bf16.msra.mxu0 0
      %860 = vmatprep.subr.bf16.mxu0 0
      %861 = vmatpush1.bf16.msra.mxu0 0
      %862 = vmatprep.subr.bf16.mxu0 0
      %863 = vmatpush1.bf16.msra.mxu0 0
      %864 = vmatprep.subr.bf16.mxu0 0
      %865 = vmatpush1.bf16.msra.mxu0 0
      %866 = vmatprep.subr.bf16.mxu0 0
      %867 = vmatpush1.bf16.msra.mxu0 0
      %868 = vmatprep.subr.bf16.mxu0 0
      %869 = vmatpush1.bf16.msra.mxu0 0
      %870 = vmatprep.subr.bf16.mxu0 0
      %871 = vmatpush1.bf16.msra.mxu0 0
      %872 = vmatprep.subr.bf16.mxu0 0
      %873 = vmatpush1.bf16.msra.mxu0 0
      %874 = vmatprep.subr.bf16.mxu0 0
      %875 = vmatpush1.bf16.msra.mxu0 0
      %876 = vmatprep.subr.bf16.mxu0 0
      %877 = vmatpush1.bf16.msra.mxu0 0
      %878 = vmatprep.subr.bf16.mxu0 0
      %879 = vmatpush1.bf16.msra.mxu0 0
      %880 = vmatprep.subr.bf16.mxu0 0
      %881 = vmatpush1.bf16.msra.mxu0 0
      %882 = vmatprep.subr.bf16.mxu0 0
      %883 = vmatpush1.bf16.msra.mxu0 0
      %884 = vmatprep.subr.bf16.mxu0 0
      %885 = vmatpush1.bf16.msra.mxu0 0
      %886 = vmatprep.subr.bf16.mxu0 0
      %887 = vmatpush1.bf16.msra.mxu0 0
      %888 = vmatprep.mubr.bf16.mxu0 0
      %889 = vmatmul.mubr.bf16.gmra.mrb[0].mxu0 %v850
      %v890 = vpop.f32.mrb[0].mxu0
      %v891 = vadd.f32 %v712, %v890
      %v892 = vpop.f32.mrb[0].mxu0
      %v893 = vpop.f32.mrb[0].mxu0
      %v894 = vpop.f32.mrb[0].mxu0
      %895 = vdwg.mxu0
      %v897 = vsel %vm404, %v842, 0
      %v900 = vsel %vm852, %v846, 0
      %902 = vmatprep.subr.bf16.mxu0 0
      %903 = vmatpush1.bf16.msra.mxu0 %v900
      %904 = vmatprep.subr.bf16.mxu0 0
      %905 = vmatpush1.bf16.msra.mxu0 0
      %906 = vmatprep.subr.bf16.mxu0 0
      %907 = vmatpush1.bf16.msra.mxu0 0
      %908 = vmatprep.subr.bf16.mxu0 0
      %909 = vmatpush1.bf16.msra.mxu0 0
      %910 = vmatprep.subr.bf16.mxu0 0
      %911 = vmatpush1.bf16.msra.mxu0 0
      %912 = vmatprep.subr.bf16.mxu0 0
      %913 = vmatpush1.bf16.msra.mxu0 0
      %914 = vmatprep.subr.bf16.mxu0 0
      %915 = vmatpush1.bf16.msra.mxu0 0
      %916 = vmatprep.subr.bf16.mxu0 0
      %917 = vmatpush1.bf16.msra.mxu0 0
      %918 = vmatprep.subr.bf16.mxu0 0
      %919 = vmatpush1.bf16.msra.mxu0 0
      %920 = vmatprep.subr.bf16.mxu0 0
      %921 = vmatpush1.bf16.msra.mxu0 0
      %922 = vmatprep.subr.bf16.mxu0 0
      %923 = vmatpush1.bf16.msra.mxu0 0
      %924 = vmatprep.subr.bf16.mxu0 0
      %925 = vmatpush1.bf16.msra.mxu0 0
      %926 = vmatprep.subr.bf16.mxu0 0
      %927 = vmatpush1.bf16.msra.mxu0 0
      %928 = vmatprep.subr.bf16.mxu0 0
      %929 = vmatpush1.bf16.msra.mxu0 0
      %930 = vmatprep.subr.bf16.mxu0 0
      %931 = vmatpush1.bf16.msra.mxu0 0
      %932 = vmatprep.subr.bf16.mxu0 0
      %933 = vmatpush1.bf16.msra.mxu0 0
      %934 = vmatprep.mubr.bf16.mxu0 0
      %935 = vmatmul.mubr.bf16.gmra.mrb[0].mxu0 %v897
      %v936 = vpop.f32.mrb[0].mxu0
      %v937 = vadd.f32 %v712, %v936
      %v938 = vpop.f32.mrb[0].mxu0
      %v939 = vpop.f32.mrb[0].mxu0
      %v940 = vpop.f32.mrb[0].mxu0
      %941 = vdwg.mxu0
      %v943 = vsel %vm404, %v843, 0
      %v946 = vsel %vm852, %v847, 0
      %948 = vmatprep.subr.bf16.mxu0 0
      %949 = vmatpush1.bf16.msra.mxu0 %v946
      %950 = vmatprep.subr.bf16.mxu0 0
      %951 = vmatpush1.bf16.msra.mxu0 0
      %952 = vmatprep.subr.bf16.mxu0 0
      %953 = vmatpush1.bf16.msra.mxu0 0
      %954 = vmatprep.subr.bf16.mxu0 0
      %955 = vmatpush1.bf16.msra.mxu0 0
      %956 = vmatprep.subr.bf16.mxu0 0
      %957 = vmatpush1.bf16.msra.mxu0 0
      %958 = vmatprep.subr.bf16.mxu0 0
      %959 = vmatpush1.bf16.msra.mxu0 0
      %960 = vmatprep.subr.bf16.mxu0 0
      %961 = vmatpush1.bf16.msra.mxu0 0
      %962 = vmatprep.subr.bf16.mxu0 0
      %963 = vmatpush1.bf16.msra.mxu0 0
      %964 = vmatprep.subr.bf16.mxu0 0
      %965 = vmatpush1.bf16.msra.mxu0 0
      %966 = vmatprep.subr.bf16.mxu0 0
      %967 = vmatpush1.bf16.msra.mxu0 0
      %968 = vmatprep.subr.bf16.mxu0 0
      %969 = vmatpush1.bf16.msra.mxu0 0
      %970 = vmatprep.subr.bf16.mxu0 0
      %971 = vmatpush1.bf16.msra.mxu0 0
      %972 = vmatprep.subr.bf16.mxu0 0
      %973 = vmatpush1.bf16.msra.mxu0 0
      %974 = vmatprep.subr.bf16.mxu0 0
      %975 = vmatpush1.bf16.msra.mxu0 0
      %976 = vmatprep.subr.bf16.mxu0 0
      %977 = vmatpush1.bf16.msra.mxu0 0
      %978 = vmatprep.subr.bf16.mxu0 0
      %979 = vmatpush1.bf16.msra.mxu0 0
      %980 = vmatprep.mubr.bf16.mxu0 0
      %981 = vmatmul.mubr.bf16.gmra.mrb[0].mxu0 %v943
      %v982 = vpop.f32.mrb[0].mxu0
      %v983 = vadd.f32 %v712, %v982
      %v984 = vpop.f32.mrb[0].mxu0
      %v985 = vpop.f32.mrb[0].mxu0
      %v986 = vpop.f32.mrb[0].mxu0
      %987 = vdwg.mxu0
      %v989 = vsel %vm404, %v844, 0
      %v992 = vsel %vm852, %v848, 0
      %994 = vmatprep.subr.bf16.mxu0 0
      %995 = vmatpush1.bf16.msra.mxu0 %v992
      %996 = vmatprep.subr.bf16.mxu0 0
      %997 = vmatpush1.bf16.msra.mxu0 0
      %998 = vmatprep.subr.bf16.mxu0 0
      %999 = vmatpush1.bf16.msra.mxu0 0
      %1000 = vmatprep.subr.bf16.mxu0 0
      %1001 = vmatpush1.bf16.msra.mxu0 0
      %1002 = vmatprep.subr.bf16.mxu0 0
      %1003 = vmatpush1.bf16.msra.mxu0 0
      %1004 = vmatprep.subr.bf16.mxu0 0
      %1005 = vmatpush1.bf16.msra.mxu0 0
      %1006 = vmatprep.subr.bf16.mxu0 0
      %1007 = vmatpush1.bf16.msra.mxu0 0
      %1008 = vmatprep.subr.bf16.mxu0 0
      %1009 = vmatpush1.bf16.msra.mxu0 0
      %1010 = vmatprep.subr.bf16.mxu0 0
      %1011 = vmatpush1.bf16.msra.mxu0 0
      %1012 = vmatprep.subr.bf16.mxu0 0
      %1013 = vmatpush1.bf16.msra.mxu0 0
      %1014 = vmatprep.subr.bf16.mxu0 0
      %1015 = vmatpush1.bf16.msra.mxu0 0
      %1016 = vmatprep.subr.bf16.mxu0 0
      %1017 = vmatpush1.bf16.msra.mxu0 0
      %1018 = vmatprep.subr.bf16.mxu0 0
      %1019 = vmatpush1.bf16.msra.mxu0 0
      %1020 = vmatprep.subr.bf16.mxu0 0
      %1021 = vmatpush1.bf16.msra.mxu0 0
      %1022 = vmatprep.subr.bf16.mxu0 0
      %1023 = vmatpush1.bf16.msra.mxu0 0
      %1024 = vmatprep.subr.bf16.mxu0 0
      %1025 = vmatpush1.bf16.msra.mxu0 0
      %1026 = vmatprep.mubr.bf16.mxu0 0
      %1027 = vmatmul.mubr.bf16.gmra.mrb[0].mxu0 %v989
      %v1028 = vpop.f32.mrb[0].mxu0
      %v1029 = vadd.f32 %v712, %v1028
      %v1030 = vpop.f32.mrb[0].mxu0
      %v1031 = vpop.f32.mrb[0].mxu0
      %v1032 = vpop.f32.mrb[0].mxu0
      %1033 = vdwg.mxu0
      %v1034 = vsel %vm404, %v891, -inf
      %1035 = vmax.xlane.f32.xlu0 %v1034
      %v1036 = vpop.xlane.xlu0 %1035
      %v1037 = vsel %vm404, %v937, -inf
      %1038 = vmax.xlane.f32.xlu0 %v1037
      %v1039 = vpop.xlane.xlu0 %1038
      %v1040 = vsel %vm404, %v983, -inf
      %1041 = vmax.xlane.f32.xlu0 %v1040
      %v1042 = vpop.xlane.xlu0 %1041
      %v1043 = vsel %vm404, %v1029, -inf
      %1044 = vmax.xlane.f32.xlu0 %v1043
      %v1045 = vpop.xlane.xlu0 %1044
      %v1046 = vsub.f32 %v891, %v1036
      %v1047 = vsub.f32 %v937, %v1039
      %v1048 = vsub.f32 %v983, %v1042
      %v1049 = vsub.f32 %v1029, %v1045
      %v1050 = vmul.f32 %v1046, 1.442695
      %v1051 = vpow.pop %v1050
      %v1052 = vmul.f32 %v1047, 1.442695
      %v1053 = vpow.pop %v1052
      %v1054 = vmul.f32 %v1048, 1.442695
      %v1055 = vpow.pop %v1054
      %v1056 = vmul.f32 %v1049, 1.442695
      %v1057 = vpow.pop %v1056
      %v1058 = vsel %vm404, %v1051, 0.0
      %1059 = vadd.xlane.f32.xlu0 %v1058
      %v1060 = vpop.xlane.xlu0 %1059
      %v1061 = vsel %vm404, %v1053, 0.0
      %1062 = vadd.xlane.f32.xlu0 %v1061
      %v1063 = vpop.xlane.xlu0 %1062
      %v1064 = vsel %vm404, %v1055, 0.0
      %1065 = vadd.xlane.f32.xlu0 %v1064
      %v1066 = vpop.xlane.xlu0 %1065
      %v1067 = vsel %vm404, %v1057, 0.0
      %1068 = vadd.xlane.f32.xlu0 %v1067
      %v1069 = vpop.xlane.xlu0 %1068
      %v1070 = vrcp.pop %v1060
      %v1071 = vrcp.pop %v1063
      %v1072 = vrcp.pop %v1066
      %v1073 = vrcp.pop %v1069
      %v1074 = vmul.f32 %v1051, %v1070
      %v1075 = vmul.f32 %v1053, %v1071
      %v1076 = vmul.f32 %v1055, %v1072
      %v1077 = vmul.f32 %v1057, %v1073
      %v1078 = vpack.c.bf16 %v698, %v698
      %v1079 = vpack.c.bf16 %v701, %v701
      %v1080 = vpack.c.bf16 %v706, %v706
      %v1081 = vpack.c.bf16 %v709, %v709
      %v1082 = vpack.c.bf16 %v1074, %v1074
      %v1083 = vpack.c.bf16 %v1075, %v1075
      %v1084 = vpack.c.bf16 %v1076, %v1076
      %v1085 = vpack.c.bf16 %v1077, %v1077
      %v1087 = vsel %vm404, %v1078, 0
      %v1090 = vsel %vm404, %v1082, 0
      %1092 = vmatprep.subr.bf16.mxu0 0
      %1093 = vmatpush1.bf16.xpose.msra.mxu0 %v1090
      %1094 = vmatprep.subr.bf16.mxu0 0
      %1095 = vmatpush1.bf16.xpose.msra.mxu0 0
      %1096 = vmatprep.subr.bf16.mxu0 0
      %1097 = vmatpush1.bf16.xpose.msra.mxu0 0
      %1098 = vmatprep.subr.bf16.mxu0 0
      %1099 = vmatpush1.bf16.xpose.msra.mxu0 0
      %1100 = vmatprep.subr.bf16.mxu0 0
      %1101 = vmatpush1.bf16.xpose.msra.mxu0 0
      %1102 = vmatprep.subr.bf16.mxu0 0
      %1103 = vmatpush1.bf16.xpose.msra.mxu0 0
      %1104 = vmatprep.subr.bf16.mxu0 0
      %1105 = vmatpush1.bf16.xpose.msra.mxu0 0
      %1106 = vmatprep.subr.bf16.mxu0 0
      %1107 = vmatpush1.bf16.xpose.msra.mxu0 0
      %1108 = vmatprep.subr.bf16.mxu0 0
      %1109 = vmatpush1.bf16.xpose.msra.mxu0 0
      %1110 = vmatprep.subr.bf16.mxu0 0
      %1111 = vmatpush1.bf16.xpose.msra.mxu0 0
      %1112 = vmatprep.subr.bf16.mxu0 0
      %1113 = vmatpush1.bf16.xpose.msra.mxu0 0
      %1114 = vmatprep.subr.bf16.mxu0 0
      %1115 = vmatpush1.bf16.xpose.msra.mxu0 0
      %1116 = vmatprep.subr.bf16.mxu0 0
      %1117 = vmatpush1.bf16.xpose.msra.mxu0 0
      %1118 = vmatprep.subr.bf16.mxu0 0
      %1119 = vmatpush1.bf16.xpose.msra.mxu0 0
      %1120 = vmatprep.subr.bf16.mxu0 0
      %1121 = vmatpush1.bf16.xpose.msra.mxu0 0
      %1122 = vmatprep.subr.bf16.mxu0 0
      %1123 = vmatpush1.bf16.xpose.msra.mxu0 0
      %1124 = vmatprep.mubr.bf16.mxu0 0
      %1125 = vmatmul.mubr.bf16.gmra.mrb[0].mxu0 %v1087
      %v1126 = vpop.f32.mrb[0].mxu0
      %v1127 = vadd.f32 0.0, %v1126
      %v1128 = vpop.f32.mrb[0].mxu0
      %v1129 = vpop.f32.mrb[0].mxu0
      %v1130 = vpop.f32.mrb[0].mxu0
      %1131 = vdwg.mxu0
      %v1133 = vsel %vm404, %v1079, 0
      %v1136 = vsel %vm404, %v1083, 0
      %1138 = vmatprep.subr.bf16.mxu0 0
      %1139 = vmatpush1.bf16.xpose.msra.mxu0 %v1136
      %1140 = vmatprep.subr.bf16.mxu0 0
      %1141 = vmatpush1.bf16.xpose.msra.mxu0 0
      %1142 = vmatprep.subr.bf16.mxu0 0
      %1143 = vmatpush1.bf16.xpose.msra.mxu0 0
      %1144 = vmatprep.subr.bf16.mxu0 0
      %1145 = vmatpush1.bf16.xpose.msra.mxu0 0
      %1146 = vmatprep.subr.bf16.mxu0 0
      %1147 = vmatpush1.bf16.xpose.msra.mxu0 0
      %1148 = vmatprep.subr.bf16.mxu0 0
      %1149 = vmatpush1.bf16.xpose.msra.mxu0 0
      %1150 = vmatprep.subr.bf16.mxu0 0
      %1151 = vmatpush1.bf16.xpose.msra.mxu0 0
      %1152 = vmatprep.subr.bf16.mxu0 0
      %1153 = vmatpush1.bf16.xpose.msra.mxu0 0
      %1154 = vmatprep.subr.bf16.mxu0 0
      %1155 = vmatpush1.bf16.xpose.msra.mxu0 0
      %1156 = vmatprep.subr.bf16.mxu0 0
      %1157 = vmatpush1.bf16.xpose.msra.mxu0 0
      %1158 = vmatprep.subr.bf16.mxu0 0
      %1159 = vmatpush1.bf16.xpose.msra.mxu0 0
      %1160 = vmatprep.subr.bf16.mxu0 0
      %1161 = vmatpush1.bf16.xpose.msra.mxu0 0
      %1162 = vmatprep.subr.bf16.mxu0 0
      %1163 = vmatpush1.bf16.xpose.msra.mxu0 0
      %1164 = vmatprep.subr.bf16.mxu0 0
      %1165 = vmatpush1.bf16.xpose.msra.mxu0 0
      %1166 = vmatprep.subr.bf16.mxu0 0
      %1167 = vmatpush1.bf16.xpose.msra.mxu0 0
      %1168 = vmatprep.subr.bf16.mxu0 0
      %1169 = vmatpush1.bf16.xpose.msra.mxu0 0
      %1170 = vmatprep.mubr.bf16.mxu0 0
      %1171 = vmatmul.mubr.bf16.gmra.mrb[0].mxu0 %v1133
      %v1172 = vpop.f32.mrb[0].mxu0
      %v1173 = vadd.f32 0.0, %v1172
      %v1174 = vpop.f32.mrb[0].mxu0
      %v1175 = vpop.f32.mrb[0].mxu0
      %v1176 = vpop.f32.mrb[0].mxu0
      %1177 = vdwg.mxu0
      %v1179 = vsel %vm404, %v1080, 0
      %v1182 = vsel %vm404, %v1084, 0
      %1184 = vmatprep.subr.bf16.mxu0 0
      %1185 = vmatpush1.bf16.xpose.msra.mxu0 %v1182
      %1186 = vmatprep.subr.bf16.mxu0 0
      %1187 = vmatpush1.bf16.xpose.msra.mxu0 0
      %1188 = vmatprep.subr.bf16.mxu0 0
      %1189 = vmatpush1.bf16.xpose.msra.mxu0 0
      %1190 = vmatprep.subr.bf16.mxu0 0
      %1191 = vmatpush1.bf16.xpose.msra.mxu0 0
      %1192 = vmatprep.subr.bf16.mxu0 0
      %1193 = vmatpush1.bf16.xpose.msra.mxu0 0
      %1194 = vmatprep.subr.bf16.mxu0 0
      %1195 = vmatpush1.bf16.xpose.msra.mxu0 0
      %1196 = vmatprep.subr.bf16.mxu0 0
      %1197 = vmatpush1.bf16.xpose.msra.mxu0 0
      %1198 = vmatprep.subr.bf16.mxu0 0
      %1199 = vmatpush1.bf16.xpose.msra.mxu0 0
      %1200 = vmatprep.subr.bf16.mxu0 0
      %1201 = vmatpush1.bf16.xpose.msra.mxu0 0
      %1202 = vmatprep.subr.bf16.mxu0 0
      %1203 = vmatpush1.bf16.xpose.msra.mxu0 0
      %1204 = vmatprep.subr.bf16.mxu0 0
      %1205 = vmatpush1.bf16.xpose.msra.mxu0 0
      %1206 = vmatprep.subr.bf16.mxu0 0
      %1207 = vmatpush1.bf16.xpose.msra.mxu0 0
      %1208 = vmatprep.subr.bf16.mxu0 0
      %1209 = vmatpush1.bf16.xpose.msra.mxu0 0
      %1210 = vmatprep.subr.bf16.mxu0 0
      %1211 = vmatpush1.bf16.xpose.msra.mxu0 0
      %1212 = vmatprep.subr.bf16.mxu0 0
      %1213 = vmatpush1.bf16.xpose.msra.mxu0 0
      %1214 = vmatprep.subr.bf16.mxu0 0
      %1215 = vmatpush1.bf16.xpose.msra.mxu0 0
      %1216 = vmatprep.mubr.bf16.mxu0 0
      %1217 = vmatmul.mubr.bf16.gmra.mrb[0].mxu0 %v1179
      %v1218 = vpop.f32.mrb[0].mxu0
      %v1219 = vadd.f32 0.0, %v1218
      %v1220 = vpop.f32.mrb[0].mxu0
      %v1221 = vpop.f32.mrb[0].mxu0
      %v1222 = vpop.f32.mrb[0].mxu0
      %1223 = vdwg.mxu0
      %v1225 = vsel %vm404, %v1081, 0
      %v1228 = vsel %vm404, %v1085, 0
      %1230 = vmatprep.subr.bf16.mxu0 0
      %1231 = vmatpush1.bf16.xpose.msra.mxu0 %v1228
      %1232 = vmatprep.subr.bf16.mxu0 0
      %1233 = vmatpush1.bf16.xpose.msra.mxu0 0
      %1234 = vmatprep.subr.bf16.mxu0 0
      %1235 = vmatpush1.bf16.xpose.msra.mxu0 0
      %1236 = vmatprep.subr.bf16.mxu0 0
      %1237 = vmatpush1.bf16.xpose.msra.mxu0 0
      %1238 = vmatprep.subr.bf16.mxu0 0
      %1239 = vmatpush1.bf16.xpose.msra.mxu0 0
      %1240 = vmatprep.subr.bf16.mxu0 0
      %1241 = vmatpush1.bf16.xpose.msra.mxu0 0
      %1242 = vmatprep.subr.bf16.mxu0 0
      %1243 = vmatpush1.bf16.xpose.msra.mxu0 0
      %1244 = vmatprep.subr.bf16.mxu0 0
      %1245 = vmatpush1.bf16.xpose.msra.mxu0 0
      %1246 = vmatprep.subr.bf16.mxu0 0
      %1247 = vmatpush1.bf16.xpose.msra.mxu0 0
      %1248 = vmatprep.subr.bf16.mxu0 0
      %1249 = vmatpush1.bf16.xpose.msra.mxu0 0
      %1250 = vmatprep.subr.bf16.mxu0 0
      %1251 = vmatpush1.bf16.xpose.msra.mxu0 0
      %1252 = vmatprep.subr.bf16.mxu0 0
      %1253 = vmatpush1.bf16.xpose.msra.mxu0 0
      %1254 = vmatprep.subr.bf16.mxu0 0
      %1255 = vmatpush1.bf16.xpose.msra.mxu0 0
      %1256 = vmatprep.subr.bf16.mxu0 0
      %1257 = vmatpush1.bf16.xpose.msra.mxu0 0
      %1258 = vmatprep.subr.bf16.mxu0 0
      %1259 = vmatpush1.bf16.xpose.msra.mxu0 0
      %1260 = vmatprep.subr.bf16.mxu0 0
      %1261 = vmatpush1.bf16.xpose.msra.mxu0 0
      %1262 = vmatprep.mubr.bf16.mxu0 0
      %1263 = vmatmul.mubr.bf16.gmra.mrb[0].mxu0 %v1225
      %v1264 = vpop.f32.mrb[0].mxu0
      %v1265 = vadd.f32 0.0, %v1264
      %v1266 = vpop.f32.mrb[0].mxu0
      %v1267 = vpop.f32.mrb[0].mxu0
      %v1268 = vpop.f32.mrb[0].mxu0
      %1269 = vdwg.mxu0
      %v1270 = vld [vmem:[%s4 + $0x30] sm:$0xf]
      %v1271 = vld [vmem:[%s4 + $0x34] sm:$0xf]
      %v1272 = vld [vmem:[%s4 + $0x38] sm:$0xf]
      %v1273 = vld [vmem:[%s4 + $0x3c] sm:$0xf]
      %v1274 = vpack.c.bf16 %v1173, %v1127
      %v1275 = vpack.c.bf16 %v1265, %v1219
      %v1280 = vunpack.c.l.b16 %v1270
      %v1281 = vunpack.c.l.b16 %v1271
      %v1282 = vunpack.c.l.b16 %v1272
      %v1283 = vunpack.c.l.b16 %v1273
      %v1284 = vpack.c.b16 %v1281, %v1280
      %v1285 = vpack.c.b16 %v1283, %v1282
      %v1287 = vsel %vm612, %v1284, 0
      %v1290 = vsel %vm612, %v1285, 0
      %1292 = vmatprep.subr.bf16.mxu0 0
      %1293 = vmatpush1.bf16.msra.mxu0 %v1274
      %1294 = vmatprep.subr.bf16.mxu0 0
      %1295 = vmatpush1.bf16.msra.mxu0 %v1275
      %1296 = vmatprep.subr.bf16.mxu0 0
      %1297 = vmatpush1.bf16.msra.mxu0 0
      %1298 = vmatprep.subr.bf16.mxu0 0
      %1299 = vmatpush1.bf16.msra.mxu0 0
      %1300 = vmatprep.subr.bf16.mxu0 0
      %1301 = vmatpush1.bf16.msra.mxu0 0
      %1302 = vmatprep.subr.bf16.mxu0 0
      %1303 = vmatpush1.bf16.msra.mxu0 0
      %1304 = vmatprep.subr.bf16.mxu0 0
      %1305 = vmatpush1.bf16.msra.mxu0 0
      %1306 = vmatprep.subr.bf16.mxu0 0
      %1307 = vmatpush1.bf16.msra.mxu0 0
      %1308 = vmatprep.subr.bf16.mxu0 0
      %1309 = vmatpush1.bf16.msra.mxu0 0
      %1310 = vmatprep.subr.bf16.mxu0 0
      %1311 = vmatpush1.bf16.msra.mxu0 0
      %1312 = vmatprep.subr.bf16.mxu0 0
      %1313 = vmatpush1.bf16.msra.mxu0 0
      %1314 = vmatprep.subr.bf16.mxu0 0
      %1315 = vmatpush1.bf16.msra.mxu0 0
      %1316 = vmatprep.subr.bf16.mxu0 0
      %1317 = vmatpush1.bf16.msra.mxu0 0
      %1318 = vmatprep.subr.bf16.mxu0 0
      %1319 = vmatpush1.bf16.msra.mxu0 0
      %1320 = vmatprep.subr.bf16.mxu0 0
      %1321 = vmatpush1.bf16.msra.mxu0 0
      %1322 = vmatprep.subr.bf16.mxu0 0
      %1323 = vmatpush1.bf16.msra.mxu0 0
      %1324 = vmatprep.mubr.bf16.mxu0 0
      %1325 = vmatmul.mubr.bf16.gmra.mrb[0].mxu0 %v1287
      %v1326 = vpop.f32.mrb[0].mxu0
      %v1327 = vadd.f32 0.0, %v1326
      %v1328 = vpop.f32.mrb[0].mxu0
      %v1329 = vpop.f32.mrb[0].mxu0
      %v1330 = vadd.f32 0.0, %v1329
      %v1331 = vpop.f32.mrb[0].mxu0
      %1332 = vmatprep.mubr.bf16.mxu0 0
      %1333 = vmatmul.mubr.bf16.gmra.mrb[0].mxu0 %v1290
      %v1334 = vpop.f32.mrb[0].mxu0
      %v1335 = vadd.f32 0.0, %v1334
      %v1336 = vpop.f32.mrb[0].mxu0
      %v1337 = vpop.f32.mrb[0].mxu0
      %v1338 = vadd.f32 0.0, %v1337
      %v1339 = vpop.f32.mrb[0].mxu0
      %1340 = vdwg.mxu0
      %v1341 = vadd.f32 %v388, %v1327
      %v1342 = vadd.f32 %v389, %v1330
      %v1343 = vadd.f32 %v390, %v1335
      %v1344 = vadd.f32 %v391, %v1338
      %v1345 = vld [vmem:[%s6 + $0x60] sm:$0xff]
      %v1346 = vld [vmem:[%s6 + $0x68] sm:$0xff]
      %v1347 = vld [vmem:[%s6 + $0x70] sm:$0xff]
      %v1348 = vld [vmem:[%s6 + $0x78] sm:$0xff]
      %1350 = vset.pattern.permute.xlu0 0
      %1351 = vperm.xlu0 %1350, %v1345
      %v1352 = vpop.permute.xlu0 %1351
      %1355 = vset.pattern.permute.xlu0 0
      %1356 = vperm.xlu0 %1355, %v1346
      %v1357 = vpop.permute.xlu0 %1356
      %1360 = vset.pattern.permute.xlu0 0
      %1361 = vperm.xlu0 %1360, %v1347
      %v1362 = vpop.permute.xlu0 %1361
      %1365 = vset.pattern.permute.xlu0 0
      %1366 = vperm.xlu0 %1365, %v1348
      %v1367 = vpop.permute.xlu0 %1366
      %v1369 = vadd.f32 %v1341, %v1352
      %v1370 = vadd.f32 %v1342, %v1357
      %v1371 = vadd.f32 %v1343, %v1362
      %v1372 = vadd.f32 %v1344, %v1367
      %s1373 = scalar_lea.vmem %s7, 32
      %v1374 = vld [vmem:[%s1373] sm:$0xff]
      %v1375 = vld [vmem:[%s1373 + $0x8] sm:$0xff]
      %v1376 = vld [vmem:[%s1373 + $0x10] sm:$0xff]
      %v1377 = vld [vmem:[%s1373 + $0x18] sm:$0xff]
      %s1378 = scalar_lea.vmem %s8, 32
      %v1379 = vld [vmem:[%s1378] sm:$0xff]
      %v1380 = vld [vmem:[%s1378 + $0x8] sm:$0xff]
      %v1381 = vld [vmem:[%s1378 + $0x10] sm:$0xff]
      %v1382 = vld [vmem:[%s1378 + $0x18] sm:$0xff]
      %v1383 = vsel %vm404, %v1369, 0.0
      %v1384 = vsel %vm404, %v1370, 0.0
      %v1385 = vadd.f32 %v1383, %v1384
      %v1386 = vsel %vm404, %v1371, 0.0
      %v1387 = vadd.f32 %v1385, %v1386
      %v1388 = vsel %vm404, %v1372, 0.0
      %v1389 = vadd.f32 %v1387, %v1388
      %v1390 = vrot.slane %v1389, 4
      %v1391 = vadd.f32 %v1389, %v1390
      %v1392 = vrot.slane %v1391, 2
      %v1393 = vadd.f32 %v1391, %v1392
      %v1394 = vrot.slane %v1393, 1
      %v1395 = vadd.f32 %v1393, %v1394
      %v1396 = vmul.f32 %v1395, %v418
      %v1397 = vsub.f32 %v1369, %v1396
      %v1398 = vsub.f32 %v1370, %v1396
      %v1399 = vsub.f32 %v1371, %v1396
      %v1400 = vsub.f32 %v1372, %v1396
      %v1401 = vmul.f32 %v1397, %v1397
      %v1402 = vmul.f32 %v1398, %v1398
      %v1403 = vmul.f32 %v1399, %v1399
      %v1404 = vmul.f32 %v1400, %v1400
      %v1405 = vsel %vm404, %v1401, 0.0
      %v1406 = vsel %vm404, %v1402, 0.0
      %v1407 = vadd.f32 %v1405, %v1406
      %v1408 = vsel %vm404, %v1403, 0.0
      %v1409 = vadd.f32 %v1407, %v1408
      %v1410 = vsel %vm404, %v1404, 0.0
      %v1411 = vadd.f32 %v1409, %v1410
      %v1412 = vrot.slane %v1411, 4
      %v1413 = vadd.f32 %v1411, %v1412
      %v1414 = vrot.slane %v1413, 2
      %v1415 = vadd.f32 %v1413, %v1414
      %v1416 = vrot.slane %v1415, 1
      %v1417 = vadd.f32 %v1415, %v1416
      %v1418 = vmul.f32 %v1417, %v418
      %v1419 = vadd.f32 %v1418, 1e-05
      %v1420 = vrsqrt.pop %v1419
      %v1421 = vmul.f32 %v1397, %v1420
      %v1422 = vmul.f32 %v1398, %v1420
      %v1423 = vmul.f32 %v1399, %v1420
      %v1424 = vmul.f32 %v1400, %v1420
      %1426 = vset.pattern.permute.xlu0 0
      %1427 = vperm.xlu0 %1426, %v1374
      %v1428 = vpop.permute.xlu0 %1427
      %1431 = vset.pattern.permute.xlu0 0
      %1432 = vperm.xlu0 %1431, %v1375
      %v1433 = vpop.permute.xlu0 %1432
      %1436 = vset.pattern.permute.xlu0 0
      %1437 = vperm.xlu0 %1436, %v1376
      %v1438 = vpop.permute.xlu0 %1437
      %1441 = vset.pattern.permute.xlu0 0
      %1442 = vperm.xlu0 %1441, %v1377
      %v1443 = vpop.permute.xlu0 %1442
      %v1445 = vmul.f32 %v1421, %v1428
      %v1446 = vmul.f32 %v1422, %v1433
      %v1447 = vmul.f32 %v1423, %v1438
      %v1448 = vmul.f32 %v1424, %v1443
      %1450 = vset.pattern.permute.xlu0 0
      %1451 = vperm.xlu0 %1450, %v1379
      %v1452 = vpop.permute.xlu0 %1451
      %1455 = vset.pattern.permute.xlu0 0
      %1456 = vperm.xlu0 %1455, %v1380
      %v1457 = vpop.permute.xlu0 %1456
      %1460 = vset.pattern.permute.xlu0 0
      %1461 = vperm.xlu0 %1460, %v1381
      %v1462 = vpop.permute.xlu0 %1461
      %1465 = vset.pattern.permute.xlu0 0
      %1466 = vperm.xlu0 %1465, %v1382
      %v1467 = vpop.permute.xlu0 %1466
      %v1469 = vadd.f32 %v1445, %v1452
      %v1470 = vadd.f32 %v1446, %v1457
      %v1471 = vadd.f32 %v1447, %v1462
      %v1472 = vadd.f32 %v1448, %v1467
      %v1473 = vld [vmem:[%s4 + $0x40] sm:$0xf]
      %v1474 = vld [vmem:[%s4 + $0x44] sm:$0xf]
      %v1475 = vld [vmem:[%s4 + $0x48] sm:$0xf]
      %v1476 = vld [vmem:[%s4 + $0x4c] sm:$0xf]
      %v1477 = vpack.c.bf16 %v1470, %v1469
      %v1478 = vpack.c.bf16 %v1472, %v1471
      %v1479 = vld [vmem:[%s6 + $0x80] sm:$0xff]
      %v1480 = vld [vmem:[%s6 + $0x88] sm:$0xff]
      %v1481 = vld [vmem:[%s6 + $0x90] sm:$0xff]
      %v1482 = vld [vmem:[%s6 + $0x98] sm:$0xff]
      %1484 = vset.pattern.permute.xlu0 0
      %1485 = vperm.xlu0 %1484, %v1479
      %v1486 = vpop.permute.xlu0 %1485
      %1489 = vset.pattern.permute.xlu0 0
      %1490 = vperm.xlu0 %1489, %v1480
      %v1491 = vpop.permute.xlu0 %1490
      %1494 = vset.pattern.permute.xlu0 0
      %1495 = vperm.xlu0 %1494, %v1481
      %v1496 = vpop.permute.xlu0 %1495
      %1499 = vset.pattern.permute.xlu0 0
      %1500 = vperm.xlu0 %1499, %v1482
      %v1501 = vpop.permute.xlu0 %1500
      %v1507 = vunpack.c.l.b16 %v1473
      %v1508 = vunpack.c.l.b16 %v1474
      %v1509 = vunpack.c.l.b16 %v1475
      %v1510 = vunpack.c.l.b16 %v1476
      %v1511 = vpack.c.b16 %v1508, %v1507
      %v1512 = vpack.c.b16 %v1510, %v1509
      %v1514 = vsel %vm612, %v1511, 0
      %v1517 = vsel %vm612, %v1512, 0
      %1519 = vmatprep.subr.bf16.mxu0 0
      %1520 = vmatpush1.bf16.msra.mxu0 %v1477
      %1521 = vmatprep.subr.bf16.mxu0 0
      %1522 = vmatpush1.bf16.msra.mxu0 %v1478
      %1523 = vmatprep.subr.bf16.mxu0 0
      %1524 = vmatpush1.bf16.msra.mxu0 0
      %1525 = vmatprep.subr.bf16.mxu0 0
      %1526 = vmatpush1.bf16.msra.mxu0 0
      %1527 = vmatprep.subr.bf16.mxu0 0
      %1528 = vmatpush1.bf16.msra.mxu0 0
      %1529 = vmatprep.subr.bf16.mxu0 0
      %1530 = vmatpush1.bf16.msra.mxu0 0
      %1531 = vmatprep.subr.bf16.mxu0 0
      %1532 = vmatpush1.bf16.msra.mxu0 0
      %1533 = vmatprep.subr.bf16.mxu0 0
      %1534 = vmatpush1.bf16.msra.mxu0 0
      %1535 = vmatprep.subr.bf16.mxu0 0
      %1536 = vmatpush1.bf16.msra.mxu0 0
      %1537 = vmatprep.subr.bf16.mxu0 0
      %1538 = vmatpush1.bf16.msra.mxu0 0
      %1539 = vmatprep.subr.bf16.mxu0 0
      %1540 = vmatpush1.bf16.msra.mxu0 0
      %1541 = vmatprep.subr.bf16.mxu0 0
      %1542 = vmatpush1.bf16.msra.mxu0 0
      %1543 = vmatprep.subr.bf16.mxu0 0
      %1544 = vmatpush1.bf16.msra.mxu0 0
      %1545 = vmatprep.subr.bf16.mxu0 0
      %1546 = vmatpush1.bf16.msra.mxu0 0
      %1547 = vmatprep.subr.bf16.mxu0 0
      %1548 = vmatpush1.bf16.msra.mxu0 0
      %1549 = vmatprep.subr.bf16.mxu0 0
      %1550 = vmatpush1.bf16.msra.mxu0 0
      %1551 = vmatprep.mubr.bf16.mxu0 0
      %1552 = vmatmul.mubr.bf16.gmra.mrb[0].mxu0 %v1514
      %v1553 = vpop.f32.mrb[0].mxu0
      %v1554 = vadd.f32 %v1486, %v1553
      %v1555 = vpop.f32.mrb[0].mxu0
      %v1556 = vpop.f32.mrb[0].mxu0
      %v1557 = vadd.f32 %v1491, %v1556
      %v1558 = vpop.f32.mrb[0].mxu0
      %1559 = vmatprep.mubr.bf16.mxu0 0
      %1560 = vmatmul.mubr.bf16.gmra.mrb[0].mxu0 %v1517
      %v1561 = vpop.f32.mrb[0].mxu0
      %v1562 = vadd.f32 %v1496, %v1561
      %v1563 = vpop.f32.mrb[0].mxu0
      %v1564 = vpop.f32.mrb[0].mxu0
      %v1565 = vadd.f32 %v1501, %v1564
      %v1566 = vpop.f32.mrb[0].mxu0
      %1567 = vdwg.mxu0
      %v1568 = vld [vmem:[%s4 + $0x50] sm:$0xf]
      %v1569 = vld [vmem:[%s4 + $0x54] sm:$0xf]
      %v1570 = vld [vmem:[%s4 + $0x58] sm:$0xf]
      %v1571 = vld [vmem:[%s4 + $0x5c] sm:$0xf]
      %v1572 = vld [vmem:[%s4 + $0x60] sm:$0xf]
      %v1573 = vld [vmem:[%s4 + $0x64] sm:$0xf]
      %v1574 = vld [vmem:[%s4 + $0x68] sm:$0xf]
      %v1575 = vld [vmem:[%s4 + $0x6c] sm:$0xf]
      %v1576 = vpack.c.bf16 %v393, %v392
      %v1577 = vpack.c.bf16 %v395, %v394
      %v1578 = vld [vmem:[%s6 + $0xa0] sm:$0xff]
      %v1579 = vld [vmem:[%s6 + $0xa8] sm:$0xff]
      %v1580 = vld [vmem:[%s6 + $0xb0] sm:$0xff]
      %v1581 = vld [vmem:[%s6 + $0xb8] sm:$0xff]
      %v1582 = vld [vmem:[%s6 + $0xc0] sm:$0xff]
      %v1583 = vld [vmem:[%s6 + $0xc8] sm:$0xff]
      %v1584 = vld [vmem:[%s6 + $0xd0] sm:$0xff]
      %v1585 = vld [vmem:[%s6 + $0xd8] sm:$0xff]
      %1587 = vset.pattern.permute.xlu0 0
      %1588 = vperm.xlu0 %1587, %v1578
      %v1589 = vpop.permute.xlu0 %1588
      %1592 = vset.pattern.permute.xlu0 0
      %1593 = vperm.xlu0 %1592, %v1579
      %v1594 = vpop.permute.xlu0 %1593
      %1597 = vset.pattern.permute.xlu0 0
      %1598 = vperm.xlu0 %1597, %v1580
      %v1599 = vpop.permute.xlu0 %1598
      %1602 = vset.pattern.permute.xlu0 0
      %1603 = vperm.xlu0 %1602, %v1581
      %v1604 = vpop.permute.xlu0 %1603
      %1607 = vset.pattern.permute.xlu0 0
      %1608 = vperm.xlu0 %1607, %v1582
      %v1609 = vpop.permute.xlu0 %1608
      %1612 = vset.pattern.permute.xlu0 0
      %1613 = vperm.xlu0 %1612, %v1583
      %v1614 = vpop.permute.xlu0 %1613
      %1617 = vset.pattern.permute.xlu0 0
      %1618 = vperm.xlu0 %1617, %v1584
      %v1619 = vpop.permute.xlu0 %1618
      %1622 = vset.pattern.permute.xlu0 0
      %1623 = vperm.xlu0 %1622, %v1585
      %v1624 = vpop.permute.xlu0 %1623
      %v1634 = vunpack.c.l.b16 %v1568
      %v1635 = vunpack.c.l.b16 %v1569
      %v1636 = vunpack.c.l.b16 %v1570
      %v1637 = vunpack.c.l.b16 %v1571
      %v1638 = vunpack.c.l.b16 %v1572
      %v1639 = vunpack.c.l.b16 %v1573
      %v1640 = vunpack.c.l.b16 %v1574
      %v1641 = vunpack.c.l.b16 %v1575
      %v1642 = vpack.c.b16 %v1635, %v1634
      %v1643 = vpack.c.b16 %v1637, %v1636
      %v1644 = vpack.c.b16 %v1639, %v1638
      %v1645 = vpack.c.b16 %v1641, %v1640
      %v1647 = vsel %vm612, %v1642, 0
      %v1650 = vsel %vm612, %v1643, 0
      %v1653 = vsel %vm612, %v1644, 0
      %v1656 = vsel %vm612, %v1645, 0
      %1658 = vmatprep.subr.bf16.mxu0 0
      %1659 = vmatpush1.bf16.msra.mxu0 %v1576
      %1660 = vmatprep.subr.bf16.mxu0 0
      %1661 = vmatpush1.bf16.msra.mxu0 %v1577
      %1662 = vmatprep.subr.bf16.mxu0 0
      %1663 = vmatpush1.bf16.msra.mxu0 0
      %1664 = vmatprep.subr.bf16.mxu0 0
      %1665 = vmatpush1.bf16.msra.mxu0 0
      %1666 = vmatprep.subr.bf16.mxu0 0
      %1667 = vmatpush1.bf16.msra.mxu0 0
      %1668 = vmatprep.subr.bf16.mxu0 0
      %1669 = vmatpush1.bf16.msra.mxu0 0
      %1670 = vmatprep.subr.bf16.mxu0 0
      %1671 = vmatpush1.bf16.msra.mxu0 0
      %1672 = vmatprep.subr.bf16.mxu0 0
      %1673 = vmatpush1.bf16.msra.mxu0 0
      %1674 = vmatprep.subr.bf16.mxu0 0
      %1675 = vmatpush1.bf16.msra.mxu0 0
      %1676 = vmatprep.subr.bf16.mxu0 0
      %1677 = vmatpush1.bf16.msra.mxu0 0
      %1678 = vmatprep.subr.bf16.mxu0 0
      %1679 = vmatpush1.bf16.msra.mxu0 0
      %1680 = vmatprep.subr.bf16.mxu0 0
      %1681 = vmatpush1.bf16.msra.mxu0 0
      %1682 = vmatprep.subr.bf16.mxu0 0
      %1683 = vmatpush1.bf16.msra.mxu0 0
      %1684 = vmatprep.subr.bf16.mxu0 0
      %1685 = vmatpush1.bf16.msra.mxu0 0
      %1686 = vmatprep.subr.bf16.mxu0 0
      %1687 = vmatpush1.bf16.msra.mxu0 0
      %1688 = vmatprep.subr.bf16.mxu0 0
      %1689 = vmatpush1.bf16.msra.mxu0 0
      %1690 = vmatprep.mubr.bf16.mxu0 0
      %1691 = vmatmul.mubr.bf16.gmra.mrb[0].mxu0 %v1647
      %v1692 = vpop.f32.mrb[0].mxu0
      %v1693 = vadd.f32 %v1589, %v1692
      %v1694 = vpop.f32.mrb[0].mxu0
      %v1695 = vpop.f32.mrb[0].mxu0
      %v1696 = vadd.f32 %v1594, %v1695
      %v1697 = vpop.f32.mrb[0].mxu0
      %1698 = vmatprep.mubr.bf16.mxu0 0
      %1699 = vmatmul.mubr.bf16.gmra.mrb[0].mxu0 %v1650
      %v1700 = vpop.f32.mrb[0].mxu0
      %v1701 = vadd.f32 %v1599, %v1700
      %v1702 = vpop.f32.mrb[0].mxu0
      %v1703 = vpop.f32.mrb[0].mxu0
      %v1704 = vadd.f32 %v1604, %v1703
      %v1705 = vpop.f32.mrb[0].mxu0
      %1706 = vmatprep.mubr.bf16.mxu0 0
      %1707 = vmatmul.mubr.bf16.gmra.mrb[0].mxu0 %v1653
      %v1708 = vpop.f32.mrb[0].mxu0
      %v1709 = vadd.f32 %v1609, %v1708
      %v1710 = vpop.f32.mrb[0].mxu0
      %v1711 = vpop.f32.mrb[0].mxu0
      %v1712 = vadd.f32 %v1614, %v1711
      %v1713 = vpop.f32.mrb[0].mxu0
      %1714 = vmatprep.mubr.bf16.mxu0 0
      %1715 = vmatmul.mubr.bf16.gmra.mrb[0].mxu0 %v1656
      %v1716 = vpop.f32.mrb[0].mxu0
      %v1717 = vadd.f32 %v1619, %v1716
      %v1718 = vpop.f32.mrb[0].mxu0
      %v1719 = vpop.f32.mrb[0].mxu0
      %v1720 = vadd.f32 %v1624, %v1719
      %v1721 = vpop.f32.mrb[0].mxu0
      %1722 = vdwg.mxu0
      %v1723 = vld [vmem:[%s381] sm:$0xff]
      %1724 = vxpose.xlu0.b32.start [1/16] %v1554, 128
      %1725 = vxpose.xlu0.b32.cont [2/16] 0.0, 128
      %1726 = vxpose.xlu0.b32.cont [3/16] 0.0, 128
      %1727 = vxpose.xlu0.b32.cont [4/16] 0.0, 128
      %1728 = vxpose.xlu0.b32.cont [5/16] 0.0, 128
      %1729 = vxpose.xlu0.b32.cont [6/16] 0.0, 128
      %1730 = vxpose.xlu0.b32.cont [7/16] 0.0, 128
      %1731 = vxpose.xlu0.b32.cont [8/16] 0.0, 128
      %1732 = vxpose.xlu0.b32.cont [9/16] 0.0, 128
      %1733 = vxpose.xlu0.b32.cont [10/16] 0.0, 128
      %1734 = vxpose.xlu0.b32.cont [11/16] 0.0, 128
      %1735 = vxpose.xlu0.b32.cont [12/16] 0.0, 128
      %1736 = vxpose.xlu0.b32.cont [13/16] 0.0, 128
      %1737 = vxpose.xlu0.b32.cont [14/16] 0.0, 128
      %1738 = vxpose.xlu0.b32.cont [15/16] 0.0, 128
      %1739 = vxpose.xlu0.b32.end [16/16] 0.0, 128
      %v1740 = vpop.trf.xlu0
      %v1741 = vpop.trf.xlu0
      %v1742 = vpop.trf.xlu0
      %v1743 = vpop.trf.xlu0
      %v1744 = vpop.trf.xlu0
      %v1745 = vpop.trf.xlu0
      %v1746 = vpop.trf.xlu0
      %v1747 = vpop.trf.xlu0
      %v1748 = vpop.trf.xlu0
      %v1749 = vpop.trf.xlu0
      %v1750 = vpop.trf.xlu0
      %v1751 = vpop.trf.xlu0
      %v1752 = vpop.trf.xlu0
      %v1753 = vpop.trf.xlu0
      %v1754 = vpop.trf.xlu0
      %v1755 = vpop.trf.xlu0
      %1756 = vxpose.xlu0.b32.start [1/16] %v1557, 128
      %1757 = vxpose.xlu0.b32.cont [2/16] 0.0, 128
      %1758 = vxpose.xlu0.b32.cont [3/16] 0.0, 128
      %1759 = vxpose.xlu0.b32.cont [4/16] 0.0, 128
      %1760 = vxpose.xlu0.b32.cont [5/16] 0.0, 128
      %1761 = vxpose.xlu0.b32.cont [6/16] 0.0, 128
      %1762 = vxpose.xlu0.b32.cont [7/16] 0.0, 128
      %1763 = vxpose.xlu0.b32.cont [8/16] 0.0, 128
      %1764 = vxpose.xlu0.b32.cont [9/16] 0.0, 128
      %1765 = vxpose.xlu0.b32.cont [10/16] 0.0, 128
      %1766 = vxpose.xlu0.b32.cont [11/16] 0.0, 128
      %1767 = vxpose.xlu0.b32.cont [12/16] 0.0, 128
      %1768 = vxpose.xlu0.b32.cont [13/16] 0.0, 128
      %1769 = vxpose.xlu0.b32.cont [14/16] 0.0, 128
      %1770 = vxpose.xlu0.b32.cont [15/16] 0.0, 128
      %1771 = vxpose.xlu0.b32.end [16/16] 0.0, 128
      %v1772 = vpop.trf.xlu0
      %v1773 = vpop.trf.xlu0
      %v1774 = vpop.trf.xlu0
      %v1775 = vpop.trf.xlu0
      %v1776 = vpop.trf.xlu0
      %v1777 = vpop.trf.xlu0
      %v1778 = vpop.trf.xlu0
      %v1779 = vpop.trf.xlu0
      %v1780 = vpop.trf.xlu0
      %v1781 = vpop.trf.xlu0
      %v1782 = vpop.trf.xlu0
      %v1783 = vpop.trf.xlu0
      %v1784 = vpop.trf.xlu0
      %v1785 = vpop.trf.xlu0
      %v1786 = vpop.trf.xlu0
      %v1787 = vpop.trf.xlu0
      %1788 = vxpose.xlu0.b32.start [1/16] %v1562, 128
      %1789 = vxpose.xlu0.b32.cont [2/16] 0.0, 128
      %1790 = vxpose.xlu0.b32.cont [3/16] 0.0, 128
      %1791 = vxpose.xlu0.b32.cont [4/16] 0.0, 128
      %1792 = vxpose.xlu0.b32.cont [5/16] 0.0, 128
      %1793 = vxpose.xlu0.b32.cont [6/16] 0.0, 128
      %1794 = vxpose.xlu0.b32.cont [7/16] 0.0, 128
      %1795 = vxpose.xlu0.b32.cont [8/16] 0.0, 128
      %1796 = vxpose.xlu0.b32.cont [9/16] 0.0, 128
      %1797 = vxpose.xlu0.b32.cont [10/16] 0.0, 128
      %1798 = vxpose.xlu0.b32.cont [11/16] 0.0, 128
      %1799 = vxpose.xlu0.b32.cont [12/16] 0.0, 128
      %1800 = vxpose.xlu0.b32.cont [13/16] 0.0, 128
      %1801 = vxpose.xlu0.b32.cont [14/16] 0.0, 128
      %1802 = vxpose.xlu0.b32.cont [15/16] 0.0, 128
      %1803 = vxpose.xlu0.b32.end [16/16] 0.0, 128
      %v1804 = vpop.trf.xlu0
      %v1805 = vpop.trf.xlu0
      %v1806 = vpop.trf.xlu0
      %v1807 = vpop.trf.xlu0
      %v1808 = vpop.trf.xlu0
      %v1809 = vpop.trf.xlu0
      %v1810 = vpop.trf.xlu0
      %v1811 = vpop.trf.xlu0
      %v1812 = vpop.trf.xlu0
      %v1813 = vpop.trf.xlu0
      %v1814 = vpop.trf.xlu0
      %v1815 = vpop.trf.xlu0
      %v1816 = vpop.trf.xlu0
      %v1817 = vpop.trf.xlu0
      %v1818 = vpop.trf.xlu0
      %v1819 = vpop.trf.xlu0
      %1820 = vxpose.xlu0.b32.start [1/16] %v1565, 128
      %1821 = vxpose.xlu0.b32.cont [2/16] 0.0, 128
      %1822 = vxpose.xlu0.b32.cont [3/16] 0.0, 128
      %1823 = vxpose.xlu0.b32.cont [4/16] 0.0, 128
      %1824 = vxpose.xlu0.b32.cont [5/16] 0.0, 128
      %1825 = vxpose.xlu0.b32.cont [6/16] 0.0, 128
      %1826 = vxpose.xlu0.b32.cont [7/16] 0.0, 128
      %1827 = vxpose.xlu0.b32.cont [8/16] 0.0, 128
      %1828 = vxpose.xlu0.b32.cont [9/16] 0.0, 128
      %1829 = vxpose.xlu0.b32.cont [10/16] 0.0, 128
      %1830 = vxpose.xlu0.b32.cont [11/16] 0.0, 128
      %1831 = vxpose.xlu0.b32.cont [12/16] 0.0, 128
      %1832 = vxpose.xlu0.b32.cont [13/16] 0.0, 128
      %1833 = vxpose.xlu0.b32.cont [14/16] 0.0, 128
      %1834 = vxpose.xlu0.b32.cont [15/16] 0.0, 128
      %1835 = vxpose.xlu0.b32.end [16/16] 0.0, 128
      %v1836 = vpop.trf.xlu0
      %v1837 = vpop.trf.xlu0
      %v1838 = vpop.trf.xlu0
      %v1839 = vpop.trf.xlu0
      %v1840 = vpop.trf.xlu0
      %v1841 = vpop.trf.xlu0
      %v1842 = vpop.trf.xlu0
      %v1843 = vpop.trf.xlu0
      %v1844 = vpop.trf.xlu0
      %v1845 = vpop.trf.xlu0
      %v1846 = vpop.trf.xlu0
      %v1847 = vpop.trf.xlu0
      %v1848 = vpop.trf.xlu0
      %v1849 = vpop.trf.xlu0
      %v1850 = vpop.trf.xlu0
      %v1851 = vpop.trf.xlu0
      %v1852 = vpack.c.bf16 %v1740, %v1740
      %v1853 = vpack.c.bf16 %v1772, %v1772
      %v1854 = vpack.c.bf16 %v1804, %v1804
      %v1855 = vpack.c.bf16 %v1836, %v1836
      %v1856 = vpack.c.bf16 %v1693, %v1693
      %v1857 = vpack.c.bf16 %v1696, %v1696
      %v1858 = vpack.c.bf16 %v1701, %v1701
      %v1859 = vpack.c.bf16 %v1704, %v1704
      %v1861 = vsel %vm404, %v1852, 0
      %v1864 = vsel %vm852, %v1856, 0
      %1866 = vmatprep.subr.bf16.mxu0 0
      %1867 = vmatpush1.bf16.msra.mxu0 %v1864
      %1868 = vmatprep.subr.bf16.mxu0 0
      %1869 = vmatpush1.bf16.msra.mxu0 0
      %1870 = vmatprep.subr.bf16.mxu0 0
      %1871 = vmatpush1.bf16.msra.mxu0 0
      %1872 = vmatprep.subr.bf16.mxu0 0
      %1873 = vmatpush1.bf16.msra.mxu0 0
      %1874 = vmatprep.subr.bf16.mxu0 0
      %1875 = vmatpush1.bf16.msra.mxu0 0
      %1876 = vmatprep.subr.bf16.mxu0 0
      %1877 = vmatpush1.bf16.msra.mxu0 0
      %1878 = vmatprep.subr.bf16.mxu0 0
      %1879 = vmatpush1.bf16.msra.mxu0 0
      %1880 = vmatprep.subr.bf16.mxu0 0
      %1881 = vmatpush1.bf16.msra.mxu0 0
      %1882 = vmatprep.subr.bf16.mxu0 0
      %1883 = vmatpush1.bf16.msra.mxu0 0
      %1884 = vmatprep.subr.bf16.mxu0 0
      %1885 = vmatpush1.bf16.msra.mxu0 0
      %1886 = vmatprep.subr.bf16.mxu0 0
      %1887 = vmatpush1.bf16.msra.mxu0 0
      %1888 = vmatprep.subr.bf16.mxu0 0
      %1889 = vmatpush1.bf16.msra.mxu0 0
      %1890 = vmatprep.subr.bf16.mxu0 0
      %1891 = vmatpush1.bf16.msra.mxu0 0
      %1892 = vmatprep.subr.bf16.mxu0 0
      %1893 = vmatpush1.bf16.msra.mxu0 0
      %1894 = vmatprep.subr.bf16.mxu0 0
      %1895 = vmatpush1.bf16.msra.mxu0 0
      %1896 = vmatprep.subr.bf16.mxu0 0
      %1897 = vmatpush1.bf16.msra.mxu0 0
      %1898 = vmatprep.mubr.bf16.mxu0 0
      %1899 = vmatmul.mubr.bf16.gmra.mrb[0].mxu0 %v1861
      %v1900 = vpop.f32.mrb[0].mxu0
      %v1901 = vadd.f32 %v1723, %v1900
      %v1902 = vpop.f32.mrb[0].mxu0
      %v1903 = vpop.f32.mrb[0].mxu0
      %v1904 = vpop.f32.mrb[0].mxu0
      %1905 = vdwg.mxu0
      %v1907 = vsel %vm404, %v1853, 0
      %v1910 = vsel %vm852, %v1857, 0
      %1912 = vmatprep.subr.bf16.mxu0 0
      %1913 = vmatpush1.bf16.msra.mxu0 %v1910
      %1914 = vmatprep.subr.bf16.mxu0 0
      %1915 = vmatpush1.bf16.msra.mxu0 0
      %1916 = vmatprep.subr.bf16.mxu0 0
      %1917 = vmatpush1.bf16.msra.mxu0 0
      %1918 = vmatprep.subr.bf16.mxu0 0
      %1919 = vmatpush1.bf16.msra.mxu0 0
      %1920 = vmatprep.subr.bf16.mxu0 0
      %1921 = vmatpush1.bf16.msra.mxu0 0
      %1922 = vmatprep.subr.bf16.mxu0 0
      %1923 = vmatpush1.bf16.msra.mxu0 0
      %1924 = vmatprep.subr.bf16.mxu0 0
      %1925 = vmatpush1.bf16.msra.mxu0 0
      %1926 = vmatprep.subr.bf16.mxu0 0
      %1927 = vmatpush1.bf16.msra.mxu0 0
      %1928 = vmatprep.subr.bf16.mxu0 0
      %1929 = vmatpush1.bf16.msra.mxu0 0
      %1930 = vmatprep.subr.bf16.mxu0 0
      %1931 = vmatpush1.bf16.msra.mxu0 0
      %1932 = vmatprep.subr.bf16.mxu0 0
      %1933 = vmatpush1.bf16.msra.mxu0 0
      %1934 = vmatprep.subr.bf16.mxu0 0
      %1935 = vmatpush1.bf16.msra.mxu0 0
      %1936 = vmatprep.subr.bf16.mxu0 0
      %1937 = vmatpush1.bf16.msra.mxu0 0
      %1938 = vmatprep.subr.bf16.mxu0 0
      %1939 = vmatpush1.bf16.msra.mxu0 0
      %1940 = vmatprep.subr.bf16.mxu0 0
      %1941 = vmatpush1.bf16.msra.mxu0 0
      %1942 = vmatprep.subr.bf16.mxu0 0
      %1943 = vmatpush1.bf16.msra.mxu0 0
      %1944 = vmatprep.mubr.bf16.mxu0 0
      %1945 = vmatmul.mubr.bf16.gmra.mrb[0].mxu0 %v1907
      %v1946 = vpop.f32.mrb[0].mxu0
      %v1947 = vadd.f32 %v1723, %v1946
      %v1948 = vpop.f32.mrb[0].mxu0
      %v1949 = vpop.f32.mrb[0].mxu0
      %v1950 = vpop.f32.mrb[0].mxu0
      %1951 = vdwg.mxu0
      %v1953 = vsel %vm404, %v1854, 0
      %v1956 = vsel %vm852, %v1858, 0
      %1958 = vmatprep.subr.bf16.mxu0 0
      %1959 = vmatpush1.bf16.msra.mxu0 %v1956
      %1960 = vmatprep.subr.bf16.mxu0 0
      %1961 = vmatpush1.bf16.msra.mxu0 0
      %1962 = vmatprep.subr.bf16.mxu0 0
      %1963 = vmatpush1.bf16.msra.mxu0 0
      %1964 = vmatprep.subr.bf16.mxu0 0
      %1965 = vmatpush1.bf16.msra.mxu0 0
      %1966 = vmatprep.subr.bf16.mxu0 0
      %1967 = vmatpush1.bf16.msra.mxu0 0
      %1968 = vmatprep.subr.bf16.mxu0 0
      %1969 = vmatpush1.bf16.msra.mxu0 0
      %1970 = vmatprep.subr.bf16.mxu0 0
      %1971 = vmatpush1.bf16.msra.mxu0 0
      %1972 = vmatprep.subr.bf16.mxu0 0
      %1973 = vmatpush1.bf16.msra.mxu0 0
      %1974 = vmatprep.subr.bf16.mxu0 0
      %1975 = vmatpush1.bf16.msra.mxu0 0
      %1976 = vmatprep.subr.bf16.mxu0 0
      %1977 = vmatpush1.bf16.msra.mxu0 0
      %1978 = vmatprep.subr.bf16.mxu0 0
      %1979 = vmatpush1.bf16.msra.mxu0 0
      %1980 = vmatprep.subr.bf16.mxu0 0
      %1981 = vmatpush1.bf16.msra.mxu0 0
      %1982 = vmatprep.subr.bf16.mxu0 0
      %1983 = vmatpush1.bf16.msra.mxu0 0
      %1984 = vmatprep.subr.bf16.mxu0 0
      %1985 = vmatpush1.bf16.msra.mxu0 0
      %1986 = vmatprep.subr.bf16.mxu0 0
      %1987 = vmatpush1.bf16.msra.mxu0 0
      %1988 = vmatprep.subr.bf16.mxu0 0
      %1989 = vmatpush1.bf16.msra.mxu0 0
      %1990 = vmatprep.mubr.bf16.mxu0 0
      %1991 = vmatmul.mubr.bf16.gmra.mrb[0].mxu0 %v1953
      %v1992 = vpop.f32.mrb[0].mxu0
      %v1993 = vadd.f32 %v1723, %v1992
      %v1994 = vpop.f32.mrb[0].mxu0
      %v1995 = vpop.f32.mrb[0].mxu0
      %v1996 = vpop.f32.mrb[0].mxu0
      %1997 = vdwg.mxu0
      %v1999 = vsel %vm404, %v1855, 0
      %v2002 = vsel %vm852, %v1859, 0
      %2004 = vmatprep.subr.bf16.mxu0 0
      %2005 = vmatpush1.bf16.msra.mxu0 %v2002
      %2006 = vmatprep.subr.bf16.mxu0 0
      %2007 = vmatpush1.bf16.msra.mxu0 0
      %2008 = vmatprep.subr.bf16.mxu0 0
      %2009 = vmatpush1.bf16.msra.mxu0 0
      %2010 = vmatprep.subr.bf16.mxu0 0
      %2011 = vmatpush1.bf16.msra.mxu0 0
      %2012 = vmatprep.subr.bf16.mxu0 0
      %2013 = vmatpush1.bf16.msra.mxu0 0
      %2014 = vmatprep.subr.bf16.mxu0 0
      %2015 = vmatpush1.bf16.msra.mxu0 0
      %2016 = vmatprep.subr.bf16.mxu0 0
      %2017 = vmatpush1.bf16.msra.mxu0 0
      %2018 = vmatprep.subr.bf16.mxu0 0
      %2019 = vmatpush1.bf16.msra.mxu0 0
      %2020 = vmatprep.subr.bf16.mxu0 0
      %2021 = vmatpush1.bf16.msra.mxu0 0
      %2022 = vmatprep.subr.bf16.mxu0 0
      %2023 = vmatpush1.bf16.msra.mxu0 0
      %2024 = vmatprep.subr.bf16.mxu0 0
      %2025 = vmatpush1.bf16.msra.mxu0 0
      %2026 = vmatprep.subr.bf16.mxu0 0
      %2027 = vmatpush1.bf16.msra.mxu0 0
      %2028 = vmatprep.subr.bf16.mxu0 0
      %2029 = vmatpush1.bf16.msra.mxu0 0
      %2030 = vmatprep.subr.bf16.mxu0 0
      %2031 = vmatpush1.bf16.msra.mxu0 0
      %2032 = vmatprep.subr.bf16.mxu0 0
      %2033 = vmatpush1.bf16.msra.mxu0 0
      %2034 = vmatprep.subr.bf16.mxu0 0
      %2035 = vmatpush1.bf16.msra.mxu0 0
      %2036 = vmatprep.mubr.bf16.mxu0 0
      %2037 = vmatmul.mubr.bf16.gmra.mrb[0].mxu0 %v1999
      %v2038 = vpop.f32.mrb[0].mxu0
      %v2039 = vadd.f32 %v1723, %v2038
      %v2040 = vpop.f32.mrb[0].mxu0
      %v2041 = vpop.f32.mrb[0].mxu0
      %v2042 = vpop.f32.mrb[0].mxu0
      %2043 = vdwg.mxu0
      %v2044 = vsel %vm404, %v1901, -inf
      %2045 = vmax.xlane.f32.xlu0 %v2044
      %v2046 = vpop.xlane.xlu0 %2045
      %v2047 = vsel %vm404, %v1947, -inf
      %2048 = vmax.xlane.f32.xlu0 %v2047
      %v2049 = vpop.xlane.xlu0 %2048
      %v2050 = vsel %vm404, %v1993, -inf
      %2051 = vmax.xlane.f32.xlu0 %v2050
      %v2052 = vpop.xlane.xlu0 %2051
      %v2053 = vsel %vm404, %v2039, -inf
      %2054 = vmax.xlane.f32.xlu0 %v2053
      %v2055 = vpop.xlane.xlu0 %2054
      %v2056 = vsub.f32 %v1901, %v2046
      %v2057 = vsub.f32 %v1947, %v2049
      %v2058 = vsub.f32 %v1993, %v2052
      %v2059 = vsub.f32 %v2039, %v2055
      %v2060 = vmul.f32 %v2056, 1.442695
      %v2061 = vpow.pop %v2060
      %v2062 = vmul.f32 %v2057, 1.442695
      %v2063 = vpow.pop %v2062
      %v2064 = vmul.f32 %v2058, 1.442695
      %v2065 = vpow.pop %v2064
      %v2066 = vmul.f32 %v2059, 1.442695
      %v2067 = vpow.pop %v2066
      %v2068 = vsel %vm404, %v2061, 0.0
      %2069 = vadd.xlane.f32.xlu0 %v2068
      %v2070 = vpop.xlane.xlu0 %2069
      %v2071 = vsel %vm404, %v2063, 0.0
      %2072 = vadd.xlane.f32.xlu0 %v2071
      %v2073 = vpop.xlane.xlu0 %2072
      %v2074 = vsel %vm404, %v2065, 0.0
      %2075 = vadd.xlane.f32.xlu0 %v2074
      %v2076 = vpop.xlane.xlu0 %2075
      %v2077 = vsel %vm404, %v2067, 0.0
      %2078 = vadd.xlane.f32.xlu0 %v2077
      %v2079 = vpop.xlane.xlu0 %2078
      %v2080 = vrcp.pop %v2070
      %v2081 = vrcp.pop %v2073
      %v2082 = vrcp.pop %v2076
      %v2083 = vrcp.pop %v2079
      %v2084 = vmul.f32 %v2061, %v2080
      %v2085 = vmul.f32 %v2063, %v2081
      %v2086 = vmul.f32 %v2065, %v2082
      %v2087 = vmul.f32 %v2067, %v2083
      %v2088 = vpack.c.bf16 %v1709, %v1709
      %v2089 = vpack.c.bf16 %v1712, %v1712
      %v2090 = vpack.c.bf16 %v1717, %v1717
      %v2091 = vpack.c.bf16 %v1720, %v1720
      %v2092 = vpack.c.bf16 %v2084, %v2084
      %v2093 = vpack.c.bf16 %v2085, %v2085
      %v2094 = vpack.c.bf16 %v2086, %v2086
      %v2095 = vpack.c.bf16 %v2087, %v2087
      %v2097 = vsel %vm404, %v2088, 0
      %v2100 = vsel %vm404, %v2092, 0
      %2102 = vmatprep.subr.bf16.mxu0 0
      %2103 = vmatpush1.bf16.xpose.msra.mxu0 %v2100
      %2104 = vmatprep.subr.bf16.mxu0 0
      %2105 = vmatpush1.bf16.xpose.msra.mxu0 0
      %2106 = vmatprep.subr.bf16.mxu0 0
      %2107 = vmatpush1.bf16.xpose.msra.mxu0 0
      %2108 = vmatprep.subr.bf16.mxu0 0
      %2109 = vmatpush1.bf16.xpose.msra.mxu0 0
      %2110 = vmatprep.subr.bf16.mxu0 0
      %2111 = vmatpush1.bf16.xpose.msra.mxu0 0
      %2112 = vmatprep.subr.bf16.mxu0 0
      %2113 = vmatpush1.bf16.xpose.msra.mxu0 0
      %2114 = vmatprep.subr.bf16.mxu0 0
      %2115 = vmatpush1.bf16.xpose.msra.mxu0 0
      %2116 = vmatprep.subr.bf16.mxu0 0
      %2117 = vmatpush1.bf16.xpose.msra.mxu0 0
      %2118 = vmatprep.subr.bf16.mxu0 0
      %2119 = vmatpush1.bf16.xpose.msra.mxu0 0
      %2120 = vmatprep.subr.bf16.mxu0 0
      %2121 = vmatpush1.bf16.xpose.msra.mxu0 0
      %2122 = vmatprep.subr.bf16.mxu0 0
      %2123 = vmatpush1.bf16.xpose.msra.mxu0 0
      %2124 = vmatprep.subr.bf16.mxu0 0
      %2125 = vmatpush1.bf16.xpose.msra.mxu0 0
      %2126 = vmatprep.subr.bf16.mxu0 0
      %2127 = vmatpush1.bf16.xpose.msra.mxu0 0
      %2128 = vmatprep.subr.bf16.mxu0 0
      %2129 = vmatpush1.bf16.xpose.msra.mxu0 0
      %2130 = vmatprep.subr.bf16.mxu0 0
      %2131 = vmatpush1.bf16.xpose.msra.mxu0 0
      %2132 = vmatprep.subr.bf16.mxu0 0
      %2133 = vmatpush1.bf16.xpose.msra.mxu0 0
      %2134 = vmatprep.mubr.bf16.mxu0 0
      %2135 = vmatmul.mubr.bf16.gmra.mrb[0].mxu0 %v2097
      %v2136 = vpop.f32.mrb[0].mxu0
      %v2137 = vadd.f32 0.0, %v2136
      %v2138 = vpop.f32.mrb[0].mxu0
      %v2139 = vpop.f32.mrb[0].mxu0
      %v2140 = vpop.f32.mrb[0].mxu0
      %2141 = vdwg.mxu0
      %v2143 = vsel %vm404, %v2089, 0
      %v2146 = vsel %vm404, %v2093, 0
      %2148 = vmatprep.subr.bf16.mxu0 0
      %2149 = vmatpush1.bf16.xpose.msra.mxu0 %v2146
      %2150 = vmatprep.subr.bf16.mxu0 0
      %2151 = vmatpush1.bf16.xpose.msra.mxu0 0
      %2152 = vmatprep.subr.bf16.mxu0 0
      %2153 = vmatpush1.bf16.xpose.msra.mxu0 0
      %2154 = vmatprep.subr.bf16.mxu0 0
      %2155 = vmatpush1.bf16.xpose.msra.mxu0 0
      %2156 = vmatprep.subr.bf16.mxu0 0
      %2157 = vmatpush1.bf16.xpose.msra.mxu0 0
      %2158 = vmatprep.subr.bf16.mxu0 0
      %2159 = vmatpush1.bf16.xpose.msra.mxu0 0
      %2160 = vmatprep.subr.bf16.mxu0 0
      %2161 = vmatpush1.bf16.xpose.msra.mxu0 0
      %2162 = vmatprep.subr.bf16.mxu0 0
      %2163 = vmatpush1.bf16.xpose.msra.mxu0 0
      %2164 = vmatprep.subr.bf16.mxu0 0
      %2165 = vmatpush1.bf16.xpose.msra.mxu0 0
      %2166 = vmatprep.subr.bf16.mxu0 0
      %2167 = vmatpush1.bf16.xpose.msra.mxu0 0
      %2168 = vmatprep.subr.bf16.mxu0 0
      %2169 = vmatpush1.bf16.xpose.msra.mxu0 0
      %2170 = vmatprep.subr.bf16.mxu0 0
      %2171 = vmatpush1.bf16.xpose.msra.mxu0 0
      %2172 = vmatprep.subr.bf16.mxu0 0
      %2173 = vmatpush1.bf16.xpose.msra.mxu0 0
      %2174 = vmatprep.subr.bf16.mxu0 0
      %2175 = vmatpush1.bf16.xpose.msra.mxu0 0
      %2176 = vmatprep.subr.bf16.mxu0 0
      %2177 = vmatpush1.bf16.xpose.msra.mxu0 0
      %2178 = vmatprep.subr.bf16.mxu0 0
      %2179 = vmatpush1.bf16.xpose.msra.mxu0 0
      %2180 = vmatprep.mubr.bf16.mxu0 0
      %2181 = vmatmul.mubr.bf16.gmra.mrb[0].mxu0 %v2143
      %v2182 = vpop.f32.mrb[0].mxu0
      %v2183 = vadd.f32 0.0, %v2182
      %v2184 = vpop.f32.mrb[0].mxu0
      %v2185 = vpop.f32.mrb[0].mxu0
      %v2186 = vpop.f32.mrb[0].mxu0
      %2187 = vdwg.mxu0
      %v2189 = vsel %vm404, %v2090, 0
      %v2192 = vsel %vm404, %v2094, 0
      %2194 = vmatprep.subr.bf16.mxu0 0
      %2195 = vmatpush1.bf16.xpose.msra.mxu0 %v2192
      %2196 = vmatprep.subr.bf16.mxu0 0
      %2197 = vmatpush1.bf16.xpose.msra.mxu0 0
      %2198 = vmatprep.subr.bf16.mxu0 0
      %2199 = vmatpush1.bf16.xpose.msra.mxu0 0
      %2200 = vmatprep.subr.bf16.mxu0 0
      %2201 = vmatpush1.bf16.xpose.msra.mxu0 0
      %2202 = vmatprep.subr.bf16.mxu0 0
      %2203 = vmatpush1.bf16.xpose.msra.mxu0 0
      %2204 = vmatprep.subr.bf16.mxu0 0
      %2205 = vmatpush1.bf16.xpose.msra.mxu0 0
      %2206 = vmatprep.subr.bf16.mxu0 0
      %2207 = vmatpush1.bf16.xpose.msra.mxu0 0
      %2208 = vmatprep.subr.bf16.mxu0 0
      %2209 = vmatpush1.bf16.xpose.msra.mxu0 0
      %2210 = vmatprep.subr.bf16.mxu0 0
      %2211 = vmatpush1.bf16.xpose.msra.mxu0 0
      %2212 = vmatprep.subr.bf16.mxu0 0
      %2213 = vmatpush1.bf16.xpose.msra.mxu0 0
      %2214 = vmatprep.subr.bf16.mxu0 0
      %2215 = vmatpush1.bf16.xpose.msra.mxu0 0
      %2216 = vmatprep.subr.bf16.mxu0 0
      %2217 = vmatpush1.bf16.xpose.msra.mxu0 0
      %2218 = vmatprep.subr.bf16.mxu0 0
      %2219 = vmatpush1.bf16.xpose.msra.mxu0 0
      %2220 = vmatprep.subr.bf16.mxu0 0
      %2221 = vmatpush1.bf16.xpose.msra.mxu0 0
      %2222 = vmatprep.subr.bf16.mxu0 0
      %2223 = vmatpush1.bf16.xpose.msra.mxu0 0
      %2224 = vmatprep.subr.bf16.mxu0 0
      %2225 = vmatpush1.bf16.xpose.msra.mxu0 0
      %2226 = vmatprep.mubr.bf16.mxu0 0
      %2227 = vmatmul.mubr.bf16.gmra.mrb[0].mxu0 %v2189
      %v2228 = vpop.f32.mrb[0].mxu0
      %v2229 = vadd.f32 0.0, %v2228
      %v2230 = vpop.f32.mrb[0].mxu0
      %v2231 = vpop.f32.mrb[0].mxu0
      %v2232 = vpop.f32.mrb[0].mxu0
      %2233 = vdwg.mxu0
      %v2235 = vsel %vm404, %v2091, 0
      %v2238 = vsel %vm404, %v2095, 0
      %2240 = vmatprep.subr.bf16.mxu0 0
      %2241 = vmatpush1.bf16.xpose.msra.mxu0 %v2238
      %2242 = vmatprep.subr.bf16.mxu0 0
      %2243 = vmatpush1.bf16.xpose.msra.mxu0 0
      %2244 = vmatprep.subr.bf16.mxu0 0
      %2245 = vmatpush1.bf16.xpose.msra.mxu0 0
      %2246 = vmatprep.subr.bf16.mxu0 0
      %2247 = vmatpush1.bf16.xpose.msra.mxu0 0
      %2248 = vmatprep.subr.bf16.mxu0 0
      %2249 = vmatpush1.bf16.xpose.msra.mxu0 0
      %2250 = vmatprep.subr.bf16.mxu0 0
      %2251 = vmatpush1.bf16.xpose.msra.mxu0 0
      %2252 = vmatprep.subr.bf16.mxu0 0
      %2253 = vmatpush1.bf16.xpose.msra.mxu0 0
      %2254 = vmatprep.subr.bf16.mxu0 0
      %2255 = vmatpush1.bf16.xpose.msra.mxu0 0
      %2256 = vmatprep.subr.bf16.mxu0 0
      %2257 = vmatpush1.bf16.xpose.msra.mxu0 0
      %2258 = vmatprep.subr.bf16.mxu0 0
      %2259 = vmatpush1.bf16.xpose.msra.mxu0 0
      %2260 = vmatprep.subr.bf16.mxu0 0
      %2261 = vmatpush1.bf16.xpose.msra.mxu0 0
      %2262 = vmatprep.subr.bf16.mxu0 0
      %2263 = vmatpush1.bf16.xpose.msra.mxu0 0
      %2264 = vmatprep.subr.bf16.mxu0 0
      %2265 = vmatpush1.bf16.xpose.msra.mxu0 0
      %2266 = vmatprep.subr.bf16.mxu0 0
      %2267 = vmatpush1.bf16.xpose.msra.mxu0 0
      %2268 = vmatprep.subr.bf16.mxu0 0
      %2269 = vmatpush1.bf16.xpose.msra.mxu0 0
      %2270 = vmatprep.subr.bf16.mxu0 0
      %2271 = vmatpush1.bf16.xpose.msra.mxu0 0
      %2272 = vmatprep.mubr.bf16.mxu0 0
      %2273 = vmatmul.mubr.bf16.gmra.mrb[0].mxu0 %v2235
      %v2274 = vpop.f32.mrb[0].mxu0
      %v2275 = vadd.f32 0.0, %v2274
      %v2276 = vpop.f32.mrb[0].mxu0
      %v2277 = vpop.f32.mrb[0].mxu0
      %v2278 = vpop.f32.mrb[0].mxu0
      %2279 = vdwg.mxu0
      %v2280 = vld [vmem:[%s4 + $0x70] sm:$0xf]
      %v2281 = vld [vmem:[%s4 + $0x74] sm:$0xf]
      %v2282 = vld [vmem:[%s4 + $0x78] sm:$0xf]
      %v2283 = vld [vmem:[%s4 + $0x7c] sm:$0xf]
      %v2284 = vpack.c.bf16 %v2183, %v2137
      %v2285 = vpack.c.bf16 %v2275, %v2229
      %v2290 = vunpack.c.l.b16 %v2280
      %v2291 = vunpack.c.l.b16 %v2281
      %v2292 = vunpack.c.l.b16 %v2282
      %v2293 = vunpack.c.l.b16 %v2283
      %v2294 = vpack.c.b16 %v2291, %v2290
      %v2295 = vpack.c.b16 %v2293, %v2292
      %v2297 = vsel %vm612, %v2294, 0
      %v2300 = vsel %vm612, %v2295, 0
      %2302 = vmatprep.subr.bf16.mxu0 0
      %2303 = vmatpush1.bf16.msra.mxu0 %v2284
      %2304 = vmatprep.subr.bf16.mxu0 0
      %2305 = vmatpush1.bf16.msra.mxu0 %v2285
      %2306 = vmatprep.subr.bf16.mxu0 0
      %2307 = vmatpush1.bf16.msra.mxu0 0
      %2308 = vmatprep.subr.bf16.mxu0 0
      %2309 = vmatpush1.bf16.msra.mxu0 0
      %2310 = vmatprep.subr.bf16.mxu0 0
      %2311 = vmatpush1.bf16.msra.mxu0 0
      %2312 = vmatprep.subr.bf16.mxu0 0
      %2313 = vmatpush1.bf16.msra.mxu0 0
      %2314 = vmatprep.subr.bf16.mxu0 0
      %2315 = vmatpush1.bf16.msra.mxu0 0
      %2316 = vmatprep.subr.bf16.mxu0 0
      %2317 = vmatpush1.bf16.msra.mxu0 0
      %2318 = vmatprep.subr.bf16.mxu0 0
      %2319 = vmatpush1.bf16.msra.mxu0 0
      %2320 = vmatprep.subr.bf16.mxu0 0
      %2321 = vmatpush1.bf16.msra.mxu0 0
      %2322 = vmatprep.subr.bf16.mxu0 0
      %2323 = vmatpush1.bf16.msra.mxu0 0
      %2324 = vmatprep.subr.bf16.mxu0 0
      %2325 = vmatpush1.bf16.msra.mxu0 0
      %2326 = vmatprep.subr.bf16.mxu0 0
      %2327 = vmatpush1.bf16.msra.mxu0 0
      %2328 = vmatprep.subr.bf16.mxu0 0
      %2329 = vmatpush1.bf16.msra.mxu0 0
      %2330 = vmatprep.subr.bf16.mxu0 0
      %2331 = vmatpush1.bf16.msra.mxu0 0
      %2332 = vmatprep.subr.bf16.mxu0 0
      %2333 = vmatpush1.bf16.msra.mxu0 0
      %2334 = vmatprep.mubr.bf16.mxu0 0
      %2335 = vmatmul.mubr.bf16.gmra.mrb[0].mxu0 %v2297
      %v2336 = vpop.f32.mrb[0].mxu0
      %v2337 = vadd.f32 0.0, %v2336
      %v2338 = vpop.f32.mrb[0].mxu0
      %v2339 = vpop.f32.mrb[0].mxu0
      %v2340 = vadd.f32 0.0, %v2339
      %v2341 = vpop.f32.mrb[0].mxu0
      %2342 = vmatprep.mubr.bf16.mxu0 0
      %2343 = vmatmul.mubr.bf16.gmra.mrb[0].mxu0 %v2300
      %v2344 = vpop.f32.mrb[0].mxu0
      %v2345 = vadd.f32 0.0, %v2344
      %v2346 = vpop.f32.mrb[0].mxu0
      %v2347 = vpop.f32.mrb[0].mxu0
      %v2348 = vadd.f32 0.0, %v2347
      %v2349 = vpop.f32.mrb[0].mxu0
      %2350 = vdwg.mxu0
      %v2351 = vadd.f32 %v1369, %v2337
      %v2352 = vadd.f32 %v1370, %v2340
      %v2353 = vadd.f32 %v1371, %v2345
      %v2354 = vadd.f32 %v1372, %v2348
      %v2355 = vld [vmem:[%s6 + $0xe0] sm:$0xff]
      %v2356 = vld [vmem:[%s6 + $0xe8] sm:$0xff]
      %v2357 = vld [vmem:[%s6 + $0xf0] sm:$0xff]
      %v2358 = vld [vmem:[%s6 + $0xf8] sm:$0xff]
      %2360 = vset.pattern.permute.xlu0 0
      %2361 = vperm.xlu0 %2360, %v2355
      %v2362 = vpop.permute.xlu0 %2361
      %2365 = vset.pattern.permute.xlu0 0
      %2366 = vperm.xlu0 %2365, %v2356
      %v2367 = vpop.permute.xlu0 %2366
      %2370 = vset.pattern.permute.xlu0 0
      %2371 = vperm.xlu0 %2370, %v2357
      %v2372 = vpop.permute.xlu0 %2371
      %2375 = vset.pattern.permute.xlu0 0
      %2376 = vperm.xlu0 %2375, %v2358
      %v2377 = vpop.permute.xlu0 %2376
      %v2379 = vadd.f32 %v2351, %v2362
      %v2380 = vadd.f32 %v2352, %v2367
      %v2381 = vadd.f32 %v2353, %v2372
      %v2382 = vadd.f32 %v2354, %v2377
      %s2383 = scalar_lea.vmem %s7, 64
      %v2384 = vld [vmem:[%s2383] sm:$0xff]
      %v2385 = vld [vmem:[%s2383 + $0x8] sm:$0xff]
      %v2386 = vld [vmem:[%s2383 + $0x10] sm:$0xff]
      %v2387 = vld [vmem:[%s2383 + $0x18] sm:$0xff]
      %s2388 = scalar_lea.vmem %s8, 64
      %v2389 = vld [vmem:[%s2388] sm:$0xff]
      %v2390 = vld [vmem:[%s2388 + $0x8] sm:$0xff]
      %v2391 = vld [vmem:[%s2388 + $0x10] sm:$0xff]
      %v2392 = vld [vmem:[%s2388 + $0x18] sm:$0xff]
      %v2393 = vsel %vm404, %v2379, 0.0
      %v2394 = vsel %vm404, %v2380, 0.0
      %v2395 = vadd.f32 %v2393, %v2394
      %v2396 = vsel %vm404, %v2381, 0.0
      %v2397 = vadd.f32 %v2395, %v2396
      %v2398 = vsel %vm404, %v2382, 0.0
      %v2399 = vadd.f32 %v2397, %v2398
      %v2400 = vrot.slane %v2399, 4
      %v2401 = vadd.f32 %v2399, %v2400
      %v2402 = vrot.slane %v2401, 2
      %v2403 = vadd.f32 %v2401, %v2402
      %v2404 = vrot.slane %v2403, 1
      %v2405 = vadd.f32 %v2403, %v2404
      %v2406 = vmul.f32 %v2405, %v418
      %v2407 = vsub.f32 %v2379, %v2406
      %v2408 = vsub.f32 %v2380, %v2406
      %v2409 = vsub.f32 %v2381, %v2406
      %v2410 = vsub.f32 %v2382, %v2406
      %v2411 = vmul.f32 %v2407, %v2407
      %v2412 = vmul.f32 %v2408, %v2408
      %v2413 = vmul.f32 %v2409, %v2409
      %v2414 = vmul.f32 %v2410, %v2410
      %v2415 = vsel %vm404, %v2411, 0.0
      %v2416 = vsel %vm404, %v2412, 0.0
      %v2417 = vadd.f32 %v2415, %v2416
      %v2418 = vsel %vm404, %v2413, 0.0
      %v2419 = vadd.f32 %v2417, %v2418
      %v2420 = vsel %vm404, %v2414, 0.0
      %v2421 = vadd.f32 %v2419, %v2420
      %v2422 = vrot.slane %v2421, 4
      %v2423 = vadd.f32 %v2421, %v2422
      %v2424 = vrot.slane %v2423, 2
      %v2425 = vadd.f32 %v2423, %v2424
      %v2426 = vrot.slane %v2425, 1
      %v2427 = vadd.f32 %v2425, %v2426
      %v2428 = vmul.f32 %v2427, %v418
      %v2429 = vadd.f32 %v2428, 1e-05
      %v2430 = vrsqrt.pop %v2429
      %v2431 = vmul.f32 %v2407, %v2430
      %v2432 = vmul.f32 %v2408, %v2430
      %v2433 = vmul.f32 %v2409, %v2430
      %v2434 = vmul.f32 %v2410, %v2430
      %2436 = vset.pattern.permute.xlu0 0
      %2437 = vperm.xlu0 %2436, %v2384
      %v2438 = vpop.permute.xlu0 %2437
      %2441 = vset.pattern.permute.xlu0 0
      %2442 = vperm.xlu0 %2441, %v2385
      %v2443 = vpop.permute.xlu0 %2442
      %2446 = vset.pattern.permute.xlu0 0
      %2447 = vperm.xlu0 %2446, %v2386
      %v2448 = vpop.permute.xlu0 %2447
      %2451 = vset.pattern.permute.xlu0 0
      %2452 = vperm.xlu0 %2451, %v2387
      %v2453 = vpop.permute.xlu0 %2452
      %v2455 = vmul.f32 %v2431, %v2438
      %v2456 = vmul.f32 %v2432, %v2443
      %v2457 = vmul.f32 %v2433, %v2448
      %v2458 = vmul.f32 %v2434, %v2453
      %2460 = vset.pattern.permute.xlu0 0
      %2461 = vperm.xlu0 %2460, %v2389
      %v2462 = vpop.permute.xlu0 %2461
      %2465 = vset.pattern.permute.xlu0 0
      %2466 = vperm.xlu0 %2465, %v2390
      %v2467 = vpop.permute.xlu0 %2466
      %2470 = vset.pattern.permute.xlu0 0
      %2471 = vperm.xlu0 %2470, %v2391
      %v2472 = vpop.permute.xlu0 %2471
      %2475 = vset.pattern.permute.xlu0 0
      %2476 = vperm.xlu0 %2475, %v2392
      %v2477 = vpop.permute.xlu0 %2476
      %v2479 = vadd.f32 %v2455, %v2462
      %v2480 = vadd.f32 %v2456, %v2467
      %v2481 = vadd.f32 %v2457, %v2472
      %v2482 = vadd.f32 %v2458, %v2477
      %v2483 = vld [vmem:[%s4 + $0x80] sm:$0xf]
      %v2484 = vld [vmem:[%s4 + $0x84] sm:$0xf]
      %v2485 = vld [vmem:[%s4 + $0x88] sm:$0xf]
      %v2486 = vld [vmem:[%s4 + $0x8c] sm:$0xf]
      %v2487 = vld [vmem:[%s4 + $0x90] sm:$0xf]
      %v2488 = vld [vmem:[%s4 + $0x94] sm:$0xf]
      %v2489 = vld [vmem:[%s4 + $0x98] sm:$0xf]
      %v2490 = vld [vmem:[%s4 + $0x9c] sm:$0xf]
      %v2491 = vpack.c.bf16 %v2480, %v2479
      %v2492 = vpack.c.bf16 %v2482, %v2481
      %v2493 = vld [vmem:[%s6 + $0x100] sm:$0xff]
      %v2494 = vld [vmem:[%s6 + $0x108] sm:$0xff]
      %v2495 = vld [vmem:[%s6 + $0x110] sm:$0xff]
      %v2496 = vld [vmem:[%s6 + $0x118] sm:$0xff]
      %v2497 = vld [vmem:[%s6 + $0x120] sm:$0xff]
      %v2498 = vld [vmem:[%s6 + $0x128] sm:$0xff]
      %v2499 = vld [vmem:[%s6 + $0x130] sm:$0xff]
      %v2500 = vld [vmem:[%s6 + $0x138] sm:$0xff]
      %2502 = vset.pattern.permute.xlu0 0
      %2503 = vperm.xlu0 %2502, %v2493
      %v2504 = vpop.permute.xlu0 %2503
      %2507 = vset.pattern.permute.xlu0 0
      %2508 = vperm.xlu0 %2507, %v2494
      %v2509 = vpop.permute.xlu0 %2508
      %2512 = vset.pattern.permute.xlu0 0
      %2513 = vperm.xlu0 %2512, %v2495
      %v2514 = vpop.permute.xlu0 %2513
      %2517 = vset.pattern.permute.xlu0 0
      %2518 = vperm.xlu0 %2517, %v2496
      %v2519 = vpop.permute.xlu0 %2518
      %2522 = vset.pattern.permute.xlu0 0
      %2523 = vperm.xlu0 %2522, %v2497
      %v2524 = vpop.permute.xlu0 %2523
      %2527 = vset.pattern.permute.xlu0 0
      %2528 = vperm.xlu0 %2527, %v2498
      %v2529 = vpop.permute.xlu0 %2528
      %2532 = vset.pattern.permute.xlu0 0
      %2533 = vperm.xlu0 %2532, %v2499
      %v2534 = vpop.permute.xlu0 %2533
      %2537 = vset.pattern.permute.xlu0 0
      %2538 = vperm.xlu0 %2537, %v2500
      %v2539 = vpop.permute.xlu0 %2538
      %v2549 = vunpack.c.l.b16 %v2483
      %v2550 = vunpack.c.l.b16 %v2484
      %v2551 = vunpack.c.l.b16 %v2485
      %v2552 = vunpack.c.l.b16 %v2486
      %v2553 = vunpack.c.l.b16 %v2487
      %v2554 = vunpack.c.l.b16 %v2488
      %v2555 = vunpack.c.l.b16 %v2489
      %v2556 = vunpack.c.l.b16 %v2490
      %v2557 = vpack.c.b16 %v2550, %v2549
      %v2558 = vpack.c.b16 %v2552, %v2551
      %v2559 = vpack.c.b16 %v2554, %v2553
      %v2560 = vpack.c.b16 %v2556, %v2555
      %v2562 = vsel %vm612, %v2557, 0
      %v2565 = vsel %vm612, %v2558, 0
      %v2568 = vsel %vm612, %v2559, 0
      %v2571 = vsel %vm612, %v2560, 0
      %2573 = vmatprep.subr.bf16.mxu0 0
      %2574 = vmatpush1.bf16.msra.mxu0 %v2491
      %2575 = vmatprep.subr.bf16.mxu0 0
      %2576 = vmatpush1.bf16.msra.mxu0 %v2492
      %2577 = vmatprep.subr.bf16.mxu0 0
      %2578 = vmatpush1.bf16.msra.mxu0 0
      %2579 = vmatprep.subr.bf16.mxu0 0
      %2580 = vmatpush1.bf16.msra.mxu0 0
      %2581 = vmatprep.subr.bf16.mxu0 0
      %2582 = vmatpush1.bf16.msra.mxu0 0
      %2583 = vmatprep.subr.bf16.mxu0 0
      %2584 = vmatpush1.bf16.msra.mxu0 0
      %2585 = vmatprep.subr.bf16.mxu0 0
      %2586 = vmatpush1.bf16.msra.mxu0 0
      %2587 = vmatprep.subr.bf16.mxu0 0
      %2588 = vmatpush1.bf16.msra.mxu0 0
      %2589 = vmatprep.subr.bf16.mxu0 0
      %2590 = vmatpush1.bf16.msra.mxu0 0
      %2591 = vmatprep.subr.bf16.mxu0 0
      %2592 = vmatpush1.bf16.msra.mxu0 0
      %2593 = vmatprep.subr.bf16.mxu0 0
      %2594 = vmatpush1.bf16.msra.mxu0 0
      %2595 = vmatprep.subr.bf16.mxu0 0
      %2596 = vmatpush1.bf16.msra.mxu0 0
      %2597 = vmatprep.subr.bf16.mxu0 0
      %2598 = vmatpush1.bf16.msra.mxu0 0
      %2599 = vmatprep.subr.bf16.mxu0 0
      %2600 = vmatpush1.bf16.msra.mxu0 0
      %2601 = vmatprep.subr.bf16.mxu0 0
      %2602 = vmatpush1.bf16.msra.mxu0 0
      %2603 = vmatprep.subr.bf16.mxu0 0
      %2604 = vmatpush1.bf16.msra.mxu0 0
      %2605 = vmatprep.mubr.bf16.mxu0 0
      %2606 = vmatmul.mubr.bf16.gmra.mrb[0].mxu0 %v2562
      %v2607 = vpop.f32.mrb[0].mxu0
      %v2608 = vadd.f32 %v2504, %v2607
      %v2609 = vpop.f32.mrb[0].mxu0
      %v2610 = vpop.f32.mrb[0].mxu0
      %v2611 = vadd.f32 %v2509, %v2610
      %v2612 = vpop.f32.mrb[0].mxu0
      %2613 = vmatprep.mubr.bf16.mxu0 0
      %2614 = vmatmul.mubr.bf16.gmra.mrb[0].mxu0 %v2565
      %v2615 = vpop.f32.mrb[0].mxu0
      %v2616 = vadd.f32 %v2514, %v2615
      %v2617 = vpop.f32.mrb[0].mxu0
      %v2618 = vpop.f32.mrb[0].mxu0
      %v2619 = vadd.f32 %v2519, %v2618
      %v2620 = vpop.f32.mrb[0].mxu0
      %2621 = vmatprep.mubr.bf16.mxu0 0
      %2622 = vmatmul.mubr.bf16.gmra.mrb[0].mxu0 %v2568
      %v2623 = vpop.f32.mrb[0].mxu0
      %v2624 = vadd.f32 %v2524, %v2623
      %v2625 = vpop.f32.mrb[0].mxu0
      %v2626 = vpop.f32.mrb[0].mxu0
      %v2627 = vadd.f32 %v2529, %v2626
      %v2628 = vpop.f32.mrb[0].mxu0
      %2629 = vmatprep.mubr.bf16.mxu0 0
      %2630 = vmatmul.mubr.bf16.gmra.mrb[0].mxu0 %v2571
      %v2631 = vpop.f32.mrb[0].mxu0
      %v2632 = vadd.f32 %v2534, %v2631
      %v2633 = vpop.f32.mrb[0].mxu0
      %v2634 = vpop.f32.mrb[0].mxu0
      %v2635 = vadd.f32 %v2539, %v2634
      %v2636 = vpop.f32.mrb[0].mxu0
      %2637 = vdwg.mxu0
      %v2638 = vmax.f32 %v2608, 0.0
      %v2639 = vmax.f32 %v2611, 0.0
      %v2640 = vmax.f32 %v2616, 0.0
      %v2641 = vmax.f32 %v2619, 0.0
      %v2642 = vmax.f32 %v2624, 0.0
      %v2643 = vmax.f32 %v2627, 0.0
      %v2644 = vmax.f32 %v2632, 0.0
      %v2645 = vmax.f32 %v2635, 0.0
      %v2646 = vld [vmem:[%s5] sm:$0xf]
      %v2647 = vld [vmem:[%s5 + $0x4] sm:$0xf]
      %v2648 = vld [vmem:[%s5 + $0x8] sm:$0xf]
      %v2649 = vld [vmem:[%s5 + $0xc] sm:$0xf]
      %v2650 = vpack.c.bf16 %v2639, %v2638
      %v2651 = vpack.c.bf16 %v2641, %v2640
      %v2652 = vpack.c.bf16 %v2643, %v2642
      %v2653 = vpack.c.bf16 %v2645, %v2644
      %v2658 = vunpack.c.l.b16 %v2646
      %v2659 = vunpack.c.l.b16 %v2647
      %v2660 = vunpack.c.l.b16 %v2648
      %v2661 = vunpack.c.l.b16 %v2649
      %v2662 = vpack.c.b16 %v2659, %v2658
      %v2663 = vpack.c.b16 %v2661, %v2660
      %vm2664 = vcmask 523264
      %v2666 = vsel %vm2664, %v2662, 0
      %v2669 = vsel %vm2664, %v2663, 0
      %2671 = vmatprep.subr.bf16.mxu0 0
      %2672 = vmatpush1.bf16.msra.mxu0 %v2650
      %2673 = vmatprep.subr.bf16.mxu0 0
      %2674 = vmatpush1.bf16.msra.mxu0 %v2651
      %2675 = vmatprep.subr.bf16.mxu0 0
      %2676 = vmatpush1.bf16.msra.mxu0 %v2652
      %2677 = vmatprep.subr.bf16.mxu0 0
      %2678 = vmatpush1.bf16.msra.mxu0 %v2653
      %2679 = vmatprep.subr.bf16.mxu0 0
      %2680 = vmatpush1.bf16.msra.mxu0 0
      %2681 = vmatprep.subr.bf16.mxu0 0
      %2682 = vmatpush1.bf16.msra.mxu0 0
      %2683 = vmatprep.subr.bf16.mxu0 0
      %2684 = vmatpush1.bf16.msra.mxu0 0
      %2685 = vmatprep.subr.bf16.mxu0 0
      %2686 = vmatpush1.bf16.msra.mxu0 0
      %2687 = vmatprep.subr.bf16.mxu0 0
      %2688 = vmatpush1.bf16.msra.mxu0 0
      %2689 = vmatprep.subr.bf16.mxu0 0
      %2690 = vmatpush1.bf16.msra.mxu0 0
      %2691 = vmatprep.subr.bf16.mxu0 0
      %2692 = vmatpush1.bf16.msra.mxu0 0
      %2693 = vmatprep.subr.bf16.mxu0 0
      %2694 = vmatpush1.bf16.msra.mxu0 0
      %2695 = vmatprep.subr.bf16.mxu0 0
      %2696 = vmatpush1.bf16.msra.mxu0 0
      %2697 = vmatprep.subr.bf16.mxu0 0
      %2698 = vmatpush1.bf16.msra.mxu0 0
      %2699 = vmatprep.subr.bf16.mxu0 0
      %2700 = vmatpush1.bf16.msra.mxu0 0
      %2701 = vmatprep.subr.bf16.mxu0 0
      %2702 = vmatpush1.bf16.msra.mxu0 0
      %2703 = vmatprep.mubr.bf16.mxu0 0
      %2704 = vmatmul.mubr.bf16.gmra.mrb[0].mxu0 %v2666
      %v2705 = vpop.f32.mrb[0].mxu0
      %v2706 = vadd.f32 0.0, %v2705
      %v2707 = vpop.f32.mrb[0].mxu0
      %v2708 = vpop.f32.mrb[0].mxu0
      %v2709 = vadd.f32 0.0, %v2708
      %v2710 = vpop.f32.mrb[0].mxu0
      %2711 = vmatprep.mubr.bf16.mxu0 0
      %2712 = vmatmul.mubr.bf16.gmra.mrb[0].mxu0 %v2669
      %v2713 = vpop.f32.mrb[0].mxu0
      %v2714 = vadd.f32 0.0, %v2713
      %v2715 = vpop.f32.mrb[0].mxu0
      %v2716 = vpop.f32.mrb[0].mxu0
      %v2717 = vadd.f32 0.0, %v2716
      %v2718 = vpop.f32.mrb[0].mxu0
      %2719 = vdwg.mxu0
      %v2720 = vadd.f32 %v2379, %v2706
      %v2721 = vadd.f32 %v2380, %v2709
      %v2722 = vadd.f32 %v2381, %v2714
      %v2723 = vadd.f32 %v2382, %v2717
      %v2724 = vld [vmem:[%s6 + $0x140] sm:$0xff]
      %v2725 = vld [vmem:[%s6 + $0x148] sm:$0xff]
      %v2726 = vld [vmem:[%s6 + $0x150] sm:$0xff]
      %v2727 = vld [vmem:[%s6 + $0x158] sm:$0xff]
      %2729 = vset.pattern.permute.xlu0 0
      %2730 = vperm.xlu0 %2729, %v2724
      %v2731 = vpop.permute.xlu0 %2730
      %2734 = vset.pattern.permute.xlu0 0
      %2735 = vperm.xlu0 %2734, %v2725
      %v2736 = vpop.permute.xlu0 %2735
      %2739 = vset.pattern.permute.xlu0 0
      %2740 = vperm.xlu0 %2739, %v2726
      %v2741 = vpop.permute.xlu0 %2740
      %2744 = vset.pattern.permute.xlu0 0
      %2745 = vperm.xlu0 %2744, %v2727
      %v2746 = vpop.permute.xlu0 %2745
      %v2748 = vadd.f32 %v2720, %v2731
      %v2749 = vadd.f32 %v2721, %v2736
      %v2750 = vadd.f32 %v2722, %v2741
      %v2751 = vadd.f32 %v2723, %v2746
      %2752 = vst.msk [vmem:[%s386] sm:$0xff] %vm404, %v2748
      %2753 = vst.msk [vmem:[%s386 + $0x8] sm:$0xff] %vm404, %v2749
      %2754 = vst.msk [vmem:[%s386 + $0x10] sm:$0xff] %vm404, %v2750
      %2755 = vst.msk [vmem:[%s386 + $0x18] sm:$0xff] %vm404, %v2751
      %p2756 = scmp.lt.s32.totalorder %s20, 1
      %s2757 = scalar_select %p2756, %s20, 1
      %s2758 = smul.addr %s2757, 4
      %s2759 = smul.addr %s2758, 8
      %s2760 = scalar_lea.vmem %s9, %s2759
      // Predicated region
      $region57: #{decoder_layer_pallas.1} parent=55 // pred_check
        %p2761 = pneg %p247
      $region58: #{decoder_layer_pallas.1} parent=55 // pred_check_branch
        %2763 = sbr.rel (%p2761) target = $region60
      $region59: #{decoder_layer_pallas.1} parent=55 // pred_region
        _
      $region60: #{decoder_layer_pallas.1} parent=55 // pred_fallthru
        _
    $region56: #{decoder_layer_pallas.1} parent=5 // pred_fallthru
      _
    %p2764 = scmp.le.s32.totalorder 2, %s15
    // Predicated region
    $region61: #{decoder_layer_pallas.1} parent=5 // pred_check
      %p2765 = pneg %p2764
    $region62: #{decoder_layer_pallas.1} parent=5 // pred_check_branch
      %2767 = sbr.rel (%p2765) target = $region64
    $region63: #{decoder_layer_pallas.1} parent=5 // pred_region
      %s2768 = ssub.s32 %s15, 2
      // Predicated region
      $region65: #{decoder_layer_pallas.1} parent=63 // pred_check
        %p2769 = pneg %p253
      $region66: #{decoder_layer_pallas.1} parent=63 // pred_check_branch
        %2771 = sbr.rel (%p2769) target = $region68
      $region67: #{decoder_layer_pallas.1} parent=63 // pred_region
        %p2772 = scmp.lt.s32.totalorder %s21, 1
        %s2773 = scalar_select %p2772, %s21, 1
        %s2774 = smul.addr %s2773, 4
        %s2775 = smul.addr %s2774, 8
        %s2776 = scalar_lea.vmem %s9, %s2775
      $region68: #{decoder_layer_pallas.1} parent=63 // pred_fallthru
        _
    $region64: #{decoder_layer_pallas.1} parent=5 // pred_fallthru
      _
  $region6: #{decoder_layer_pallas.1} parent=0 // loop_footer
    %s19 = sadd.s32 1, %s15
  $region7: #{decoder_layer_pallas.1} parent=0 // loop_footer_branch
    %14 = sbr.rel target = $region3
  $region8: #{decoder_layer_pallas.1} parent=0 // loop_exit
    _

</llo_original>
